<compile_context>
chip_gen: v7x
topology: tpu7x:2x2x1
jax: 0.10.0
libtpu: 0.0.40
codegen_flags: <defaults>
</compile_context>

<pallas_src>
import functools

import jax
import jax.numpy as jnp
from jax.experimental import pallas as pl
from jax.experimental.pallas import tpu as pltpu

# Static architecture constants (NOT part of the jitted params pytree).
STRIDES = (4, 2, 2, 2)          # patch-embed kernel == stride per stage
DIMS = (32, 64, 160, 256)       # encoder stage channels


def _round_up(x, m):
    return ((x + m - 1) // m) * m


def _pick_tile(M, tm_max=512):
    """Row tile: multiple of 16 (bf16 sublane pack), <= tm_max.

    A 2-way split (v7x megacore) is only applied when each half is >= 256
    rows; tiny late-stage tiles stay single-tile so single-TC chips
    (v5e/v6e) don't pay grid-step overhead for nothing.
    """
    Mp = _round_up(M, 16)
    tm = min(tm_max, Mp)
    if Mp <= tm_max and Mp >= 512 and Mp % 32 == 0:
        tm = Mp // 2
    gm = pl.cdiv(Mp, tm)
    return tm, gm, gm * tm


# ----------------------------------------------------------------------------
# Kernel 1: fused encoder stage + decoder contribution.
#   h = relu(x @ We + be)   (patch-embed conv as bf16 MXU matmul, f32 acc)
#   d = h @ Wd              (composed  proj_w_s @ fuse_w_s  decoder weight)
# ----------------------------------------------------------------------------
def _stage_kernel(x_ref, we_ref, be_ref, wd_ref, h_ref, d_ref):
    acc = jnp.dot(x_ref[...], we_ref[...], preferred_element_type=jnp.float32)
    h = jnp.maximum(acc + be_ref[...], 0.0)
    h_bf = h.astype(jnp.bfloat16)
    h_ref[...] = h_bf
    d_ref[...] = jnp.dot(h_bf, wd_ref[...],
                         preferred_element_type=jnp.float32).astype(d_ref.dtype)


def _stage_last_kernel(x_ref, we_ref, be_ref, wd_ref, d_ref):
    # Last encoder stage: its h is never consumed afterwards -> don't emit it.
    acc = jnp.dot(x_ref[...], we_ref[...], preferred_element_type=jnp.float32)
    h = jnp.maximum(acc + be_ref[...], 0.0)
    d_ref[...] = jnp.dot(h.astype(jnp.bfloat16), wd_ref[...],
                         preferred_element_type=jnp.float32).astype(d_ref.dtype)


def stage_call(x, we, be, wd, *, with_h=True, tm_max=512):
    """x:(M,K) bf16, we:(K,Cp) bf16, be:(1,Cp) f32, wd:(Cp,Dp) bf16."""
    M, K = x.shape
    _, Cp = we.shape
    _, Dp = wd.shape
    tm, gm, Mp = _pick_tile(M, tm_max)
    if Mp != M:
        x = jnp.zeros((Mp, K), x.dtype).at[:M].set(x)

    in_specs = [
        pl.BlockSpec((tm, K), lambda i: (i, 0)),
        pl.BlockSpec((K, Cp), lambda i: (0, 0)),      # VMEM-resident weights
        pl.BlockSpec((1, Cp), lambda i: (0, 0)),
        pl.BlockSpec((Cp, Dp), lambda i: (0, 0)),
    ]
    if with_h:
        kern = _stage_kernel
        out_shape = (jax.ShapeDtypeStruct((Mp, Cp), jnp.bfloat16),
                     jax.ShapeDtypeStruct((Mp, Dp), jnp.bfloat16))
        out_specs = (pl.BlockSpec((tm, Cp), lambda i: (i, 0)),
                     pl.BlockSpec((tm, Dp), lambda i: (i, 0)))
    else:
        kern = _stage_last_kernel
        out_shape = jax.ShapeDtypeStruct((Mp, Dp), jnp.bfloat16)
        out_specs = pl.BlockSpec((tm, Dp), lambda i: (i, 0))

    res = pl.pallas_call(
        kern,
        out_shape=out_shape,
        grid_spec=pltpu.PrefetchScalarGridSpec(
            num_scalar_prefetch=0,
            grid=(gm,),
            in_specs=in_specs,
            out_specs=out_specs),
        compiler_params=pltpu.CompilerParams(
            dimension_semantics=("parallel",)),
    )(x, we, be, wd)

    if with_h:
        h, d = res
        if Mp != M:
            h, d = h[:M], d[:M]
        return h, d
    d = res
    return d[:M] if Mp != M else d


# ----------------------------------------------------------------------------
# Kernel 2: decoder finish -- fused (bias + ReLU) of the summed decoder
# contributions, then the classification head matmul, lane-dense, bf16 out.
#   fused  = relu(s + b_fuse)
#   logits = fused @ W_head + b_head
# ----------------------------------------------------------------------------
def _fuse_head_kernel(s_ref, bf_ref, wh_ref, bh_ref, o_ref):
    fused = jnp.maximum(s_ref[...].astype(jnp.float32) + bf_ref[...], 0.0)
    acc = jnp.dot(fused.astype(wh_ref.dtype), wh_ref[...],
                  preferred_element_type=jnp.float32)
    o_ref[...] = (acc + bh_ref[...]).astype(o_ref.dtype)


def fuse_head_call(s, bf, wh, bh, tm_max=512):
    M, Dp = s.shape
    _, Np = wh.shape
    tm, gm, Mp = _pick_tile(M, tm_max)
    if Mp != M:
        s = jnp.zeros((Mp, Dp), s.dtype).at[:M].set(s)
    out = pl.pallas_call(
        _fuse_head_kernel,
        out_shape=jax.ShapeDtypeStruct((Mp, Np), jnp.bfloat16),
        grid_spec=pltpu.PrefetchScalarGridSpec(
            num_scalar_prefetch=0,
            grid=(gm,),
            in_specs=[
                pl.BlockSpec((tm, Dp), lambda i: (i, 0)),
                pl.BlockSpec((1, Dp), lambda i: (0, 0)),
                pl.BlockSpec((Dp, Np), lambda i: (0, 0)),
                pl.BlockSpec((1, Np), lambda i: (0, 0)),
            ],
            out_specs=pl.BlockSpec((tm, Np), lambda i: (i, 0)),
        ),
        compiler_params=pltpu.CompilerParams(
            dimension_semantics=("parallel",)),
    )(s, bf, wh, bh)
    return out[:M] if Mp != M else out


# ----------------------------------------------------------------------------
# Layout glue (no compute): patch extraction, broadcast-based nearest upsample.
# The decoder sum + upsample stays a single XLA elementwise/broadcast fusion
# (bf16), so no f32 stage-1-resolution temporaries are materialized.
# ----------------------------------------------------------------------------
def upsample_nearest(x_nhwc, f):
    # TODO(synk): reference decoder likely uses bilinear interpolation;
    # nearest-neighbor (broadcast+reshape, pure layout) is used here.
    if f == 1:
        return x_nhwc
    B, H, W, C = x_nhwc.shape
    x = jnp.broadcast_to(x_nhwc[:, :, None, :, None, :], (B, H, f, W, f, C))
    return x.reshape(B, H * f, W * f, C)


def extract_patches(x_nhwc, p):
    B, H, W, C = x_nhwc.shape
    Ho, Wo = H // p, W // p
    xr = x_nhwc.reshape(B, Ho, p, Wo, p, C).transpose(0, 1, 3, 2, 4, 5)
    return xr.reshape(B * Ho * Wo, p * p * C), (B, Ho, Wo)


# ----------------------------------------------------------------------------
# Deterministic parameter init: real-shaped weights are generated, then the
# decoder proj/fuse are algebraically composed and everything is padded to
# lane-dense shapes (output channels only -- contraction K stays tight) and
# cast to bf16 ONCE.  The returned pytree contains ONLY arrays (jit-safe).
# ----------------------------------------------------------------------------
def init_params(key, in_ch=3, dim=64, dims=DIMS, num_classes=6):
    strides = STRIDES
    dim_pad = _round_up(dim, 128)
    ncls_pad = _round_up(num_classes, 128)
    keys = iter(jax.random.split(key, 16))

    # "real" weights (as the PyTorch module would hold), fp32
    enc_w, enc_b = [], []
    c_prev = in_ch
    for p, c in zip(strides, dims):
        fan_in = p * p * c_prev
        enc_w.append(jax.random.normal(next(keys), (fan_in, c), jnp.float32)
                     * fan_in ** -0.5)
        enc_b.append(jnp.zeros((c,), jnp.float32))
        c_prev = c
    proj_w = [jax.random.normal(next(keys), (c, dim), jnp.float32) * c ** -0.5
              for c in dims]
    proj_b = [jnp.zeros((dim,), jnp.float32) for _ in dims]
    fuse_w = jax.random.normal(next(keys), (4 * dim, dim), jnp.float32) \
        * (4 * dim) ** -0.5
    fuse_b = jnp.zeros((dim,), jnp.float32)
    head_w = jax.random.normal(next(keys), (dim, num_classes), jnp.float32) \
        * dim ** -0.5
    head_b = jnp.zeros((num_classes,), jnp.float32)

    # pad output channels only (contraction K kept tight) + compose decoder
    stages = []
    c_prev = in_ch
    b_comp = fuse_b
    for s_idx, (p, c) in enumerate(zip(strides, dims)):
        cpad = _round_up(c, 128)
        K = p * p * c_prev                          # tight contraction dim
        we = jnp.zeros((K, cpad), jnp.float32).at[:, :c].set(enc_w[s_idx])
        be = jnp.zeros((1, cpad), jnp.float32).at[0, :c].set(enc_b[s_idx])

        # composed decoder contribution:  W_s = proj_w_s @ fuse_w[s]
        # TODO(synk): exact only if no nonlinearity/norm sits between the
        # per-stage projection and the fusion linear in the real decoder.
        fws = fuse_w[s_idx * dim:(s_idx + 1) * dim, :]
        wcomp = proj_w[s_idx] @ fws
        wd = jnp.zeros((cpad, dim_pad), jnp.float32).at[:c, :dim].set(wcomp)
        b_comp = b_comp + proj_b[s_idx] @ fws

        stages.append((we.astype(jnp.bfloat16), be, wd.astype(jnp.bfloat16)))
        c_prev = c

    fuse_bias = jnp.zeros((1, dim_pad), jnp.float32).at[0, :dim].set(b_comp)
    head_w_p = jnp.zeros((dim_pad, ncls_pad), jnp.float32) \
        .at[:dim, :num_classes].set(head_w).astype(jnp.bfloat16)
    head_b_p = jnp.zeros((1, ncls_pad), jnp.float32) \
        .at[0, :num_classes].set(head_b)

    return {"stages": stages, "fuse_bias": fuse_bias,
            "head_w": head_w_p, "head_b": head_b_p}


# ----------------------------------------------------------------------------
# Forward pass.
# ----------------------------------------------------------------------------
def remotenet_forward(params, x_nchw, num_classes=6):
    # NCHW (PyTorch) -> NHWC, bf16 activations throughout
    h = jnp.transpose(x_nchw, (0, 2, 3, 1)).astype(jnp.bfloat16)

    dec_sum = None
    tgt_h = None
    num_stages = len(params["stages"])
    for idx, (we, be, wd) in enumerate(params["stages"]):
        p = STRIDES[idx]                              # static Python int
        if idx > 0:
            # drop channel padding before patching -> tight contraction K
            h = h[..., :DIMS[idx - 1]]
        patches, (B, Ho, Wo) = extract_patches(h, p)

        if idx < num_stages - 1:
            h_flat, d_flat = stage_call(patches, we, be, wd, with_h=True)
            h = h_flat.reshape(B, Ho, Wo, we.shape[1])   # channel-padded bf16
        else:
            d_flat = stage_call(patches, we, be, wd, with_h=False)

        d = d_flat.reshape(B, Ho, Wo, d_flat.shape[1])   # bf16
        if idx == 0:
            tgt_h = Ho
            dec_sum = d.astype(jnp.float32)
        else:
            dec_sum = dec_sum + upsample_nearest(d, tgt_h // Ho).astype(jnp.float32)

    # single bf16 materialization of the fused decoder sum (XLA fuses the
    # broadcast-upsample + add chain into one pass)
    dec_sum = dec_sum.astype(jnp.bfloat16)
    B, Ho, Wo, Dp = dec_sum.shape

    # fused (bias + ReLU) + head, lane-dense, bf16 out, at stage-1 resolution
    logits_flat = fuse_head_call(dec_sum.reshape(B * Ho * Wo, Dp),
                                 params["fuse_bias"],
                                 params["head_w"], params["head_b"])
    logits = logits_flat[:, :num_classes].reshape(B, Ho, Wo, num_classes)
    logits = upsample_nearest(logits, 4)              # back to input resolution

    # NHWC -> NCHW, f32 output
    return jnp.transpose(logits.astype(jnp.float32), (0, 3, 1, 2))


if __name__ == "__main__":
    key = jax.random.PRNGKey(0)
    pkey, xkey = jax.random.split(key)

    B, C, H, W = 2, 3, 64, 64      # H, W multiple of 32 (total encoder stride)
    NUM_CLASSES = 6
    x = jax.random.normal(xkey, (B, C, H, W), jnp.float32)

    params = init_params(pkey, in_ch=C, dim=64, dims=DIMS,
                         num_classes=NUM_CLASSES)

    fwd = jax.jit(functools.partial(remotenet_forward, num_classes=NUM_CLASSES))
    out = fwd(params, x)
    out = jax.block_until_ready(out)
    assert out.shape == (B, NUM_CLASSES, H, W), out.shape
    print("KERNEL_OK")
</pallas_src>

<mosaic_0001>
module attributes {stable_mosaic.version = 11 : i64} {
  func.func @_stage_kernel(%arg0: i32, %arg1: memref<256x48xbf16, #tpu.memory_space<vmem>>, %arg2: memref<48x128xbf16, #tpu.memory_space<vmem>>, %arg3: memref<1x128xf32, #tpu.memory_space<vmem>>, %arg4: memref<128x128xbf16, #tpu.memory_space<vmem>>, %arg5: memref<256x128xbf16, #tpu.memory_space<vmem>>, %arg6: memref<256x128xbf16, #tpu.memory_space<vmem>>) attributes {dimension_semantics = [#tpu.dimension_semantics<parallel>], iteration_bounds = array<i64: 2>, scalar_prefetch = 0 : i64, scratch_operands = 0 : i64, tpu.core_type = #tpu.core_type<tc>, window_params = [{transform_indices = @transform_0, window_bounds = array<i64: 256, 48>}, {pipeline_mode = #tpu.pipeline_mode<synchronous>, transform_indices = @transform_1, window_bounds = array<i64: 48, 128>}, {pipeline_mode = #tpu.pipeline_mode<synchronous>, transform_indices = @transform_2, window_bounds = array<i64: 1, 128>}, {pipeline_mode = #tpu.pipeline_mode<synchronous>, transform_indices = @transform_3, window_bounds = array<i64: 128, 128>}, {transform_indices = @transform_4, window_bounds = array<i64: 256, 128>}, {transform_indices = @transform_5, window_bounds = array<i64: 256, 128>}]} {
    %c0 = arith.constant 0 : index
    %c0_0 = arith.constant 0 : index
    %0 = vector.load %arg1[%c0, %c0_0] : memref<256x48xbf16, #tpu.memory_space<vmem>>, vector<256x48xbf16>
    %c0_1 = arith.constant 0 : index
    %c0_2 = arith.constant 0 : index
    %1 = vector.load %arg2[%c0_1, %c0_2] : memref<48x128xbf16, #tpu.memory_space<vmem>>, vector<48x128xbf16>
    %cst = arith.constant dense<0.000000e+00> : vector<256x128xf32>
    %2 = tpu.matmul %0, %1, %cst {dimension_numbers = #tpu.dot_dimension_numbers<[1], [0], [0], [1], [0, 0, 1, 1], [], []>} : vector<256x48xbf16>, vector<48x128xbf16>, vector<256x128xf32> -> vector<256x128xf32>
    %c0_3 = arith.constant 0 : index
    %c0_4 = arith.constant 0 : index
    %3 = vector.load %arg3[%c0_3, %c0_4] : memref<1x128xf32, #tpu.memory_space<vmem>>, vector<1x128xf32>
    %4 = vector.broadcast %3 : vector<1x128xf32> to vector<256x128xf32>
    %5 = arith.addf %2, %4 : vector<256x128xf32>
    %cst_5 = arith.constant 0.000000e+00 : f32
    %6 = vector.broadcast %cst_5 : f32 to vector<256x128xf32>
    %7 = arith.maximumf %5, %6 : vector<256x128xf32>
    %8 = arith.truncf %7 : vector<256x128xf32> to vector<256x128xbf16>
    %c0_6 = arith.constant 0 : index
    %c0_7 = arith.constant 0 : index
    %9 = vector.load %arg5[%c0_6, %c0_7] : memref<256x128xbf16, #tpu.memory_space<vmem>>, vector<256x128xbf16>
    tpu.vector_store %arg5[%c0_6, %c0_7], %8 {strides = array<i32>} : memref<256x128xbf16, #tpu.memory_space<vmem>>, vector<256x128xbf16>,
    %c0_8 = arith.constant 0 : index
    %c0_9 = arith.constant 0 : index
    %10 = vector.load %arg4[%c0_8, %c0_9] : memref<128x128xbf16, #tpu.memory_space<vmem>>, vector<128x128xbf16>
    %cst_10 = arith.constant dense<0.000000e+00> : vector<256x128xf32>
    %11 = tpu.matmul %8, %10, %cst_10 {dimension_numbers = #tpu.dot_dimension_numbers<[1], [0], [0], [1], [0, 0, 1, 1], [], []>} : vector<256x128xbf16>, vector<128x128xbf16>, vector<256x128xf32> -> vector<256x128xf32>
    %12 = arith.truncf %11 : vector<256x128xf32> to vector<256x128xbf16>
    %c0_11 = arith.constant 0 : index
    %c0_12 = arith.constant 0 : index
    %13 = vector.load %arg6[%c0_11, %c0_12] : memref<256x128xbf16, #tpu.memory_space<vmem>>, vector<256x128xbf16>
    tpu.vector_store %arg6[%c0_11, %c0_12], %12 {strides = array<i32>} : memref<256x128xbf16, #tpu.memory_space<vmem>>, vector<256x128xbf16>,
    return
  }
  func.func @transform_0(%arg0: i32) -> (i32, i32) {
    %c0_i32 = arith.constant 0 : i32
    %c0_i32_0 = arith.constant 0 : i32
    return %arg0, %c0_i32 : i32, i32
  }
  func.func @transform_1(%arg0: i32) -> (i32, i32) {
    %c0_i32 = arith.constant 0 : i32
    %c0_i32_0 = arith.constant 0 : i32
    %c0_i32_1 = arith.constant 0 : i32
    return %c0_i32, %c0_i32_0 : i32, i32
  }
  func.func @transform_2(%arg0: i32) -> (i32, i32) {
    %c0_i32 = arith.constant 0 : i32
    %c0_i32_0 = arith.constant 0 : i32
    %c0_i32_1 = arith.constant 0 : i32
    return %c0_i32, %c0_i32_0 : i32, i32
  }
  func.func @transform_3(%arg0: i32) -> (i32, i32) {
    %c0_i32 = arith.constant 0 : i32
    %c0_i32_0 = arith.constant 0 : i32
    %c0_i32_1 = arith.constant 0 : i32
    return %c0_i32, %c0_i32_0 : i32, i32
  }
  func.func @transform_4(%arg0: i32) -> (i32, i32) {
    %c0_i32 = arith.constant 0 : i32
    %c0_i32_0 = arith.constant 0 : i32
    return %arg0, %c0_i32 : i32, i32
  }
  func.func @transform_5(%arg0: i32) -> (i32, i32) {
    %c0_i32 = arith.constant 0 : i32
    %c0_i32_0 = arith.constant 0 : i32
    return %arg0, %c0_i32 : i32, i32
  }
}

module attributes {stable_mosaic.version = 11 : i64} {
  func.func @_stage_kernel(%arg0: i32, %arg1: memref<128x128xbf16, #tpu.memory_space<vmem>>, %arg2: memref<128x128xbf16, #tpu.memory_space<vmem>>, %arg3: memref<1x128xf32, #tpu.memory_space<vmem>>, %arg4: memref<128x128xbf16, #tpu.memory_space<vmem>>, %arg5: memref<128x128xbf16, #tpu.memory_space<vmem>>, %arg6: memref<128x128xbf16, #tpu.memory_space<vmem>>) attributes {dimension_semantics = [#tpu.dimension_semantics<parallel>], iteration_bounds = array<i64: 1>, scalar_prefetch = 0 : i64, scratch_operands = 0 : i64, tpu.core_type = #tpu.core_type<tc>, window_params = [{transform_indices = @transform_0, window_bounds = array<i64: 128, 128>}, {pipeline_mode = #tpu.pipeline_mode<synchronous>, transform_indices = @transform_1, window_bounds = array<i64: 128, 128>}, {pipeline_mode = #tpu.pipeline_mode<synchronous>, transform_indices = @transform_2, window_bounds = array<i64: 1, 128>}, {pipeline_mode = #tpu.pipeline_mode<synchronous>, transform_indices = @transform_3, window_bounds = array<i64: 128, 128>}, {transform_indices = @transform_4, window_bounds = array<i64: 128, 128>}, {transform_indices = @transform_5, window_bounds = array<i64: 128, 128>}]} {
    %c0 = arith.constant 0 : index
    %c0_0 = arith.constant 0 : index
    %0 = vector.load %arg1[%c0, %c0_0] : memref<128x128xbf16, #tpu.memory_space<vmem>>, vector<128x128xbf16>
    %c0_1 = arith.constant 0 : index
    %c0_2 = arith.constant 0 : index
    %1 = vector.load %arg2[%c0_1, %c0_2] : memref<128x128xbf16, #tpu.memory_space<vmem>>, vector<128x128xbf16>
    %cst = arith.constant dense<0.000000e+00> : vector<128x128xf32>
    %2 = tpu.matmul %0, %1, %cst {dimension_numbers = #tpu.dot_dimension_numbers<[1], [0], [0], [1], [0, 0, 1, 1], [], []>} : vector<128x128xbf16>, vector<128x128xbf16>, vector<128x128xf32> -> vector<128x128xf32>
    %c0_3 = arith.constant 0 : index
    %c0_4 = arith.constant 0 : index
    %3 = vector.load %arg3[%c0_3, %c0_4] : memref<1x128xf32, #tpu.memory_space<vmem>>, vector<1x128xf32>
    %4 = vector.broadcast %3 : vector<1x128xf32> to vector<128x128xf32>
    %5 = arith.addf %2, %4 : vector<128x128xf32>
    %cst_5 = arith.constant 0.000000e+00 : f32
    %6 = vector.broadcast %cst_5 : f32 to vector<128x128xf32>
    %7 = arith.maximumf %5, %6 : vector<128x128xf32>
    %8 = arith.truncf %7 : vector<128x128xf32> to vector<128x128xbf16>
    %c0_6 = arith.constant 0 : index
    %c0_7 = arith.constant 0 : index
    %9 = vector.load %arg5[%c0_6, %c0_7] : memref<128x128xbf16, #tpu.memory_space<vmem>>, vector<128x128xbf16>
    tpu.vector_store %arg5[%c0_6, %c0_7], %8 {strides = array<i32>} : memref<128x128xbf16, #tpu.memory_space<vmem>>, vector<128x128xbf16>,
    %c0_8 = arith.constant 0 : index
    %c0_9 = arith.constant 0 : index
    %10 = vector.load %arg4[%c0_8, %c0_9] : memref<128x128xbf16, #tpu.memory_space<vmem>>, vector<128x128xbf16>
    %cst_10 = arith.constant dense<0.000000e+00> : vector<128x128xf32>
    %11 = tpu.matmul %8, %10, %cst_10 {dimension_numbers = #tpu.dot_dimension_numbers<[1], [0], [0], [1], [0, 0, 1, 1], [], []>} : vector<128x128xbf16>, vector<128x128xbf16>, vector<128x128xf32> -> vector<128x128xf32>
    %12 = arith.truncf %11 : vector<128x128xf32> to vector<128x128xbf16>
    %c0_11 = arith.constant 0 : index
    %c0_12 = arith.constant 0 : index
    %13 = vector.load %arg6[%c0_11, %c0_12] : memref<128x128xbf16, #tpu.memory_space<vmem>>, vector<128x128xbf16>
    tpu.vector_store %arg6[%c0_11, %c0_12], %12 {strides = array<i32>} : memref<128x128xbf16, #tpu.memory_space<vmem>>, vector<128x128xbf16>,
    return
  }
  func.func @transform_0(%arg0: i32) -> (i32, i32) {
    %c0_i32 = arith.constant 0 : i32
    %c0_i32_0 = arith.constant 0 : i32
    return %arg0, %c0_i32 : i32, i32
  }
  func.func @transform_1(%arg0: i32) -> (i32, i32) {
    %c0_i32 = arith.constant 0 : i32
    %c0_i32_0 = arith.constant 0 : i32
    %c0_i32_1 = arith.constant 0 : i32
    return %c0_i32, %c0_i32_0 : i32, i32
  }
  func.func @transform_2(%arg0: i32) -> (i32, i32) {
    %c0_i32 = arith.constant 0 : i32
    %c0_i32_0 = arith.constant 0 : i32
    %c0_i32_1 = arith.constant 0 : i32
    return %c0_i32, %c0_i32_0 : i32, i32
  }
  func.func @transform_3(%arg0: i32) -> (i32, i32) {
    %c0_i32 = arith.constant 0 : i32
    %c0_i32_0 = arith.constant 0 : i32
    %c0_i32_1 = arith.constant 0 : i32
    return %c0_i32, %c0_i32_0 : i32, i32
  }
  func.func @transform_4(%arg0: i32) -> (i32, i32) {
    %c0_i32 = arith.constant 0 : i32
    %c0_i32_0 = arith.constant 0 : i32
    return %arg0, %c0_i32 : i32, i32
  }
  func.func @transform_5(%arg0: i32) -> (i32, i32) {
    %c0_i32 = arith.constant 0 : i32
    %c0_i32_0 = arith.constant 0 : i32
    return %arg0, %c0_i32 : i32, i32
  }
}

module attributes {stable_mosaic.version = 11 : i64} {
  func.func @_stage_kernel(%arg0: i32, %arg1: memref<32x256xbf16, #tpu.memory_space<vmem>>, %arg2: memref<256x256xbf16, #tpu.memory_space<vmem>>, %arg3: memref<1x256xf32, #tpu.memory_space<vmem>>, %arg4: memref<256x128xbf16, #tpu.memory_space<vmem>>, %arg5: memref<32x256xbf16, #tpu.memory_space<vmem>>, %arg6: memref<32x128xbf16, #tpu.memory_space<vmem>>) attributes {dimension_semantics = [#tpu.dimension_semantics<parallel>], iteration_bounds = array<i64: 1>, scalar_prefetch = 0 : i64, scratch_operands = 0 : i64, tpu.core_type = #tpu.core_type<tc>, window_params = [{transform_indices = @transform_0, window_bounds = array<i64: 32, 256>}, {pipeline_mode = #tpu.pipeline_mode<synchronous>, transform_indices = @transform_1, window_bounds = array<i64: 256, 256>}, {pipeline_mode = #tpu.pipeline_mode<synchronous>, transform_indices = @transform_2, window_bounds = array<i64: 1, 256>}, {pipeline_mode = #tpu.pipeline_mode<synchronous>, transform_indices = @transform_3, window_bounds = array<i64: 256, 128>}, {transform_indices = @transform_4, window_bounds = array<i64: 32, 256>}, {transform_indices = @transform_5, window_bounds = array<i64: 32, 128>}]} {
    %c0 = arith.constant 0 : index
    %c0_0 = arith.constant 0 : index
    %0 = vector.load %arg1[%c0, %c0_0] : memref<32x256xbf16, #tpu.memory_space<vmem>>, vector<32x256xbf16>
    %c0_1 = arith.constant 0 : index
    %c0_2 = arith.constant 0 : index
    %1 = vector.load %arg2[%c0_1, %c0_2] : memref<256x256xbf16, #tpu.memory_space<vmem>>, vector<256x256xbf16>
    %cst = arith.constant dense<0.000000e+00> : vector<32x256xf32>
    %2 = tpu.matmul %0, %1, %cst {dimension_numbers = #tpu.dot_dimension_numbers<[1], [0], [0], [1], [0, 0, 1, 1], [], []>} : vector<32x256xbf16>, vector<256x256xbf16>, vector<32x256xf32> -> vector<32x256xf32>
    %c0_3 = arith.constant 0 : index
    %c0_4 = arith.constant 0 : index
    %3 = vector.load %arg3[%c0_3, %c0_4] : memref<1x256xf32, #tpu.memory_space<vmem>>, vector<1x256xf32>
    %4 = vector.broadcast %3 : vector<1x256xf32> to vector<32x256xf32>
    %5 = arith.addf %2, %4 : vector<32x256xf32>
    %cst_5 = arith.constant 0.000000e+00 : f32
    %6 = vector.broadcast %cst_5 : f32 to vector<32x256xf32>
    %7 = arith.maximumf %5, %6 : vector<32x256xf32>
    %8 = arith.truncf %7 : vector<32x256xf32> to vector<32x256xbf16>
    %c0_6 = arith.constant 0 : index
    %c0_7 = arith.constant 0 : index
    %9 = vector.load %arg5[%c0_6, %c0_7] : memref<32x256xbf16, #tpu.memory_space<vmem>>, vector<32x256xbf16>
    tpu.vector_store %arg5[%c0_6, %c0_7], %8 {strides = array<i32>} : memref<32x256xbf16, #tpu.memory_space<vmem>>, vector<32x256xbf16>,
    %c0_8 = arith.constant 0 : index
    %c0_9 = arith.constant 0 : index
    %10 = vector.load %arg4[%c0_8, %c0_9] : memref<256x128xbf16, #tpu.memory_space<vmem>>, vector<256x128xbf16>
    %cst_10 = arith.constant dense<0.000000e+00> : vector<32x128xf32>
    %11 = tpu.matmul %8, %10, %cst_10 {dimension_numbers = #tpu.dot_dimension_numbers<[1], [0], [0], [1], [0, 0, 1, 1], [], []>} : vector<32x256xbf16>, vector<256x128xbf16>, vector<32x128xf32> -> vector<32x128xf32>
    %12 = arith.truncf %11 : vector<32x128xf32> to vector<32x128xbf16>
    %c0_11 = arith.constant 0 : index
    %c0_12 = arith.constant 0 : index
    %13 = vector.load %arg6[%c0_11, %c0_12] : memref<32x128xbf16, #tpu.memory_space<vmem>>, vector<32x128xbf16>
    tpu.vector_store %arg6[%c0_11, %c0_12], %12 {strides = array<i32>} : memref<32x128xbf16, #tpu.memory_space<vmem>>, vector<32x128xbf16>,
    return
  }
  func.func @transform_0(%arg0: i32) -> (i32, i32) {
    %c0_i32 = arith.constant 0 : i32
    %c0_i32_0 = arith.constant 0 : i32
    return %arg0, %c0_i32 : i32, i32
  }
  func.func @transform_1(%arg0: i32) -> (i32, i32) {
    %c0_i32 = arith.constant 0 : i32
    %c0_i32_0 = arith.constant 0 : i32
    %c0_i32_1 = arith.constant 0 : i32
    return %c0_i32, %c0_i32_0 : i32, i32
  }
  func.func @transform_2(%arg0: i32) -> (i32, i32) {
    %c0_i32 = arith.constant 0 : i32
    %c0_i32_0 = arith.constant 0 : i32
    %c0_i32_1 = arith.constant 0 : i32
    return %c0_i32, %c0_i32_0 : i32, i32
  }
  func.func @transform_3(%arg0: i32) -> (i32, i32) {
    %c0_i32 = arith.constant 0 : i32
    %c0_i32_0 = arith.constant 0 : i32
    %c0_i32_1 = arith.constant 0 : i32
    return %c0_i32, %c0_i32_0 : i32, i32
  }
  func.func @transform_4(%arg0: i32) -> (i32, i32) {
    %c0_i32 = arith.constant 0 : i32
    %c0_i32_0 = arith.constant 0 : i32
    return %arg0, %c0_i32 : i32, i32
  }
  func.func @transform_5(%arg0: i32) -> (i32, i32) {
    %c0_i32 = arith.constant 0 : i32
    %c0_i32_0 = arith.constant 0 : i32
    return %arg0, %c0_i32 : i32, i32
  }
}

module attributes {stable_mosaic.version = 11 : i64} {
  func.func @_stage_last_kernel(%arg0: i32, %arg1: memref<16x640xbf16, #tpu.memory_space<vmem>>, %arg2: memref<640x256xbf16, #tpu.memory_space<vmem>>, %arg3: memref<1x256xf32, #tpu.memory_space<vmem>>, %arg4: memref<256x128xbf16, #tpu.memory_space<vmem>>, %arg5: memref<16x128xbf16, #tpu.memory_space<vmem>>) attributes {dimension_semantics = [#tpu.dimension_semantics<parallel>], iteration_bounds = array<i64: 1>, scalar_prefetch = 0 : i64, scratch_operands = 0 : i64, tpu.core_type = #tpu.core_type<tc>, window_params = [{transform_indices = @transform_0, window_bounds = array<i64: 16, 640>}, {pipeline_mode = #tpu.pipeline_mode<synchronous>, transform_indices = @transform_1, window_bounds = array<i64: 640, 256>}, {pipeline_mode = #tpu.pipeline_mode<synchronous>, transform_indices = @transform_2, window_bounds = array<i64: 1, 256>}, {pipeline_mode = #tpu.pipeline_mode<synchronous>, transform_indices = @transform_3, window_bounds = array<i64: 256, 128>}, {transform_indices = @transform_4, window_bounds = array<i64: 16, 128>}]} {
    %c0 = arith.constant 0 : index
    %c0_0 = arith.constant 0 : index
    %0 = vector.load %arg1[%c0, %c0_0] : memref<16x640xbf16, #tpu.memory_space<vmem>>, vector<16x640xbf16>
    %c0_1 = arith.constant 0 : index
    %c0_2 = arith.constant 0 : index
    %1 = vector.load %arg2[%c0_1, %c0_2] : memref<640x256xbf16, #tpu.memory_space<vmem>>, vector<640x256xbf16>
    %cst = arith.constant dense<0.000000e+00> : vector<16x256xf32>
    %2 = tpu.matmul %0, %1, %cst {dimension_numbers = #tpu.dot_dimension_numbers<[1], [0], [0], [1], [0, 0, 1, 1], [], []>} : vector<16x640xbf16>, vector<640x256xbf16>, vector<16x256xf32> -> vector<16x256xf32>
    %c0_3 = arith.constant 0 : index
    %c0_4 = arith.constant 0 : index
    %3 = vector.load %arg3[%c0_3, %c0_4] : memref<1x256xf32, #tpu.memory_space<vmem>>, vector<1x256xf32>
    %4 = vector.broadcast %3 : vector<1x256xf32> to vector<16x256xf32>
    %5 = arith.addf %2, %4 : vector<16x256xf32>
    %cst_5 = arith.constant 0.000000e+00 : f32
    %6 = vector.broadcast %cst_5 : f32 to vector<16x256xf32>
    %7 = arith.maximumf %5, %6 : vector<16x256xf32>
    %8 = arith.truncf %7 : vector<16x256xf32> to vector<16x256xbf16>
    %c0_6 = arith.constant 0 : index
    %c0_7 = arith.constant 0 : index
    %9 = vector.load %arg4[%c0_6, %c0_7] : memref<256x128xbf16, #tpu.memory_space<vmem>>, vector<256x128xbf16>
    %cst_8 = arith.constant dense<0.000000e+00> : vector<16x128xf32>
    %10 = tpu.matmul %8, %9, %cst_8 {dimension_numbers = #tpu.dot_dimension_numbers<[1], [0], [0], [1], [0, 0, 1, 1], [], []>} : vector<16x256xbf16>, vector<256x128xbf16>, vector<16x128xf32> -> vector<16x128xf32>
    %11 = arith.truncf %10 : vector<16x128xf32> to vector<16x128xbf16>
    %c0_9 = arith.constant 0 : index
    %c0_10 = arith.constant 0 : index
    %12 = vector.load %arg5[%c0_9, %c0_10] : memref<16x128xbf16, #tpu.memory_space<vmem>>, vector<16x128xbf16>
    tpu.vector_store %arg5[%c0_9, %c0_10], %11 {strides = array<i32>} : memref<16x128xbf16, #tpu.memory_space<vmem>>, vector<16x128xbf16>,
    return
  }
  func.func @transform_0(%arg0: i32) -> (i32, i32) {
    %c0_i32 = arith.constant 0 : i32
    %c0_i32_0 = arith.constant 0 : i32
    return %arg0, %c0_i32 : i32, i32
  }
  func.func @transform_1(%arg0: i32) -> (i32, i32) {
    %c0_i32 = arith.constant 0 : i32
    %c0_i32_0 = arith.constant 0 : i32
    %c0_i32_1 = arith.constant 0 : i32
    return %c0_i32, %c0_i32_0 : i32, i32
  }
  func.func @transform_2(%arg0: i32) -> (i32, i32) {
    %c0_i32 = arith.constant 0 : i32
    %c0_i32_0 = arith.constant 0 : i32
    %c0_i32_1 = arith.constant 0 : i32
    return %c0_i32, %c0_i32_0 : i32, i32
  }
  func.func @transform_3(%arg0: i32) -> (i32, i32) {
    %c0_i32 = arith.constant 0 : i32
    %c0_i32_0 = arith.constant 0 : i32
    %c0_i32_1 = arith.constant 0 : i32
    return %c0_i32, %c0_i32_0 : i32, i32
  }
  func.func @transform_4(%arg0: i32) -> (i32, i32) {
    %c0_i32 = arith.constant 0 : i32
    %c0_i32_0 = arith.constant 0 : i32
    return %arg0, %c0_i32 : i32, i32
  }
}

module attributes {stable_mosaic.version = 11 : i64} {
  func.func @_fuse_head_kernel(%arg0: i32, %arg1: memref<256x128xbf16, #tpu.memory_space<vmem>>, %arg2: memref<1x128xf32, #tpu.memory_space<vmem>>, %arg3: memref<128x128xbf16, #tpu.memory_space<vmem>>, %arg4: memref<1x128xf32, #tpu.memory_space<vmem>>, %arg5: memref<256x128xbf16, #tpu.memory_space<vmem>>) attributes {dimension_semantics = [#tpu.dimension_semantics<parallel>], iteration_bounds = array<i64: 2>, scalar_prefetch = 0 : i64, scratch_operands = 0 : i64, tpu.core_type = #tpu.core_type<tc>, window_params = [{transform_indices = @transform_0, window_bounds = array<i64: 256, 128>}, {pipeline_mode = #tpu.pipeline_mode<synchronous>, transform_indices = @transform_1, window_bounds = array<i64: 1, 128>}, {pipeline_mode = #tpu.pipeline_mode<synchronous>, transform_indices = @transform_2, window_bounds = array<i64: 128, 128>}, {pipeline_mode = #tpu.pipeline_mode<synchronous>, transform_indices = @transform_3, window_bounds = array<i64: 1, 128>}, {transform_indices = @transform_4, window_bounds = array<i64: 256, 128>}]} {
    %c0 = arith.constant 0 : index
    %c0_0 = arith.constant 0 : index
    %0 = vector.load %arg1[%c0, %c0_0] : memref<256x128xbf16, #tpu.memory_space<vmem>>, vector<256x128xbf16>
    %1 = arith.extf %0 : vector<256x128xbf16> to vector<256x128xf32>
    %c0_1 = arith.constant 0 : index
    %c0_2 = arith.constant 0 : index
    %2 = vector.load %arg2[%c0_1, %c0_2] : memref<1x128xf32, #tpu.memory_space<vmem>>, vector<1x128xf32>
    %3 = vector.broadcast %2 : vector<1x128xf32> to vector<256x128xf32>
    %4 = arith.addf %1, %3 : vector<256x128xf32>
    %cst = arith.constant 0.000000e+00 : f32
    %5 = vector.broadcast %cst : f32 to vector<256x128xf32>
    %6 = arith.maximumf %4, %5 : vector<256x128xf32>
    %7 = arith.truncf %6 : vector<256x128xf32> to vector<256x128xbf16>
    %c0_3 = arith.constant 0 : index
    %c0_4 = arith.constant 0 : index
    %8 = vector.load %arg3[%c0_3, %c0_4] : memref<128x128xbf16, #tpu.memory_space<vmem>>, vector<128x128xbf16>
    %cst_5 = arith.constant dense<0.000000e+00> : vector<256x128xf32>
    %9 = tpu.matmul %7, %8, %cst_5 {dimension_numbers = #tpu.dot_dimension_numbers<[1], [0], [0], [1], [0, 0, 1, 1], [], []>} : vector<256x128xbf16>, vector<128x128xbf16>, vector<256x128xf32> -> vector<256x128xf32>
    %c0_6 = arith.constant 0 : index
    %c0_7 = arith.constant 0 : index
    %10 = vector.load %arg4[%c0_6, %c0_7] : memref<1x128xf32, #tpu.memory_space<vmem>>, vector<1x128xf32>
    %11 = vector.broadcast %10 : vector<1x128xf32> to vector<256x128xf32>
    %12 = arith.addf %9, %11 : vector<256x128xf32>
    %13 = arith.truncf %12 : vector<256x128xf32> to vector<256x128xbf16>
    %c0_8 = arith.constant 0 : index
    %c0_9 = arith.constant 0 : index
    %14 = vector.load %arg5[%c0_8, %c0_9] : memref<256x128xbf16, #tpu.memory_space<vmem>>, vector<256x128xbf16>
    tpu.vector_store %arg5[%c0_8, %c0_9], %13 {strides = array<i32>} : memref<256x128xbf16, #tpu.memory_space<vmem>>, vector<256x128xbf16>,
    return
  }
  func.func @transform_0(%arg0: i32) -> (i32, i32) {
    %c0_i32 = arith.constant 0 : i32
    %c0_i32_0 = arith.constant 0 : i32
    return %arg0, %c0_i32 : i32, i32
  }
  func.func @transform_1(%arg0: i32) -> (i32, i32) {
    %c0_i32 = arith.constant 0 : i32
    %c0_i32_0 = arith.constant 0 : i32
    %c0_i32_1 = arith.constant 0 : i32
    return %c0_i32, %c0_i32_0 : i32, i32
  }
  func.func @transform_2(%arg0: i32) -> (i32, i32) {
    %c0_i32 = arith.constant 0 : i32
    %c0_i32_0 = arith.constant 0 : i32
    %c0_i32_1 = arith.constant 0 : i32
    return %c0_i32, %c0_i32_0 : i32, i32
  }
  func.func @transform_3(%arg0: i32) -> (i32, i32) {
    %c0_i32 = arith.constant 0 : i32
    %c0_i32_0 = arith.constant 0 : i32
    %c0_i32_1 = arith.constant 0 : i32
    return %c0_i32, %c0_i32_0 : i32, i32
  }
  func.func @transform_4(%arg0: i32) -> (i32, i32) {
    %c0_i32 = arith.constant 0 : i32
    %c0_i32_0 = arith.constant 0 : i32
    return %arg0, %c0_i32 : i32, i32
  }
}

</mosaic_0001>

<llo_original>
// kernel: remotenet_forward.5
$region0: #{remotenet_forward.5}
  #allocation0 [shape = 'u32[]', space=smem, size = 0x4, offset = 0x4, fixed_abs, tag = 'smem constant byte address 0x4 - core index']
  #allocation1 [shape = 'u32[144,128]{1,0:T(1,128)}', space=vmem, size = 0x12000, scoped, tag = 'internal scratch']
  %s0 = inlined_call_operand.vmem [shape: bf16[512,48], index: 0, kind: input, shape index: {}]
  %s1 = inlined_call_operand.hbm [shape: bf16[48,128], index: 1, kind: input, shape index: {}]
  %s2 = inlined_call_operand.hbm [shape: f32[1,128], index: 2, kind: input, shape index: {}]
  %s3 = inlined_call_operand.hbm [shape: bf16[128,128], index: 3, kind: input, shape index: {}]
  %s4 = inlined_call_operand.vmem [shape: bf16[512,128], index: 4, kind: output, shape index: {0}]
  %s5 = inlined_call_operand.vmem [shape: bf16[512,128], index: 5, kind: output, shape index: {1}]
  %6 = xla_tuple %s4, %s5
  %s7 = sld [smem:[#allocation0]]
  $region69: #{remotenet_forward.5} parent=0
    _
  %s9 = ssub.s32 1, %s7
  %s10 = scalar_select 0, %s9, %s7
  $region1: #{remotenet_forward.5} parent=0
    #allocation2 [shape = 'u8[12288]{0}', space=vmem, size = 0x3000, scoped, tag = 'input window, operand 1, single buffered']
    #allocation3 [shape = 's32[2]{0}', space=sflag, size = 0x8, scoped, tag = 'scoped memory for remotenet_forward.5']
    #allocation4 [shape = 'u8[512]{0}', space=vmem, size = 0x400, scoped, tag = 'input window, operand 2, single buffered']
    #allocation5 [shape = 's32[1]{0}', space=sflag, size = 0x4, scoped, tag = 'scoped memory for remotenet_forward.5']
    #allocation6 [shape = 'u8[32768]{0}', space=vmem, size = 0x8000, scoped, tag = 'input window, operand 3, single buffered']
    %11 = vsyncpa [#allocation3], 0
    %12 = vsyncpa [#allocation5], 0
    loop: start=0, step=1, limit=4
    $region2: #{remotenet_forward.5} parent=1 // loop_pre_header
      _
    $region3: #{remotenet_forward.5} parent=1 // loop_header
      %s14 = sphi 0, %s18
      %p15 = scmp.ge.s32.totalorder %s14, 4
      %s24 = sphi 0, %s26
      %s27 = sphi 0, %s24
      %s28 = sphi 0, %s27
      %s44 = sphi 0, %s28
      %s48 = sphi 0, %s48
      %s50 = sphi 0, %s48
      %s51 = sphi 0, %s50
      %s65 = sphi 0, %s51
      %s69 = sphi 0, %s69
      %s71 = sphi 0, %s69
      %s72 = sphi 0, %s71
      %s86 = sphi 0, %s72
      %s90 = sphi 0, %s90
      %s92 = sphi 0, %s90
      %s93 = sphi 0, %s92
      %s107 = sphi 0, %s93
      %s113 = sphi 0, %s115
      %s116 = sphi 0, %s113
      %s117 = sphi 0, %s116
      %s133 = sphi 0, %s117
      %s139 = sphi 0, %s141
      %s142 = sphi 0, %s139
      %s143 = sphi 0, %s142
      %s159 = sphi 0, %s143
    $region4: #{remotenet_forward.5} parent=1 // loop_header_branch
      %17 = sbr.rel (%p15) target = $region8
    $region5: #{remotenet_forward.5} parent=1 // loop_body
      %s19 = ssub.s32 %s14, 1
      %s20 = ssub.s32 %s14, 2
      %s21 = sadd.s32 %s14, 1
      %s22 = ssub.s32 %s14, %s21
      %p23 = scmp.eq.s32.totalorder %s22, 0
      %s25 = sadd.s32 %s24, 1
      %s26 = scalar_select %p23, %s24, %s25
      %p29 = pneg %p23
      %p30 = scmp.eq.s32.totalorder %s14, 1
      %p31 = por %p29, %p30
      %p32 = scmp.ne.s32.totalorder %s24, %s27
      %p33 = scmp.eq.s32.totalorder %s14, 0
      %p34 = por %p32, %p33
      %p35 = scmp.ne.s32.totalorder %s24, %s27
      %p36 = scmp.eq.s32.totalorder %s19, 1
      %p37 = por %p35, %p36
      %p38 = scmp.ne.s32.totalorder %s27, %s28
      %p39 = scmp.eq.s32.totalorder %s19, 0
      %p40 = por %p38, %p39
      %p41 = scmp.ne.s32.totalorder %s27, %s28
      %p42 = scmp.eq.s32.totalorder %s20, 1
      %p43 = por %p41, %p42
      %p45 = scmp.ne.s32.totalorder %s28, %s44
      %p46 = scmp.eq.s32.totalorder %s20, 0
      %p47 = por %p45, %p46
      %s49 = sadd.s32 %s48, 1
      %p52 = scmp.eq.s32.totalorder %s14, 1
      %p53 = scmp.ne.s32.totalorder %s48, %s50
      %p54 = scmp.eq.s32.totalorder %s14, 0
      %p55 = por %p53, %p54
      %p56 = scmp.ne.s32.totalorder %s48, %s50
      %p57 = scmp.eq.s32.totalorder %s19, 1
      %p58 = por %p56, %p57
      %p59 = scmp.ne.s32.totalorder %s50, %s51
      %p60 = scmp.eq.s32.totalorder %s19, 0
      %p61 = por %p59, %p60
      %p62 = scmp.ne.s32.totalorder %s50, %s51
      %p63 = scmp.eq.s32.totalorder %s20, 1
      %p64 = por %p62, %p63
      %p66 = scmp.ne.s32.totalorder %s51, %s65
      %p67 = scmp.eq.s32.totalorder %s20, 0
      %p68 = por %p66, %p67
      %s70 = sadd.s32 %s69, 1
      %p73 = scmp.eq.s32.totalorder %s14, 1
      %p74 = scmp.ne.s32.totalorder %s69, %s71
      %p75 = scmp.eq.s32.totalorder %s14, 0
      %p76 = por %p74, %p75
      %p77 = scmp.ne.s32.totalorder %s69, %s71
      %p78 = scmp.eq.s32.totalorder %s19, 1
      %p79 = por %p77, %p78
      %p80 = scmp.ne.s32.totalorder %s71, %s72
      %p81 = scmp.eq.s32.totalorder %s19, 0
      %p82 = por %p80, %p81
      %p83 = scmp.ne.s32.totalorder %s71, %s72
      %p84 = scmp.eq.s32.totalorder %s20, 1
      %p85 = por %p83, %p84
      %p87 = scmp.ne.s32.totalorder %s72, %s86
      %p88 = scmp.eq.s32.totalorder %s20, 0
      %p89 = por %p87, %p88
      %s91 = sadd.s32 %s90, 1
      %p94 = scmp.eq.s32.totalorder %s14, 1
      %p95 = scmp.ne.s32.totalorder %s90, %s92
      %p96 = scmp.eq.s32.totalorder %s14, 0
      %p97 = por %p95, %p96
      %p98 = scmp.ne.s32.totalorder %s90, %s92
      %p99 = scmp.eq.s32.totalorder %s19, 1
      %p100 = por %p98, %p99
      %p101 = scmp.ne.s32.totalorder %s92, %s93
      %p102 = scmp.eq.s32.totalorder %s19, 0
      %p103 = por %p101, %p102
      %p104 = scmp.ne.s32.totalorder %s92, %s93
      %p105 = scmp.eq.s32.totalorder %s20, 1
      %p106 = por %p104, %p105
      %p108 = scmp.ne.s32.totalorder %s93, %s107
      %p109 = scmp.eq.s32.totalorder %s20, 0
      %p110 = por %p108, %p109
      %s111 = ssub.s32 %s14, %s21
      %p112 = scmp.eq.s32.totalorder %s111, 0
      %s114 = sadd.s32 %s113, 1
      %s115 = scalar_select %p112, %s113, %s114
      %p118 = pneg %p112
      %p119 = scmp.eq.s32.totalorder %s14, 1
      %p120 = por %p118, %p119
      %p121 = scmp.ne.s32.totalorder %s113, %s116
      %p122 = scmp.eq.s32.totalorder %s14, 0
      %p123 = por %p121, %p122
      %p124 = scmp.ne.s32.totalorder %s113, %s116
      %p125 = scmp.eq.s32.totalorder %s19, 1
      %p126 = por %p124, %p125
      %p127 = scmp.ne.s32.totalorder %s116, %s117
      %p128 = scmp.eq.s32.totalorder %s19, 0
      %p129 = por %p127, %p128
      %p130 = scmp.ne.s32.totalorder %s116, %s117
      %p131 = scmp.eq.s32.totalorder %s20, 1
      %p132 = por %p130, %p131
      %p134 = scmp.ne.s32.totalorder %s117, %s133
      %p135 = scmp.eq.s32.totalorder %s20, 0
      %p136 = por %p134, %p135
      %s137 = ssub.s32 %s14, %s21
      %p138 = scmp.eq.s32.totalorder %s137, 0
      %s140 = sadd.s32 %s139, 1
      %s141 = scalar_select %p138, %s139, %s140
      %p144 = pneg %p138
      %p145 = scmp.eq.s32.totalorder %s14, 1
      %p146 = por %p144, %p145
      %p147 = scmp.ne.s32.totalorder %s139, %s142
      %p148 = scmp.eq.s32.totalorder %s14, 0
      %p149 = por %p147, %p148
      %p150 = scmp.ne.s32.totalorder %s139, %s142
      %p151 = scmp.eq.s32.totalorder %s19, 1
      %p152 = por %p150, %p151
      %p153 = scmp.ne.s32.totalorder %s142, %s143
      %p154 = scmp.eq.s32.totalorder %s19, 0
      %p155 = por %p153, %p154
      %p156 = scmp.ne.s32.totalorder %s142, %s143
      %p157 = scmp.eq.s32.totalorder %s20, 1
      %p158 = por %p156, %p157
      %p160 = scmp.ne.s32.totalorder %s143, %s159
      %p161 = scmp.eq.s32.totalorder %s20, 0
      %p162 = por %p160, %p161
      %p163 = scmp.le.s32.totalorder 1, %s14
      %p164 = scmp.lt.s32.totalorder %s14, 3
      %p165 = pnand %p163, %p164
      %p166 = pneg %p165
      // Predicated region
      $region9: #{remotenet_forward.5} parent=5 // pred_check
        _
      $region10: #{remotenet_forward.5} parent=5 // pred_check_branch
        %168 = sbr.rel (%p165) target = $region12
      $region11: #{remotenet_forward.5} parent=5 // pred_region
        %s169 = ssub.s32 %s14, 1
        // Predicated region
        $region13: #{remotenet_forward.5} parent=11 // pred_check
          %p170 = pneg %p61
        $region14: #{remotenet_forward.5} parent=11 // pred_check_branch
          %172 = sbr.rel (%p170) target = $region16
        $region15: #{remotenet_forward.5} parent=11 // pred_region
          %s174 = ssub.s32 384, 384
          %175 = vsyncadd [#allocation3], %s174
          %s176 = sshll.u32 [#allocation2], 4
          %s177 = int_to_ptr.vmem [resolvable:$true] %s176
          %182 = dma.hbm_to_vmem [thread:$0]  %s1, 384, %s177, [#allocation3], 64, 64, 4
        $region16: #{remotenet_forward.5} parent=11 // pred_fallthru
          _
        // Predicated region
        $region17: #{remotenet_forward.5} parent=11 // pred_check
          %p183 = pneg %p82
        $region18: #{remotenet_forward.5} parent=11 // pred_check_branch
          %185 = sbr.rel (%p183) target = $region20
        $region19: #{remotenet_forward.5} parent=11 // pred_region
          %s187 = ssub.s32 16, 16
          %188 = vsyncadd [#allocation5], %s187
          %s190 = sshll.u32 [#allocation4], 4
          %s191 = int_to_ptr.vmem [resolvable:$true] %s190
          %193 = dma.hbm_to_vmem [thread:$0]  %s2, 16, %s191, [#allocation5]
        $region20: #{remotenet_forward.5} parent=11 // pred_fallthru
          _
        // Predicated region
        $region21: #{remotenet_forward.5} parent=11 // pred_check
          %p194 = pneg %p103
        $region22: #{remotenet_forward.5} parent=11 // pred_check_branch
          %196 = sbr.rel (%p194) target = $region24
        $region23: #{remotenet_forward.5} parent=11 // pred_region
          %s198 = ssub.s32 1024, 1024
          %199 = vsyncadd [#allocation5], %s198
          %s200 = sshll.u32 [#allocation6], 4
          %s201 = int_to_ptr.vmem [resolvable:$true] %s200
          %206 = dma.hbm_to_vmem [thread:$0]  %s3, 1024, %s201, [#allocation5], 64, 64, 4
        $region24: #{remotenet_forward.5} parent=11 // pred_fallthru
          _
      $region12: #{remotenet_forward.5} parent=5 // pred_fallthru
        _
      %p207 = scmp.lt.s32.totalorder %s14, 2
      // Predicated region
      $region25: #{remotenet_forward.5} parent=5 // pred_check
        %p208 = pneg %p207
      $region26: #{remotenet_forward.5} parent=5 // pred_check_branch
        %210 = sbr.rel (%p208) target = $region28
      $region27: #{remotenet_forward.5} parent=5 // pred_region
        // Predicated region
        $region29: #{remotenet_forward.5} parent=27 // pred_check
          %p211 = pneg %p34
        $region30: #{remotenet_forward.5} parent=27 // pred_check_branch
          %213 = sbr.rel (%p211) target = $region32
        $region31: #{remotenet_forward.5} parent=27 // pred_region
          %s214 = smul.u32 32, %s14
          %p215 = scmp.lt.s32.totalorder %s214, 63
          %s216 = scalar_select %p215, %s214, 63
          %s217 = smul.addr %s216, 4
          %s218 = scalar_lea.vmem %s0, %s217
          %s219 = smul.u32 32, %s14
        $region32: #{remotenet_forward.5} parent=27 // pred_fallthru
          _
      $region28: #{remotenet_forward.5} parent=5 // pred_fallthru
        _
      %p220 = scmp.le.s32.totalorder 1, %s14
      %p221 = scmp.lt.s32.totalorder %s14, 3
      %p222 = pnand %p220, %p221
      %p223 = pneg %p222
      // Predicated region
      $region33: #{remotenet_forward.5} parent=5 // pred_check
        _
      $region34: #{remotenet_forward.5} parent=5 // pred_check_branch
        %225 = sbr.rel (%p222) target = $region36
      $region35: #{remotenet_forward.5} parent=5 // pred_region
        %s226 = ssub.s32 %s14, 1
        // Predicated region
        $region37: #{remotenet_forward.5} parent=35 // pred_check
          %p227 = pneg %p61
        $region38: #{remotenet_forward.5} parent=35 // pred_check_branch
          %229 = sbr.rel (%p227) target = $region40
        $region39: #{remotenet_forward.5} parent=35 // pred_region
          %230 = dma.done [#allocation3], 384
        $region40: #{remotenet_forward.5} parent=35 // pred_fallthru
          _
        // Predicated region
        $region41: #{remotenet_forward.5} parent=35 // pred_check
          %p231 = pneg %p82
        $region42: #{remotenet_forward.5} parent=35 // pred_check_branch
          %233 = sbr.rel (%p231) target = $region44
        $region43: #{remotenet_forward.5} parent=35 // pred_region
          %234 = dma.done [#allocation5], 16
        $region44: #{remotenet_forward.5} parent=35 // pred_fallthru
          _
        // Predicated region
        $region45: #{remotenet_forward.5} parent=35 // pred_check
          %p235 = pneg %p103
        $region46: #{remotenet_forward.5} parent=35 // pred_check_branch
          %237 = sbr.rel (%p235) target = $region48
        $region47: #{remotenet_forward.5} parent=35 // pred_region
          %238 = dma.done [#allocation5], 1024
        $region48: #{remotenet_forward.5} parent=35 // pred_fallthru
          _
        %s239 = smul.u32 32, %s19
        %p240 = scmp.lt.s32.totalorder %s239, 63
        %s241 = scalar_select %p240, %s239, 63
        %s242 = smul.addr %s241, 4
        %s243 = scalar_lea.vmem %s0, %s242
        %p244 = pneg %p40
        %p245 = pneg %p37
        %p246 = pneg %p61
        %p247 = pneg %p58
        %p248 = pneg %p82
        %p249 = pneg %p79
        %p250 = pneg %p103
        %p251 = pneg %p100
        %p252 = pneg %p129
        %p253 = pneg %p126
        %s254 = smul.u32 32, %s19
        %p255 = scmp.lt.s32.totalorder %s254, 63
        %s256 = scalar_select %p255, %s254, 63
        %s257 = smul.addr %s256, 4
        %s258 = scalar_lea.vmem %s4, %s257
        %p259 = pneg %p155
        %p260 = pneg %p152
        %s261 = smul.u32 32, %s19
        %p262 = scmp.lt.s32.totalorder %s261, 63
        %s263 = scalar_select %p262, %s261, 63
        %s264 = smul.addr %s263, 4
        %s265 = scalar_lea.vmem %s5, %s264
        %s266 = smul.u32 32, %s19
        %p267 = scmp.lt.s32.totalorder %s266, 63
        %s268 = scalar_select %p267, %s266, 63
        %s269 = smul.addr %s268, 4
        %s270 = scalar_lea.vmem %s0, %s269
        %s271 = smul.u32 32, %s19
        %s272 = smul.u32 32, %s19
        %p273 = scmp.lt.s32.totalorder %s272, 63
        %s274 = scalar_select %p273, %s272, 63
        %s275 = smul.addr %s274, 4
        %s276 = scalar_lea.vmem %s4, %s275
        %s277 = smul.u32 32, %s19
        %s278 = smul.u32 32, %s19
        %p279 = scmp.lt.s32.totalorder %s278, 63
        %s280 = scalar_select %p279, %s278, 63
        %s281 = smul.addr %s280, 4
        %s282 = scalar_lea.vmem %s5, %s281
        %s283 = smul.u32 32, %s19
        %v285 = vld [vmem:[%s270] sm:$0xf]
        %v286 = vld [vmem:[%s270 + $0x4] sm:$0xf]
        %v287 = vld [vmem:[%s270 + $0x8] sm:$0xf]
        %v288 = vld [vmem:[%s270 + $0xc] sm:$0xf]
        %v289 = vld [vmem:[%s270 + $0x10] sm:$0xf]
        %v290 = vld [vmem:[%s270 + $0x14] sm:$0xf]
        %v291 = vld [vmem:[%s270 + $0x18] sm:$0xf]
        %v292 = vld [vmem:[%s270 + $0x1c] sm:$0xf]
        %v293 = vld [vmem:[%s270 + $0x20] sm:$0xf]
        %v294 = vld [vmem:[%s270 + $0x24] sm:$0xf]
        %v295 = vld [vmem:[%s270 + $0x28] sm:$0xf]
        %v296 = vld [vmem:[%s270 + $0x2c] sm:$0xf]
        %v297 = vld [vmem:[%s270 + $0x30] sm:$0xf]
        %v298 = vld [vmem:[%s270 + $0x34] sm:$0xf]
        %v299 = vld [vmem:[%s270 + $0x38] sm:$0xf]
        %v300 = vld [vmem:[%s270 + $0x3c] sm:$0xf]
        %v301 = vld [vmem:[%s270 + $0x40] sm:$0xf]
        %v302 = vld [vmem:[%s270 + $0x44] sm:$0xf]
        %v303 = vld [vmem:[%s270 + $0x48] sm:$0xf]
        %v304 = vld [vmem:[%s270 + $0x4c] sm:$0xf]
        %v305 = vld [vmem:[%s270 + $0x50] sm:$0xf]
        %v306 = vld [vmem:[%s270 + $0x54] sm:$0xf]
        %v307 = vld [vmem:[%s270 + $0x58] sm:$0xf]
        %v308 = vld [vmem:[%s270 + $0x5c] sm:$0xf]
        %v309 = vld [vmem:[%s270 + $0x60] sm:$0xf]
        %v310 = vld [vmem:[%s270 + $0x64] sm:$0xf]
        %v311 = vld [vmem:[%s270 + $0x68] sm:$0xf]
        %v312 = vld [vmem:[%s270 + $0x6c] sm:$0xf]
        %v313 = vld [vmem:[%s270 + $0x70] sm:$0xf]
        %v314 = vld [vmem:[%s270 + $0x74] sm:$0xf]
        %v315 = vld [vmem:[%s270 + $0x78] sm:$0xf]
        %v316 = vld [vmem:[%s270 + $0x7c] sm:$0xf]
        %v317 = vld [vmem:[#allocation2] sm:$0xf]
        %v318 = vld [vmem:[#allocation2 + $0x4] sm:$0xf]
        %v319 = vld [vmem:[#allocation2 + $0x8] sm:$0xf]
        %v320 = vld [vmem:[#allocation2 + $0xc] sm:$0xf]
        %v321 = vld [vmem:[#allocation2 + $0x10] sm:$0xf]
        %v322 = vld [vmem:[#allocation2 + $0x14] sm:$0xf]
        %v323 = vld [vmem:[#allocation4] sm:$0x1]
        %v325 = vlaneseq
        %v326 = vshrl.u32 %v325, 7
        %v327 = vsub.s32 0, %v326
        %v328 = vrot.slane %v323, %v327
        %v362 = vunpack.c.l.b16 %v285
        %v363 = vunpack.c.l.b16 %v286
        %v364 = vunpack.c.l.b16 %v287
        %v365 = vunpack.c.l.b16 %v288
        %v366 = vunpack.c.l.b16 %v289
        %v367 = vunpack.c.l.b16 %v290
        %v368 = vunpack.c.l.b16 %v291
        %v369 = vunpack.c.l.b16 %v292
        %v370 = vunpack.c.l.b16 %v293
        %v371 = vunpack.c.l.b16 %v294
        %v372 = vunpack.c.l.b16 %v295
        %v373 = vunpack.c.l.b16 %v296
        %v374 = vunpack.c.l.b16 %v297
        %v375 = vunpack.c.l.b16 %v298
        %v376 = vunpack.c.l.b16 %v299
        %v377 = vunpack.c.l.b16 %v300
        %v378 = vunpack.c.l.b16 %v301
        %v379 = vunpack.c.l.b16 %v302
        %v380 = vunpack.c.l.b16 %v303
        %v381 = vunpack.c.l.b16 %v304
        %v382 = vunpack.c.l.b16 %v305
        %v383 = vunpack.c.l.b16 %v306
        %v384 = vunpack.c.l.b16 %v307
        %v385 = vunpack.c.l.b16 %v308
        %v386 = vunpack.c.l.b16 %v309
        %v387 = vunpack.c.l.b16 %v310
        %v388 = vunpack.c.l.b16 %v311
        %v389 = vunpack.c.l.b16 %v312
        %v390 = vunpack.c.l.b16 %v313
        %v391 = vunpack.c.l.b16 %v314
        %v392 = vunpack.c.l.b16 %v315
        %v393 = vunpack.c.l.b16 %v316
        %v394 = vpack.c.b16 %v363, %v362
        %v395 = vpack.c.b16 %v365, %v364
        %v396 = vpack.c.b16 %v367, %v366
        %v397 = vpack.c.b16 %v369, %v368
        %v398 = vpack.c.b16 %v371, %v370
        %v399 = vpack.c.b16 %v373, %v372
        %v400 = vpack.c.b16 %v375, %v374
        %v401 = vpack.c.b16 %v377, %v376
        %v402 = vpack.c.b16 %v379, %v378
        %v403 = vpack.c.b16 %v381, %v380
        %v404 = vpack.c.b16 %v383, %v382
        %v405 = vpack.c.b16 %v385, %v384
        %v406 = vpack.c.b16 %v387, %v386
        %v407 = vpack.c.b16 %v389, %v388
        %v408 = vpack.c.b16 %v391, %v390
        %v409 = vpack.c.b16 %v393, %v392
        %v416 = vunpack.c.l.b16 %v317
        %v417 = vunpack.c.l.b16 %v318
        %v418 = vunpack.c.l.b16 %v319
        %v419 = vunpack.c.l.b16 %v320
        %v420 = vunpack.c.l.b16 %v321
        %v421 = vunpack.c.l.b16 %v322
        %v422 = vpack.c.b16 %v417, %v416
        %v423 = vpack.c.b16 %v419, %v418
        %v424 = vpack.c.b16 %v421, %v420
        %vm428 = vcmask 392192
        %v430 = vsel %vm428, %v394, 0
        %v433 = vsel %vm428, %v395, 0
        %v436 = vsel %vm428, %v396, 0
        %v439 = vsel %vm428, %v397, 0
        %v442 = vsel %vm428, %v398, 0
        %v445 = vsel %vm428, %v399, 0
        %v448 = vsel %vm428, %v400, 0
        %v451 = vsel %vm428, %v401, 0
        %v454 = vsel %vm428, %v402, 0
        %v457 = vsel %vm428, %v403, 0
        %v460 = vsel %vm428, %v404, 0
        %v463 = vsel %vm428, %v405, 0
        %v466 = vsel %vm428, %v406, 0
        %v469 = vsel %vm428, %v407, 0
        %v472 = vsel %vm428, %v408, 0
        %v475 = vsel %vm428, %v409, 0
        %477 = vmatprep.subr.bf16.mxu0 0
        %478 = vmatpush1.bf16.msra.mxu0 %v422
        %479 = vmatprep.subr.bf16.mxu0 0
        %480 = vmatpush1.bf16.msra.mxu0 %v423
        %481 = vmatprep.subr.bf16.mxu0 0
        %482 = vmatpush1.bf16.msra.mxu0 %v424
        %483 = vmatprep.subr.bf16.mxu0 0
        %484 = vmatpush1.bf16.msra.mxu0 0
        %485 = vmatprep.subr.bf16.mxu0 0
        %486 = vmatpush1.bf16.msra.mxu0 0
        %487 = vmatprep.subr.bf16.mxu0 0
        %488 = vmatpush1.bf16.msra.mxu0 0
        %489 = vmatprep.subr.bf16.mxu0 0
        %490 = vmatpush1.bf16.msra.mxu0 0
        %491 = vmatprep.subr.bf16.mxu0 0
        %492 = vmatpush1.bf16.msra.mxu0 0
        %493 = vmatprep.subr.bf16.mxu0 0
        %494 = vmatpush1.bf16.msra.mxu0 0
        %495 = vmatprep.subr.bf16.mxu0 0
        %496 = vmatpush1.bf16.msra.mxu0 0
        %497 = vmatprep.subr.bf16.mxu0 0
        %498 = vmatpush1.bf16.msra.mxu0 0
        %499 = vmatprep.subr.bf16.mxu0 0
        %500 = vmatpush1.bf16.msra.mxu0 0
        %501 = vmatprep.subr.bf16.mxu0 0
        %502 = vmatpush1.bf16.msra.mxu0 0
        %503 = vmatprep.subr.bf16.mxu0 0
        %504 = vmatpush1.bf16.msra.mxu0 0
        %505 = vmatprep.subr.bf16.mxu0 0
        %506 = vmatpush1.bf16.msra.mxu0 0
        %507 = vmatprep.subr.bf16.mxu0 0
        %508 = vmatpush1.bf16.msra.mxu0 0
        %509 = vmatprep.mubr.bf16.mxu0 0
        %510 = vmatmul.mubr.bf16.gmra.mrb[0].mxu0 %v430
        %v511 = vpop.f32.mrb[0].mxu0
        %v512 = vadd.f32 %v328, %v511
        %v513 = vpop.f32.mrb[0].mxu0
        %v514 = vpop.f32.mrb[0].mxu0
        %v515 = vadd.f32 %v328, %v514
        %v516 = vpop.f32.mrb[0].mxu0
        %517 = vmatprep.mubr.bf16.mxu0 0
        %518 = vmatmul.mubr.bf16.gmra.mrb[0].mxu0 %v433
        %v519 = vpop.f32.mrb[0].mxu0
        %v520 = vadd.f32 %v328, %v519
        %v521 = vpop.f32.mrb[0].mxu0
        %v522 = vpop.f32.mrb[0].mxu0
        %v523 = vadd.f32 %v328, %v522
        %v524 = vpop.f32.mrb[0].mxu0
        %525 = vmatprep.mubr.bf16.mxu0 0
        %526 = vmatmul.mubr.bf16.gmra.mrb[0].mxu0 %v436
        %v527 = vpop.f32.mrb[0].mxu0
        %v528 = vadd.f32 %v328, %v527
        %v529 = vpop.f32.mrb[0].mxu0
        %v530 = vpop.f32.mrb[0].mxu0
        %v531 = vadd.f32 %v328, %v530
        %v532 = vpop.f32.mrb[0].mxu0
        %533 = vmatprep.mubr.bf16.mxu0 0
        %534 = vmatmul.mubr.bf16.gmra.mrb[0].mxu0 %v439
        %v535 = vpop.f32.mrb[0].mxu0
        %v536 = vadd.f32 %v328, %v535
        %v537 = vpop.f32.mrb[0].mxu0
        %v538 = vpop.f32.mrb[0].mxu0
        %v539 = vadd.f32 %v328, %v538
        %v540 = vpop.f32.mrb[0].mxu0
        %541 = vmatprep.mubr.bf16.mxu0 0
        %542 = vmatmul.mubr.bf16.gmra.mrb[0].mxu0 %v442
        %v543 = vpop.f32.mrb[0].mxu0
        %v544 = vadd.f32 %v328, %v543
        %v545 = vpop.f32.mrb[0].mxu0
        %v546 = vpop.f32.mrb[0].mxu0
        %v547 = vadd.f32 %v328, %v546
        %v548 = vpop.f32.mrb[0].mxu0
        %549 = vmatprep.mubr.bf16.mxu0 0
        %550 = vmatmul.mubr.bf16.gmra.mrb[0].mxu0 %v445
        %v551 = vpop.f32.mrb[0].mxu0
        %v552 = vadd.f32 %v328, %v551
        %v553 = vpop.f32.mrb[0].mxu0
        %v554 = vpop.f32.mrb[0].mxu0
        %v555 = vadd.f32 %v328, %v554
        %v556 = vpop.f32.mrb[0].mxu0
        %557 = vmatprep.mubr.bf16.mxu0 0
        %558 = vmatmul.mubr.bf16.gmra.mrb[0].mxu0 %v448
        %v559 = vpop.f32.mrb[0].mxu0
        %v560 = vadd.f32 %v328, %v559
        %v561 = vpop.f32.mrb[0].mxu0
        %v562 = vpop.f32.mrb[0].mxu0
        %v563 = vadd.f32 %v328, %v562
        %v564 = vpop.f32.mrb[0].mxu0
        %565 = vmatprep.mubr.bf16.mxu0 0
        %566 = vmatmul.mubr.bf16.gmra.mrb[0].mxu0 %v451
        %v567 = vpop.f32.mrb[0].mxu0
        %v568 = vadd.f32 %v328, %v567
        %v569 = vpop.f32.mrb[0].mxu0
        %v570 = vpop.f32.mrb[0].mxu0
        %v571 = vadd.f32 %v328, %v570
        %v572 = vpop.f32.mrb[0].mxu0
        %573 = vmatprep.mubr.bf16.mxu0 0
        %574 = vmatmul.mubr.bf16.gmra.mrb[0].mxu0 %v454
        %v575 = vpop.f32.mrb[0].mxu0
        %v576 = vadd.f32 %v328, %v575
        %v577 = vpop.f32.mrb[0].mxu0
        %v578 = vpop.f32.mrb[0].mxu0
        %v579 = vadd.f32 %v328, %v578
        %v580 = vpop.f32.mrb[0].mxu0
        %581 = vmatprep.mubr.bf16.mxu0 0
        %582 = vmatmul.mubr.bf16.gmra.mrb[0].mxu0 %v457
        %v583 = vpop.f32.mrb[0].mxu0
        %v584 = vadd.f32 %v328, %v583
        %v585 = vpop.f32.mrb[0].mxu0
        %v586 = vpop.f32.mrb[0].mxu0
        %v587 = vadd.f32 %v328, %v586
        %v588 = vpop.f32.mrb[0].mxu0
        %589 = vmatprep.mubr.bf16.mxu0 0
        %590 = vmatmul.mubr.bf16.gmra.mrb[0].mxu0 %v460
        %v591 = vpop.f32.mrb[0].mxu0
        %v592 = vadd.f32 %v328, %v591
        %v593 = vpop.f32.mrb[0].mxu0
        %v594 = vpop.f32.mrb[0].mxu0
        %v595 = vadd.f32 %v328, %v594
        %v596 = vpop.f32.mrb[0].mxu0
        %597 = vmatprep.mubr.bf16.mxu0 0
        %598 = vmatmul.mubr.bf16.gmra.mrb[0].mxu0 %v463
        %v599 = vpop.f32.mrb[0].mxu0
        %v600 = vadd.f32 %v328, %v599
        %v601 = vpop.f32.mrb[0].mxu0
        %v602 = vpop.f32.mrb[0].mxu0
        %v603 = vadd.f32 %v328, %v602
        %v604 = vpop.f32.mrb[0].mxu0
        %605 = vmatprep.mubr.bf16.mxu0 0
        %606 = vmatmul.mubr.bf16.gmra.mrb[0].mxu0 %v466
        %v607 = vpop.f32.mrb[0].mxu0
        %v608 = vadd.f32 %v328, %v607
        %v609 = vpop.f32.mrb[0].mxu0
        %v610 = vpop.f32.mrb[0].mxu0
        %v611 = vadd.f32 %v328, %v610
        %v612 = vpop.f32.mrb[0].mxu0
        %613 = vmatprep.mubr.bf16.mxu0 0
        %614 = vmatmul.mubr.bf16.gmra.mrb[0].mxu0 %v469
        %v615 = vpop.f32.mrb[0].mxu0
        %v616 = vadd.f32 %v328, %v615
        %v617 = vpop.f32.mrb[0].mxu0
        %v618 = vpop.f32.mrb[0].mxu0
        %v619 = vadd.f32 %v328, %v618
        %v620 = vpop.f32.mrb[0].mxu0
        %621 = vmatprep.mubr.bf16.mxu0 0
        %622 = vmatmul.mubr.bf16.gmra.mrb[0].mxu0 %v472
        %v623 = vpop.f32.mrb[0].mxu0
        %v624 = vadd.f32 %v328, %v623
        %v625 = vpop.f32.mrb[0].mxu0
        %v626 = vpop.f32.mrb[0].mxu0
        %v627 = vadd.f32 %v328, %v626
        %v628 = vpop.f32.mrb[0].mxu0
        %629 = vmatprep.mubr.bf16.mxu0 0
        %630 = vmatmul.mubr.bf16.gmra.mrb[0].mxu0 %v475
        %v631 = vpop.f32.mrb[0].mxu0
        %v632 = vadd.f32 %v328, %v631
        %v633 = vpop.f32.mrb[0].mxu0
        %v634 = vpop.f32.mrb[0].mxu0
        %v635 = vadd.f32 %v328, %v634
        %v636 = vpop.f32.mrb[0].mxu0
        %637 = vdwg.mxu0
        %v638 = vmax.f32 %v512, 0.0
        %v639 = vmax.f32 %v515, 0.0
        %v640 = vmax.f32 %v520, 0.0
        %v641 = vmax.f32 %v523, 0.0
        %v642 = vmax.f32 %v528, 0.0
        %v643 = vmax.f32 %v531, 0.0
        %v644 = vmax.f32 %v536, 0.0
        %v645 = vmax.f32 %v539, 0.0
        %v646 = vmax.f32 %v544, 0.0
        %v647 = vmax.f32 %v547, 0.0
        %v648 = vmax.f32 %v552, 0.0
        %v649 = vmax.f32 %v555, 0.0
        %v650 = vmax.f32 %v560, 0.0
        %v651 = vmax.f32 %v563, 0.0
        %v652 = vmax.f32 %v568, 0.0
        %v653 = vmax.f32 %v571, 0.0
        %v654 = vmax.f32 %v576, 0.0
        %v655 = vmax.f32 %v579, 0.0
        %v656 = vmax.f32 %v584, 0.0
        %v657 = vmax.f32 %v587, 0.0
        %v658 = vmax.f32 %v592, 0.0
        %v659 = vmax.f32 %v595, 0.0
        %v660 = vmax.f32 %v600, 0.0
        %v661 = vmax.f32 %v603, 0.0
        %v662 = vmax.f32 %v608, 0.0
        %v663 = vmax.f32 %v611, 0.0
        %v664 = vmax.f32 %v616, 0.0
        %v665 = vmax.f32 %v619, 0.0
        %v666 = vmax.f32 %v624, 0.0
        %v667 = vmax.f32 %v627, 0.0
        %v668 = vmax.f32 %v632, 0.0
        %v669 = vmax.f32 %v635, 0.0
        %v670 = vpack.c.bf16 %v639, %v638
        %v671 = vpack.c.bf16 %v641, %v640
        %v672 = vpack.c.bf16 %v643, %v642
        %v673 = vpack.c.bf16 %v645, %v644
        %v674 = vpack.c.bf16 %v647, %v646
        %v675 = vpack.c.bf16 %v649, %v648
        %v676 = vpack.c.bf16 %v651, %v650
        %v677 = vpack.c.bf16 %v653, %v652
        %v678 = vpack.c.bf16 %v655, %v654
        %v679 = vpack.c.bf16 %v657, %v656
        %v680 = vpack.c.bf16 %v659, %v658
        %v681 = vpack.c.bf16 %v661, %v660
        %v682 = vpack.c.bf16 %v663, %v662
        %v683 = vpack.c.bf16 %v665, %v664
        %v684 = vpack.c.bf16 %v667, %v666
        %v685 = vpack.c.bf16 %v669, %v668
        %v702 = vunpack.c.l.b16 %v670
        %v703 = vunpack.c.h.b16 %v670
        %v704 = vunpack.c.l.b16 %v671
        %v705 = vunpack.c.h.b16 %v671
        %v706 = vunpack.c.l.b16 %v672
        %v707 = vunpack.c.h.b16 %v672
        %v708 = vunpack.c.l.b16 %v673
        %v709 = vunpack.c.h.b16 %v673
        %v710 = vunpack.c.l.b16 %v674
        %v711 = vunpack.c.h.b16 %v674
        %v712 = vunpack.c.l.b16 %v675
        %v713 = vunpack.c.h.b16 %v675
        %v714 = vunpack.c.l.b16 %v676
        %v715 = vunpack.c.h.b16 %v676
        %v716 = vunpack.c.l.b16 %v677
        %v717 = vunpack.c.h.b16 %v677
        %v718 = vunpack.c.l.b16 %v678
        %v719 = vunpack.c.h.b16 %v678
        %v720 = vunpack.c.l.b16 %v679
        %v721 = vunpack.c.h.b16 %v679
        %v722 = vunpack.c.l.b16 %v680
        %v723 = vunpack.c.h.b16 %v680
        %v724 = vunpack.c.l.b16 %v681
        %v725 = vunpack.c.h.b16 %v681
        %v726 = vunpack.c.l.b16 %v682
        %v727 = vunpack.c.h.b16 %v682
        %v728 = vunpack.c.l.b16 %v683
        %v729 = vunpack.c.h.b16 %v683
        %v730 = vunpack.c.l.b16 %v684
        %v731 = vunpack.c.h.b16 %v684
        %v732 = vunpack.c.l.b16 %v685
        %v733 = vunpack.c.h.b16 %v685
        %v734 = vpack.c.b16 %v702, %v702
        %v735 = vpack.c.b16 %v703, %v703
        %v736 = vpack.c.b16 %v704, %v704
        %v737 = vpack.c.b16 %v705, %v705
        %v738 = vpack.c.b16 %v706, %v706
        %v739 = vpack.c.b16 %v707, %v707
        %v740 = vpack.c.b16 %v708, %v708
        %v741 = vpack.c.b16 %v709, %v709
        %v742 = vpack.c.b16 %v710, %v710
        %v743 = vpack.c.b16 %v711, %v711
        %v744 = vpack.c.b16 %v712, %v712
        %v745 = vpack.c.b16 %v713, %v713
        %v746 = vpack.c.b16 %v714, %v714
        %v747 = vpack.c.b16 %v715, %v715
        %v748 = vpack.c.b16 %v716, %v716
        %v749 = vpack.c.b16 %v717, %v717
        %v750 = vpack.c.b16 %v718, %v718
        %v751 = vpack.c.b16 %v719, %v719
        %v752 = vpack.c.b16 %v720, %v720
        %v753 = vpack.c.b16 %v721, %v721
        %v754 = vpack.c.b16 %v722, %v722
        %v755 = vpack.c.b16 %v723, %v723
        %v756 = vpack.c.b16 %v724, %v724
        %v757 = vpack.c.b16 %v725, %v725
        %v758 = vpack.c.b16 %v726, %v726
        %v759 = vpack.c.b16 %v727, %v727
        %v760 = vpack.c.b16 %v728, %v728
        %v761 = vpack.c.b16 %v729, %v729
        %v762 = vpack.c.b16 %v730, %v730
        %v763 = vpack.c.b16 %v731, %v731
        %v764 = vpack.c.b16 %v732, %v732
        %v765 = vpack.c.b16 %v733, %v733
        %798 = vst [vmem:[%s276] sm:$0xf] %v734
        %799 = vst [vmem:[%s276 + $0x4] sm:$0xf] %v735
        %800 = vst [vmem:[%s276 + $0x8] sm:$0xf] %v736
        %801 = vst [vmem:[%s276 + $0xc] sm:$0xf] %v737
        %802 = vst [vmem:[%s276 + $0x10] sm:$0xf] %v738
        %803 = vst [vmem:[%s276 + $0x14] sm:$0xf] %v739
        %804 = vst [vmem:[%s276 + $0x18] sm:$0xf] %v740
        %805 = vst [vmem:[%s276 + $0x1c] sm:$0xf] %v741
        %806 = vst [vmem:[%s276 + $0x20] sm:$0xf] %v742
        %807 = vst [vmem:[%s276 + $0x24] sm:$0xf] %v743
        %808 = vst [vmem:[%s276 + $0x28] sm:$0xf] %v744
        %809 = vst [vmem:[%s276 + $0x2c] sm:$0xf] %v745
        %810 = vst [vmem:[%s276 + $0x30] sm:$0xf] %v746
        %811 = vst [vmem:[%s276 + $0x34] sm:$0xf] %v747
        %812 = vst [vmem:[%s276 + $0x38] sm:$0xf] %v748
        %813 = vst [vmem:[%s276 + $0x3c] sm:$0xf] %v749
        %814 = vst [vmem:[%s276 + $0x40] sm:$0xf] %v750
        %815 = vst [vmem:[%s276 + $0x44] sm:$0xf] %v751
        %816 = vst [vmem:[%s276 + $0x48] sm:$0xf] %v752
        %817 = vst [vmem:[%s276 + $0x4c] sm:$0xf] %v753
        %818 = vst [vmem:[%s276 + $0x50] sm:$0xf] %v754
        %819 = vst [vmem:[%s276 + $0x54] sm:$0xf] %v755
        %820 = vst [vmem:[%s276 + $0x58] sm:$0xf] %v756
        %821 = vst [vmem:[%s276 + $0x5c] sm:$0xf] %v757
        %822 = vst [vmem:[%s276 + $0x60] sm:$0xf] %v758
        %823 = vst [vmem:[%s276 + $0x64] sm:$0xf] %v759
        %824 = vst [vmem:[%s276 + $0x68] sm:$0xf] %v760
        %825 = vst [vmem:[%s276 + $0x6c] sm:$0xf] %v761
        %826 = vst [vmem:[%s276 + $0x70] sm:$0xf] %v762
        %827 = vst [vmem:[%s276 + $0x74] sm:$0xf] %v763
        %828 = vst [vmem:[%s276 + $0x78] sm:$0xf] %v764
        %829 = vst [vmem:[%s276 + $0x7c] sm:$0xf] %v765
        %v830 = vld [vmem:[#allocation6] sm:$0xf]
        %v831 = vld [vmem:[#allocation6 + $0x4] sm:$0xf]
        %v832 = vld [vmem:[#allocation6 + $0x8] sm:$0xf]
        %v833 = vld [vmem:[#allocation6 + $0xc] sm:$0xf]
        %v834 = vld [vmem:[#allocation6 + $0x10] sm:$0xf]
        %v835 = vld [vmem:[#allocation6 + $0x14] sm:$0xf]
        %v836 = vld [vmem:[#allocation6 + $0x18] sm:$0xf]
        %v837 = vld [vmem:[#allocation6 + $0x1c] sm:$0xf]
        %v838 = vld [vmem:[#allocation6 + $0x20] sm:$0xf]
        %v839 = vld [vmem:[#allocation6 + $0x24] sm:$0xf]
        %v840 = vld [vmem:[#allocation6 + $0x28] sm:$0xf]
        %v841 = vld [vmem:[#allocation6 + $0x2c] sm:$0xf]
        %v842 = vld [vmem:[#allocation6 + $0x30] sm:$0xf]
        %v843 = vld [vmem:[#allocation6 + $0x34] sm:$0xf]
        %v844 = vld [vmem:[#allocation6 + $0x38] sm:$0xf]
        %v845 = vld [vmem:[#allocation6 + $0x3c] sm:$0xf]
        %v862 = vunpack.c.l.b16 %v830
        %v863 = vunpack.c.l.b16 %v831
        %v864 = vunpack.c.l.b16 %v832
        %v865 = vunpack.c.l.b16 %v833
        %v866 = vunpack.c.l.b16 %v834
        %v867 = vunpack.c.l.b16 %v835
        %v868 = vunpack.c.l.b16 %v836
        %v869 = vunpack.c.l.b16 %v837
        %v870 = vunpack.c.l.b16 %v838
        %v871 = vunpack.c.l.b16 %v839
        %v872 = vunpack.c.l.b16 %v840
        %v873 = vunpack.c.l.b16 %v841
        %v874 = vunpack.c.l.b16 %v842
        %v875 = vunpack.c.l.b16 %v843
        %v876 = vunpack.c.l.b16 %v844
        %v877 = vunpack.c.l.b16 %v845
        %v878 = vpack.c.b16 %v863, %v862
        %v879 = vpack.c.b16 %v865, %v864
        %v880 = vpack.c.b16 %v867, %v866
        %v881 = vpack.c.b16 %v869, %v868
        %v882 = vpack.c.b16 %v871, %v870
        %v883 = vpack.c.b16 %v873, %v872
        %v884 = vpack.c.b16 %v875, %v874
        %v885 = vpack.c.b16 %v877, %v876
        %894 = vmatprep.subr.bf16.mxu0 0
        %895 = vmatpush1.bf16.msra.mxu0 %v878
        %896 = vmatprep.subr.bf16.mxu0 0
        %897 = vmatpush1.bf16.msra.mxu0 %v879
        %898 = vmatprep.subr.bf16.mxu0 0
        %899 = vmatpush1.bf16.msra.mxu0 %v880
        %900 = vmatprep.subr.bf16.mxu0 0
        %901 = vmatpush1.bf16.msra.mxu0 %v881
        %902 = vmatprep.subr.bf16.mxu0 0
        %903 = vmatpush1.bf16.msra.mxu0 %v882
        %904 = vmatprep.subr.bf16.mxu0 0
        %905 = vmatpush1.bf16.msra.mxu0 %v883
        %906 = vmatprep.subr.bf16.mxu0 0
        %907 = vmatpush1.bf16.msra.mxu0 %v884
        %908 = vmatprep.subr.bf16.mxu0 0
        %909 = vmatpush1.bf16.msra.mxu0 %v885
        %910 = vmatprep.subr.bf16.mxu0 0
        %911 = vmatpush1.bf16.msra.mxu0 0
        %912 = vmatprep.subr.bf16.mxu0 0
        %913 = vmatpush1.bf16.msra.mxu0 0
        %914 = vmatprep.subr.bf16.mxu0 0
        %915 = vmatpush1.bf16.msra.mxu0 0
        %916 = vmatprep.subr.bf16.mxu0 0
        %917 = vmatpush1.bf16.msra.mxu0 0
        %918 = vmatprep.subr.bf16.mxu0 0
        %919 = vmatpush1.bf16.msra.mxu0 0
        %920 = vmatprep.subr.bf16.mxu0 0
        %921 = vmatpush1.bf16.msra.mxu0 0
        %922 = vmatprep.subr.bf16.mxu0 0
        %923 = vmatpush1.bf16.msra.mxu0 0
        %924 = vmatprep.subr.bf16.mxu0 0
        %925 = vmatpush1.bf16.msra.mxu0 0
        %926 = vmatprep.mubr.bf16.mxu0 0
        %927 = vmatmul.mubr.bf16.gmra.mrb[0].mxu0 %v670
        %v928 = vpop.f32.mrb[0].mxu0
        %v929 = vadd.f32 0.0, %v928
        %v930 = vpop.f32.mrb[0].mxu0
        %v931 = vpop.f32.mrb[0].mxu0
        %v932 = vadd.f32 0.0, %v931
        %v933 = vpop.f32.mrb[0].mxu0
        %934 = vmatprep.mubr.bf16.mxu0 0
        %935 = vmatmul.mubr.bf16.gmra.mrb[0].mxu0 %v671
        %v936 = vpop.f32.mrb[0].mxu0
        %v937 = vadd.f32 0.0, %v936
        %v938 = vpop.f32.mrb[0].mxu0
        %v939 = vpop.f32.mrb[0].mxu0
        %v940 = vadd.f32 0.0, %v939
        %v941 = vpop.f32.mrb[0].mxu0
        %942 = vmatprep.mubr.bf16.mxu0 0
        %943 = vmatmul.mubr.bf16.gmra.mrb[0].mxu0 %v672
        %v944 = vpop.f32.mrb[0].mxu0
        %v945 = vadd.f32 0.0, %v944
        %v946 = vpop.f32.mrb[0].mxu0
        %v947 = vpop.f32.mrb[0].mxu0
        %v948 = vadd.f32 0.0, %v947
        %v949 = vpop.f32.mrb[0].mxu0
        %950 = vmatprep.mubr.bf16.mxu0 0
        %951 = vmatmul.mubr.bf16.gmra.mrb[0].mxu0 %v673
        %v952 = vpop.f32.mrb[0].mxu0
        %v953 = vadd.f32 0.0, %v952
        %v954 = vpop.f32.mrb[0].mxu0
        %v955 = vpop.f32.mrb[0].mxu0
        %v956 = vadd.f32 0.0, %v955
        %v957 = vpop.f32.mrb[0].mxu0
        %958 = vmatprep.mubr.bf16.mxu0 0
        %959 = vmatmul.mubr.bf16.gmra.mrb[0].mxu0 %v674
        %v960 = vpop.f32.mrb[0].mxu0
        %v961 = vadd.f32 0.0, %v960
        %v962 = vpop.f32.mrb[0].mxu0
        %v963 = vpop.f32.mrb[0].mxu0
        %v964 = vadd.f32 0.0, %v963
        %v965 = vpop.f32.mrb[0].mxu0
        %966 = vmatprep.mubr.bf16.mxu0 0
        %967 = vmatmul.mubr.bf16.gmra.mrb[0].mxu0 %v675
        %v968 = vpop.f32.mrb[0].mxu0
        %v969 = vadd.f32 0.0, %v968
        %v970 = vpop.f32.mrb[0].mxu0
        %v971 = vpop.f32.mrb[0].mxu0
        %v972 = vadd.f32 0.0, %v971
        %v973 = vpop.f32.mrb[0].mxu0
        %974 = vmatprep.mubr.bf16.mxu0 0
        %975 = vmatmul.mubr.bf16.gmra.mrb[0].mxu0 %v676
        %v976 = vpop.f32.mrb[0].mxu0
        %v977 = vadd.f32 0.0, %v976
        %v978 = vpop.f32.mrb[0].mxu0
        %v979 = vpop.f32.mrb[0].mxu0
        %v980 = vadd.f32 0.0, %v979
        %v981 = vpop.f32.mrb[0].mxu0
        %982 = vmatprep.mubr.bf16.mxu0 0
        %983 = vmatmul.mubr.bf16.gmra.mrb[0].mxu0 %v677
        %v984 = vpop.f32.mrb[0].mxu0
        %v985 = vadd.f32 0.0, %v984
        %v986 = vpop.f32.mrb[0].mxu0
        %v987 = vpop.f32.mrb[0].mxu0
        %v988 = vadd.f32 0.0, %v987
        %v989 = vpop.f32.mrb[0].mxu0
        %990 = vmatprep.mubr.bf16.mxu0 0
        %991 = vmatmul.mubr.bf16.gmra.mrb[0].mxu0 %v678
        %v992 = vpop.f32.mrb[0].mxu0
        %v993 = vadd.f32 0.0, %v992
        %v994 = vpop.f32.mrb[0].mxu0
        %v995 = vpop.f32.mrb[0].mxu0
        %v996 = vadd.f32 0.0, %v995
        %v997 = vpop.f32.mrb[0].mxu0
        %998 = vmatprep.mubr.bf16.mxu0 0
        %999 = vmatmul.mubr.bf16.gmra.mrb[0].mxu0 %v679
        %v1000 = vpop.f32.mrb[0].mxu0
        %v1001 = vadd.f32 0.0, %v1000
        %v1002 = vpop.f32.mrb[0].mxu0
        %v1003 = vpop.f32.mrb[0].mxu0
        %v1004 = vadd.f32 0.0, %v1003
        %v1005 = vpop.f32.mrb[0].mxu0
        %1006 = vmatprep.mubr.bf16.mxu0 0
        %1007 = vmatmul.mubr.bf16.gmra.mrb[0].mxu0 %v680
        %v1008 = vpop.f32.mrb[0].mxu0
        %v1009 = vadd.f32 0.0, %v1008
        %v1010 = vpop.f32.mrb[0].mxu0
        %v1011 = vpop.f32.mrb[0].mxu0
        %v1012 = vadd.f32 0.0, %v1011
        %v1013 = vpop.f32.mrb[0].mxu0
        %1014 = vmatprep.mubr.bf16.mxu0 0
        %1015 = vmatmul.mubr.bf16.gmra.mrb[0].mxu0 %v681
        %v1016 = vpop.f32.mrb[0].mxu0
        %v1017 = vadd.f32 0.0, %v1016
        %v1018 = vpop.f32.mrb[0].mxu0
        %v1019 = vpop.f32.mrb[0].mxu0
        %v1020 = vadd.f32 0.0, %v1019
        %v1021 = vpop.f32.mrb[0].mxu0
        %1022 = vmatprep.mubr.bf16.mxu0 0
        %1023 = vmatmul.mubr.bf16.gmra.mrb[0].mxu0 %v682
        %v1024 = vpop.f32.mrb[0].mxu0
        %v1025 = vadd.f32 0.0, %v1024
        %v1026 = vpop.f32.mrb[0].mxu0
        %v1027 = vpop.f32.mrb[0].mxu0
        %v1028 = vadd.f32 0.0, %v1027
        %v1029 = vpop.f32.mrb[0].mxu0
        %1030 = vmatprep.mubr.bf16.mxu0 0
        %1031 = vmatmul.mubr.bf16.gmra.mrb[0].mxu0 %v683
        %v1032 = vpop.f32.mrb[0].mxu0
        %v1033 = vadd.f32 0.0, %v1032
        %v1034 = vpop.f32.mrb[0].mxu0
        %v1035 = vpop.f32.mrb[0].mxu0
        %v1036 = vadd.f32 0.0, %v1035
        %v1037 = vpop.f32.mrb[0].mxu0
        %1038 = vmatprep.mubr.bf16.mxu0 0
        %1039 = vmatmul.mubr.bf16.gmra.mrb[0].mxu0 %v684
        %v1040 = vpop.f32.mrb[0].mxu0
        %v1041 = vadd.f32 0.0, %v1040
        %v1042 = vpop.f32.mrb[0].mxu0
        %v1043 = vpop.f32.mrb[0].mxu0
        %v1044 = vadd.f32 0.0, %v1043
        %v1045 = vpop.f32.mrb[0].mxu0
        %1046 = vmatprep.mubr.bf16.mxu0 0
        %1047 = vmatmul.mubr.bf16.gmra.mrb[0].mxu0 %v685
        %v1048 = vpop.f32.mrb[0].mxu0
        %v1049 = vadd.f32 0.0, %v1048
        %v1050 = vpop.f32.mrb[0].mxu0
        %v1051 = vpop.f32.mrb[0].mxu0
        %v1052 = vadd.f32 0.0, %v1051
        %v1053 = vpop.f32.mrb[0].mxu0
        %1054 = vdwg.mxu0
        %v1055 = vpack.c.bf16 %v932, %v929
        %v1056 = vpack.c.bf16 %v940, %v937
        %v1057 = vpack.c.bf16 %v948, %v945
        %v1058 = vpack.c.bf16 %v956, %v953
        %v1059 = vpack.c.bf16 %v964, %v961
        %v1060 = vpack.c.bf16 %v972, %v969
        %v1061 = vpack.c.bf16 %v980, %v977
        %v1062 = vpack.c.bf16 %v988, %v985
        %v1063 = vpack.c.bf16 %v996, %v993
        %v1064 = vpack.c.bf16 %v1004, %v1001
        %v1065 = vpack.c.bf16 %v1012, %v1009
        %v1066 = vpack.c.bf16 %v1020, %v1017
        %v1067 = vpack.c.bf16 %v1028, %v1025
        %v1068 = vpack.c.bf16 %v1036, %v1033
        %v1069 = vpack.c.bf16 %v1044, %v1041
        %v1070 = vpack.c.bf16 %v1052, %v1049
        %v1087 = vunpack.c.l.b16 %v1055
        %v1088 = vunpack.c.h.b16 %v1055
        %v1089 = vunpack.c.l.b16 %v1056
        %v1090 = vunpack.c.h.b16 %v1056
        %v1091 = vunpack.c.l.b16 %v1057
        %v1092 = vunpack.c.h.b16 %v1057
        %v1093 = vunpack.c.l.b16 %v1058
        %v1094 = vunpack.c.h.b16 %v1058
        %v1095 = vunpack.c.l.b16 %v1059
        %v1096 = vunpack.c.h.b16 %v1059
        %v1097 = vunpack.c.l.b16 %v1060
        %v1098 = vunpack.c.h.b16 %v1060
        %v1099 = vunpack.c.l.b16 %v1061
        %v1100 = vunpack.c.h.b16 %v1061
        %v1101 = vunpack.c.l.b16 %v1062
        %v1102 = vunpack.c.h.b16 %v1062
        %v1103 = vunpack.c.l.b16 %v1063
        %v1104 = vunpack.c.h.b16 %v1063
        %v1105 = vunpack.c.l.b16 %v1064
        %v1106 = vunpack.c.h.b16 %v1064
        %v1107 = vunpack.c.l.b16 %v1065
        %v1108 = vunpack.c.h.b16 %v1065
        %v1109 = vunpack.c.l.b16 %v1066
        %v1110 = vunpack.c.h.b16 %v1066
        %v1111 = vunpack.c.l.b16 %v1067
        %v1112 = vunpack.c.h.b16 %v1067
        %v1113 = vunpack.c.l.b16 %v1068
        %v1114 = vunpack.c.h.b16 %v1068
        %v1115 = vunpack.c.l.b16 %v1069
        %v1116 = vunpack.c.h.b16 %v1069
        %v1117 = vunpack.c.l.b16 %v1070
        %v1118 = vunpack.c.h.b16 %v1070
        %v1119 = vpack.c.b16 %v1087, %v1087
        %v1120 = vpack.c.b16 %v1088, %v1088
        %v1121 = vpack.c.b16 %v1089, %v1089
        %v1122 = vpack.c.b16 %v1090, %v1090
        %v1123 = vpack.c.b16 %v1091, %v1091
        %v1124 = vpack.c.b16 %v1092, %v1092
        %v1125 = vpack.c.b16 %v1093, %v1093
        %v1126 = vpack.c.b16 %v1094, %v1094
        %v1127 = vpack.c.b16 %v1095, %v1095
        %v1128 = vpack.c.b16 %v1096, %v1096
        %v1129 = vpack.c.b16 %v1097, %v1097
        %v1130 = vpack.c.b16 %v1098, %v1098
        %v1131 = vpack.c.b16 %v1099, %v1099
        %v1132 = vpack.c.b16 %v1100, %v1100
        %v1133 = vpack.c.b16 %v1101, %v1101
        %v1134 = vpack.c.b16 %v1102, %v1102
        %v1135 = vpack.c.b16 %v1103, %v1103
        %v1136 = vpack.c.b16 %v1104, %v1104
        %v1137 = vpack.c.b16 %v1105, %v1105
        %v1138 = vpack.c.b16 %v1106, %v1106
        %v1139 = vpack.c.b16 %v1107, %v1107
        %v1140 = vpack.c.b16 %v1108, %v1108
        %v1141 = vpack.c.b16 %v1109, %v1109
        %v1142 = vpack.c.b16 %v1110, %v1110
        %v1143 = vpack.c.b16 %v1111, %v1111
        %v1144 = vpack.c.b16 %v1112, %v1112
        %v1145 = vpack.c.b16 %v1113, %v1113
        %v1146 = vpack.c.b16 %v1114, %v1114
        %v1147 = vpack.c.b16 %v1115, %v1115
        %v1148 = vpack.c.b16 %v1116, %v1116
        %v1149 = vpack.c.b16 %v1117, %v1117
        %v1150 = vpack.c.b16 %v1118, %v1118
        %1183 = vst [vmem:[%s282] sm:$0xf] %v1119
        %1184 = vst [vmem:[%s282 + $0x4] sm:$0xf] %v1120
        %1185 = vst [vmem:[%s282 + $0x8] sm:$0xf] %v1121
        %1186 = vst [vmem:[%s282 + $0xc] sm:$0xf] %v1122
        %1187 = vst [vmem:[%s282 + $0x10] sm:$0xf] %v1123
        %1188 = vst [vmem:[%s282 + $0x14] sm:$0xf] %v1124
        %1189 = vst [vmem:[%s282 + $0x18] sm:$0xf] %v1125
        %1190 = vst [vmem:[%s282 + $0x1c] sm:$0xf] %v1126
        %1191 = vst [vmem:[%s282 + $0x20] sm:$0xf] %v1127
        %1192 = vst [vmem:[%s282 + $0x24] sm:$0xf] %v1128
        %1193 = vst [vmem:[%s282 + $0x28] sm:$0xf] %v1129
        %1194 = vst [vmem:[%s282 + $0x2c] sm:$0xf] %v1130
        %1195 = vst [vmem:[%s282 + $0x30] sm:$0xf] %v1131
        %1196 = vst [vmem:[%s282 + $0x34] sm:$0xf] %v1132
        %1197 = vst [vmem:[%s282 + $0x38] sm:$0xf] %v1133
        %1198 = vst [vmem:[%s282 + $0x3c] sm:$0xf] %v1134
        %1199 = vst [vmem:[%s282 + $0x40] sm:$0xf] %v1135
        %1200 = vst [vmem:[%s282 + $0x44] sm:$0xf] %v1136
        %1201 = vst [vmem:[%s282 + $0x48] sm:$0xf] %v1137
        %1202 = vst [vmem:[%s282 + $0x4c] sm:$0xf] %v1138
        %1203 = vst [vmem:[%s282 + $0x50] sm:$0xf] %v1139
        %1204 = vst [vmem:[%s282 + $0x54] sm:$0xf] %v1140
        %1205 = vst [vmem:[%s282 + $0x58] sm:$0xf] %v1141
        %1206 = vst [vmem:[%s282 + $0x5c] sm:$0xf] %v1142
        %1207 = vst [vmem:[%s282 + $0x60] sm:$0xf] %v1143
        %1208 = vst [vmem:[%s282 + $0x64] sm:$0xf] %v1144
        %1209 = vst [vmem:[%s282 + $0x68] sm:$0xf] %v1145
        %1210 = vst [vmem:[%s282 + $0x6c] sm:$0xf] %v1146
        %1211 = vst [vmem:[%s282 + $0x70] sm:$0xf] %v1147
        %1212 = vst [vmem:[%s282 + $0x74] sm:$0xf] %v1148
        %1213 = vst [vmem:[%s282 + $0x78] sm:$0xf] %v1149
        %1214 = vst [vmem:[%s282 + $0x7c] sm:$0xf] %v1150
        %s1215 = smul.u32 32, %s19
        %p1216 = scmp.lt.s32.totalorder %s1215, 63
        %s1217 = scalar_select %p1216, %s1215, 63
        %s1218 = smul.addr %s1217, 4
        %s1219 = scalar_lea.vmem %s4, %s1218
        %s1220 = smul.u32 32, %s19
        %p1221 = scmp.lt.s32.totalorder %s1220, 63
        %s1222 = scalar_select %p1221, %s1220, 63
        %s1223 = smul.addr %s1222, 4
        %s1224 = scalar_lea.vmem %s5, %s1223
        // Predicated region
        $region49: #{remotenet_forward.5} parent=35 // pred_check
          %p1225 = pneg %p126
        $region50: #{remotenet_forward.5} parent=35 // pred_check_branch
          %1227 = sbr.rel (%p1225) target = $region52
        $region51: #{remotenet_forward.5} parent=35 // pred_region
          %s1228 = smul.u32 32, %s19
        $region52: #{remotenet_forward.5} parent=35 // pred_fallthru
          _
        // Predicated region
        $region53: #{remotenet_forward.5} parent=35 // pred_check
          %p1229 = pneg %p152
        $region54: #{remotenet_forward.5} parent=35 // pred_check_branch
          %1231 = sbr.rel (%p1229) target = $region56
        $region55: #{remotenet_forward.5} parent=35 // pred_region
          %s1232 = smul.u32 32, %s19
        $region56: #{remotenet_forward.5} parent=35 // pred_fallthru
          _
      $region36: #{remotenet_forward.5} parent=5 // pred_fallthru
        _
      %p1233 = scmp.le.s32.totalorder 2, %s14
      // Predicated region
      $region57: #{remotenet_forward.5} parent=5 // pred_check
        %p1234 = pneg %p1233
      $region58: #{remotenet_forward.5} parent=5 // pred_check_branch
        %1236 = sbr.rel (%p1234) target = $region60
      $region59: #{remotenet_forward.5} parent=5 // pred_region
        %s1237 = ssub.s32 %s14, 2
        // Predicated region
        $region61: #{remotenet_forward.5} parent=59 // pred_check
          %p1238 = pneg %p132
        $region62: #{remotenet_forward.5} parent=59 // pred_check_branch
          %1240 = sbr.rel (%p1238) target = $region64
        $region63: #{remotenet_forward.5} parent=59 // pred_region
          %s1241 = smul.u32 32, %s20
          %p1242 = scmp.lt.s32.totalorder %s1241, 63
          %s1243 = scalar_select %p1242, %s1241, 63
          %s1244 = smul.addr %s1243, 4
          %s1245 = scalar_lea.vmem %s4, %s1244
        $region64: #{remotenet_forward.5} parent=59 // pred_fallthru
          _
        // Predicated region
        $region65: #{remotenet_forward.5} parent=59 // pred_check
          %p1246 = pneg %p158
        $region66: #{remotenet_forward.5} parent=59 // pred_check_branch
          %1248 = sbr.rel (%p1246) target = $region68
        $region67: #{remotenet_forward.5} parent=59 // pred_region
          %s1249 = smul.u32 32, %s20
          %p1250 = scmp.lt.s32.totalorder %s1249, 63
          %s1251 = scalar_select %p1250, %s1249, 63
          %s1252 = smul.addr %s1251, 4
          %s1253 = scalar_lea.vmem %s5, %s1252
        $region68: #{remotenet_forward.5} parent=59 // pred_fallthru
          _
      $region60: #{remotenet_forward.5} parent=5 // pred_fallthru
        _
    $region6: #{remotenet_forward.5} parent=1 // loop_footer
      %s18 = sadd.s32 1, %s14
    $region7: #{remotenet_forward.5} parent=1 // loop_footer_branch
      %13 = sbr.rel target = $region3
    $region8: #{remotenet_forward.5} parent=1 // loop_exit
      _
    %1254 = vsyncpa [#allocation3], 1
    %s1255 = scalar_lea.sflag [#allocation3], 1
    %1256 = vsyncpa %s1255, 1
    %1257 = vsyncpa [#allocation5], 1

// kernel: remotenet_forward.6
$region0: #{remotenet_forward.6}
  #allocation0 [shape = 'u32[]', space=smem, size = 0x4, offset = 0x4, fixed_abs, tag = 'smem constant byte address 0x4 - core index']
  #allocation1 [shape = 'u32[144,128]{1,0:T(1,128)}', space=vmem, size = 0x12000, scoped, tag = 'internal scratch']
  %s0 = inlined_call_operand.vmem [shape: bf16[128,128], index: 0, kind: input, shape index: {}]
  %s1 = inlined_call_operand.hbm [shape: bf16[128,128], index: 1, kind: input, shape index: {}]
  %s2 = inlined_call_operand.hbm [shape: f32[1,128], index: 2, kind: input, shape index: {}]
  %s3 = inlined_call_operand.hbm [shape: bf16[128,128], index: 3, kind: input, shape index: {}]
  %s4 = inlined_call_operand.vmem [shape: bf16[128,128], index: 4, kind: output, shape index: {0}]
  %s5 = inlined_call_operand.vmem [shape: bf16[128,128], index: 5, kind: output, shape index: {1}]
  %6 = xla_tuple %s4, %s5
  %s7 = sld [smem:[#allocation0]]
  $region46: #{remotenet_forward.6} parent=0
    _
  %s9 = ssub.s32 1, %s7
  %s10 = scalar_select 0, %s9, %s7
  $region1: #{remotenet_forward.6} parent=0
    #allocation2 [shape = 'u8[32768]{0}', space=vmem, size = 0x8000, scoped, tag = 'input window, operand 1, single buffered']
    #allocation3 [shape = 's32[1]{0}', space=sflag, size = 0x4, scoped, tag = 'scoped memory for remotenet_forward.6']
    #allocation4 [shape = 'u8[512]{0}', space=vmem, size = 0x400, scoped, tag = 'input window, operand 2, single buffered']
    #allocation5 [shape = 's32[1]{0}', space=sflag, size = 0x4, scoped, tag = 'scoped memory for remotenet_forward.6']
    #allocation6 [shape = 'u8[32768]{0}', space=vmem, size = 0x8000, scoped, tag = 'input window, operand 3, single buffered']
    %11 = vsyncpa [#allocation3], 0
    %12 = vsyncpa [#allocation5], 0
    // Predicated region
    $region2: #{remotenet_forward.6} parent=1 // pred_check
      _
    $region3: #{remotenet_forward.6} parent=1 // pred_check_branch
      %14 = sbr.rel (0) target = $region5
    $region4: #{remotenet_forward.6} parent=1 // pred_region
      _
    $region5: #{remotenet_forward.6} parent=1 // pred_fallthru
      _
    // Predicated region
    $region6: #{remotenet_forward.6} parent=1 // pred_check
      _
    $region7: #{remotenet_forward.6} parent=1 // pred_check_branch
      %16 = sbr.rel (0) target = $region9
    $region8: #{remotenet_forward.6} parent=1 // pred_region
      %s18 = ssub.s32 1024, 1024
      %19 = vsyncadd [#allocation3], %s18
      %s20 = sshll.u32 [#allocation2], 4
      %s21 = int_to_ptr.vmem [resolvable:$true] %s20
      %26 = dma.hbm_to_vmem [thread:$0]  %s1, 1024, %s21, [#allocation3], 64, 64, 4
    $region9: #{remotenet_forward.6} parent=1 // pred_fallthru
      _
    // Predicated region
    $region10: #{remotenet_forward.6} parent=1 // pred_check
      _
    $region11: #{remotenet_forward.6} parent=1 // pred_check_branch
      %28 = sbr.rel (0) target = $region13
    $region12: #{remotenet_forward.6} parent=1 // pred_region
      %s30 = ssub.s32 16, 16
      %31 = vsyncadd [#allocation5], %s30
      %s33 = sshll.u32 [#allocation4], 4
      %s34 = int_to_ptr.vmem [resolvable:$true] %s33
      %36 = dma.hbm_to_vmem [thread:$0]  %s2, 16, %s34, [#allocation5]
    $region13: #{remotenet_forward.6} parent=1 // pred_fallthru
      _
    // Predicated region
    $region14: #{remotenet_forward.6} parent=1 // pred_check
      _
    $region15: #{remotenet_forward.6} parent=1 // pred_check_branch
      %38 = sbr.rel (0) target = $region17
    $region16: #{remotenet_forward.6} parent=1 // pred_region
      %s40 = ssub.s32 1024, 1024
      %41 = vsyncadd [#allocation5], %s40
      %s42 = sshll.u32 [#allocation6], 4
      %s43 = int_to_ptr.vmem [resolvable:$true] %s42
      %48 = dma.hbm_to_vmem [thread:$0]  %s3, 1024, %s43, [#allocation5], 64, 64, 4
    $region17: #{remotenet_forward.6} parent=1 // pred_fallthru
      _
    // Predicated region
    $region18: #{remotenet_forward.6} parent=1 // pred_check
      _
    $region19: #{remotenet_forward.6} parent=1 // pred_check_branch
      %50 = sbr.rel (0) target = $region21
    $region20: #{remotenet_forward.6} parent=1 // pred_region
      %51 = dma.done [#allocation3], 1024
    $region21: #{remotenet_forward.6} parent=1 // pred_fallthru
      _
    // Predicated region
    $region22: #{remotenet_forward.6} parent=1 // pred_check
      _
    $region23: #{remotenet_forward.6} parent=1 // pred_check_branch
      %53 = sbr.rel (0) target = $region25
    $region24: #{remotenet_forward.6} parent=1 // pred_region
      %54 = dma.done [#allocation5], 16
    $region25: #{remotenet_forward.6} parent=1 // pred_fallthru
      _
    // Predicated region
    $region26: #{remotenet_forward.6} parent=1 // pred_check
      _
    $region27: #{remotenet_forward.6} parent=1 // pred_check_branch
      %56 = sbr.rel (0) target = $region29
    $region28: #{remotenet_forward.6} parent=1 // pred_region
      %57 = dma.done [#allocation5], 1024
    $region29: #{remotenet_forward.6} parent=1 // pred_fallthru
      _
    %v59 = vld [vmem:[%s0] sm:$0xf]
    %v60 = vld [vmem:[%s0 + $0x4] sm:$0xf]
    %v61 = vld [vmem:[%s0 + $0x8] sm:$0xf]
    %v62 = vld [vmem:[%s0 + $0xc] sm:$0xf]
    %v63 = vld [vmem:[%s0 + $0x10] sm:$0xf]
    %v64 = vld [vmem:[%s0 + $0x14] sm:$0xf]
    %v65 = vld [vmem:[%s0 + $0x18] sm:$0xf]
    %v66 = vld [vmem:[%s0 + $0x1c] sm:$0xf]
    %v67 = vld [vmem:[%s0 + $0x20] sm:$0xf]
    %v68 = vld [vmem:[%s0 + $0x24] sm:$0xf]
    %v69 = vld [vmem:[%s0 + $0x28] sm:$0xf]
    %v70 = vld [vmem:[%s0 + $0x2c] sm:$0xf]
    %v71 = vld [vmem:[%s0 + $0x30] sm:$0xf]
    %v72 = vld [vmem:[%s0 + $0x34] sm:$0xf]
    %v73 = vld [vmem:[%s0 + $0x38] sm:$0xf]
    %v74 = vld [vmem:[%s0 + $0x3c] sm:$0xf]
    %v75 = vld [vmem:[#allocation2] sm:$0xf]
    %v76 = vld [vmem:[#allocation2 + $0x4] sm:$0xf]
    %v77 = vld [vmem:[#allocation2 + $0x8] sm:$0xf]
    %v78 = vld [vmem:[#allocation2 + $0xc] sm:$0xf]
    %v79 = vld [vmem:[#allocation2 + $0x10] sm:$0xf]
    %v80 = vld [vmem:[#allocation2 + $0x14] sm:$0xf]
    %v81 = vld [vmem:[#allocation2 + $0x18] sm:$0xf]
    %v82 = vld [vmem:[#allocation2 + $0x1c] sm:$0xf]
    %v83 = vld [vmem:[#allocation2 + $0x20] sm:$0xf]
    %v84 = vld [vmem:[#allocation2 + $0x24] sm:$0xf]
    %v85 = vld [vmem:[#allocation2 + $0x28] sm:$0xf]
    %v86 = vld [vmem:[#allocation2 + $0x2c] sm:$0xf]
    %v87 = vld [vmem:[#allocation2 + $0x30] sm:$0xf]
    %v88 = vld [vmem:[#allocation2 + $0x34] sm:$0xf]
    %v89 = vld [vmem:[#allocation2 + $0x38] sm:$0xf]
    %v90 = vld [vmem:[#allocation2 + $0x3c] sm:$0xf]
    %v91 = vld [vmem:[#allocation4] sm:$0x1]
    %v93 = vlaneseq
    %v94 = vshrl.u32 %v93, 7
    %v95 = vsub.s32 0, %v94
    %v96 = vrot.slane %v91, %v95
    %v114 = vunpack.c.l.b16 %v59
    %v115 = vunpack.c.l.b16 %v60
    %v116 = vunpack.c.l.b16 %v61
    %v117 = vunpack.c.l.b16 %v62
    %v118 = vunpack.c.l.b16 %v63
    %v119 = vunpack.c.l.b16 %v64
    %v120 = vunpack.c.l.b16 %v65
    %v121 = vunpack.c.l.b16 %v66
    %v122 = vunpack.c.l.b16 %v67
    %v123 = vunpack.c.l.b16 %v68
    %v124 = vunpack.c.l.b16 %v69
    %v125 = vunpack.c.l.b16 %v70
    %v126 = vunpack.c.l.b16 %v71
    %v127 = vunpack.c.l.b16 %v72
    %v128 = vunpack.c.l.b16 %v73
    %v129 = vunpack.c.l.b16 %v74
    %v130 = vpack.c.b16 %v115, %v114
    %v131 = vpack.c.b16 %v117, %v116
    %v132 = vpack.c.b16 %v119, %v118
    %v133 = vpack.c.b16 %v121, %v120
    %v134 = vpack.c.b16 %v123, %v122
    %v135 = vpack.c.b16 %v125, %v124
    %v136 = vpack.c.b16 %v127, %v126
    %v137 = vpack.c.b16 %v129, %v128
    %v162 = vunpack.c.l.b16 %v75
    %v163 = vunpack.c.l.b16 %v76
    %v164 = vunpack.c.l.b16 %v77
    %v165 = vunpack.c.l.b16 %v78
    %v166 = vunpack.c.l.b16 %v79
    %v167 = vunpack.c.l.b16 %v80
    %v168 = vunpack.c.l.b16 %v81
    %v169 = vunpack.c.l.b16 %v82
    %v170 = vunpack.c.l.b16 %v83
    %v171 = vunpack.c.l.b16 %v84
    %v172 = vunpack.c.l.b16 %v85
    %v173 = vunpack.c.l.b16 %v86
    %v174 = vunpack.c.l.b16 %v87
    %v175 = vunpack.c.l.b16 %v88
    %v176 = vunpack.c.l.b16 %v89
    %v177 = vunpack.c.l.b16 %v90
    %v178 = vpack.c.b16 %v163, %v162
    %v179 = vpack.c.b16 %v165, %v164
    %v180 = vpack.c.b16 %v167, %v166
    %v181 = vpack.c.b16 %v169, %v168
    %v182 = vpack.c.b16 %v171, %v170
    %v183 = vpack.c.b16 %v173, %v172
    %v184 = vpack.c.b16 %v175, %v174
    %v185 = vpack.c.b16 %v177, %v176
    %194 = vmatprep.subr.bf16.mxu0 0
    %195 = vmatpush1.bf16.msra.mxu0 %v178
    %196 = vmatprep.subr.bf16.mxu0 0
    %197 = vmatpush1.bf16.msra.mxu0 %v179
    %198 = vmatprep.subr.bf16.mxu0 0
    %199 = vmatpush1.bf16.msra.mxu0 %v180
    %200 = vmatprep.subr.bf16.mxu0 0
    %201 = vmatpush1.bf16.msra.mxu0 %v181
    %202 = vmatprep.subr.bf16.mxu0 0
    %203 = vmatpush1.bf16.msra.mxu0 %v182
    %204 = vmatprep.subr.bf16.mxu0 0
    %205 = vmatpush1.bf16.msra.mxu0 %v183
    %206 = vmatprep.subr.bf16.mxu0 0
    %207 = vmatpush1.bf16.msra.mxu0 %v184
    %208 = vmatprep.subr.bf16.mxu0 0
    %209 = vmatpush1.bf16.msra.mxu0 %v185
    %210 = vmatprep.subr.bf16.mxu0 0
    %211 = vmatpush1.bf16.msra.mxu0 0
    %212 = vmatprep.subr.bf16.mxu0 0
    %213 = vmatpush1.bf16.msra.mxu0 0
    %214 = vmatprep.subr.bf16.mxu0 0
    %215 = vmatpush1.bf16.msra.mxu0 0
    %216 = vmatprep.subr.bf16.mxu0 0
    %217 = vmatpush1.bf16.msra.mxu0 0
    %218 = vmatprep.subr.bf16.mxu0 0
    %219 = vmatpush1.bf16.msra.mxu0 0
    %220 = vmatprep.subr.bf16.mxu0 0
    %221 = vmatpush1.bf16.msra.mxu0 0
    %222 = vmatprep.subr.bf16.mxu0 0
    %223 = vmatpush1.bf16.msra.mxu0 0
    %224 = vmatprep.subr.bf16.mxu0 0
    %225 = vmatpush1.bf16.msra.mxu0 0
    %226 = vmatprep.mubr.bf16.mxu0 0
    %227 = vmatmul.mubr.bf16.gmra.mrb[0].mxu0 %v130
    %v228 = vpop.f32.mrb[0].mxu0
    %v229 = vadd.f32 %v96, %v228
    %v230 = vpop.f32.mrb[0].mxu0
    %v231 = vpop.f32.mrb[0].mxu0
    %v232 = vadd.f32 %v96, %v231
    %v233 = vpop.f32.mrb[0].mxu0
    %234 = vmatprep.mubr.bf16.mxu0 0
    %235 = vmatmul.mubr.bf16.gmra.mrb[0].mxu0 %v131
    %v236 = vpop.f32.mrb[0].mxu0
    %v237 = vadd.f32 %v96, %v236
    %v238 = vpop.f32.mrb[0].mxu0
    %v239 = vpop.f32.mrb[0].mxu0
    %v240 = vadd.f32 %v96, %v239
    %v241 = vpop.f32.mrb[0].mxu0
    %242 = vmatprep.mubr.bf16.mxu0 0
    %243 = vmatmul.mubr.bf16.gmra.mrb[0].mxu0 %v132
    %v244 = vpop.f32.mrb[0].mxu0
    %v245 = vadd.f32 %v96, %v244
    %v246 = vpop.f32.mrb[0].mxu0
    %v247 = vpop.f32.mrb[0].mxu0
    %v248 = vadd.f32 %v96, %v247
    %v249 = vpop.f32.mrb[0].mxu0
    %250 = vmatprep.mubr.bf16.mxu0 0
    %251 = vmatmul.mubr.bf16.gmra.mrb[0].mxu0 %v133
    %v252 = vpop.f32.mrb[0].mxu0
    %v253 = vadd.f32 %v96, %v252
    %v254 = vpop.f32.mrb[0].mxu0
    %v255 = vpop.f32.mrb[0].mxu0
    %v256 = vadd.f32 %v96, %v255
    %v257 = vpop.f32.mrb[0].mxu0
    %258 = vmatprep.mubr.bf16.mxu0 0
    %259 = vmatmul.mubr.bf16.gmra.mrb[0].mxu0 %v134
    %v260 = vpop.f32.mrb[0].mxu0
    %v261 = vadd.f32 %v96, %v260
    %v262 = vpop.f32.mrb[0].mxu0
    %v263 = vpop.f32.mrb[0].mxu0
    %v264 = vadd.f32 %v96, %v263
    %v265 = vpop.f32.mrb[0].mxu0
    %266 = vmatprep.mubr.bf16.mxu0 0
    %267 = vmatmul.mubr.bf16.gmra.mrb[0].mxu0 %v135
    %v268 = vpop.f32.mrb[0].mxu0
    %v269 = vadd.f32 %v96, %v268
    %v270 = vpop.f32.mrb[0].mxu0
    %v271 = vpop.f32.mrb[0].mxu0
    %v272 = vadd.f32 %v96, %v271
    %v273 = vpop.f32.mrb[0].mxu0
    %274 = vmatprep.mubr.bf16.mxu0 0
    %275 = vmatmul.mubr.bf16.gmra.mrb[0].mxu0 %v136
    %v276 = vpop.f32.mrb[0].mxu0
    %v277 = vadd.f32 %v96, %v276
    %v278 = vpop.f32.mrb[0].mxu0
    %v279 = vpop.f32.mrb[0].mxu0
    %v280 = vadd.f32 %v96, %v279
    %v281 = vpop.f32.mrb[0].mxu0
    %282 = vmatprep.mubr.bf16.mxu0 0
    %283 = vmatmul.mubr.bf16.gmra.mrb[0].mxu0 %v137
    %v284 = vpop.f32.mrb[0].mxu0
    %v285 = vadd.f32 %v96, %v284
    %v286 = vpop.f32.mrb[0].mxu0
    %v287 = vpop.f32.mrb[0].mxu0
    %v288 = vadd.f32 %v96, %v287
    %v289 = vpop.f32.mrb[0].mxu0
    %290 = vdwg.mxu0
    %v291 = vmax.f32 %v229, 0.0
    %v292 = vmax.f32 %v232, 0.0
    %v293 = vmax.f32 %v237, 0.0
    %v294 = vmax.f32 %v240, 0.0
    %v295 = vmax.f32 %v245, 0.0
    %v296 = vmax.f32 %v248, 0.0
    %v297 = vmax.f32 %v253, 0.0
    %v298 = vmax.f32 %v256, 0.0
    %v299 = vmax.f32 %v261, 0.0
    %v300 = vmax.f32 %v264, 0.0
    %v301 = vmax.f32 %v269, 0.0
    %v302 = vmax.f32 %v272, 0.0
    %v303 = vmax.f32 %v277, 0.0
    %v304 = vmax.f32 %v280, 0.0
    %v305 = vmax.f32 %v285, 0.0
    %v306 = vmax.f32 %v288, 0.0
    %v307 = vpack.c.bf16 %v292, %v291
    %v308 = vpack.c.bf16 %v294, %v293
    %v309 = vpack.c.bf16 %v296, %v295
    %v310 = vpack.c.bf16 %v298, %v297
    %v311 = vpack.c.bf16 %v300, %v299
    %v312 = vpack.c.bf16 %v302, %v301
    %v313 = vpack.c.bf16 %v304, %v303
    %v314 = vpack.c.bf16 %v306, %v305
    %v323 = vunpack.c.l.b16 %v307
    %v324 = vunpack.c.h.b16 %v307
    %v325 = vunpack.c.l.b16 %v308
    %v326 = vunpack.c.h.b16 %v308
    %v327 = vunpack.c.l.b16 %v309
    %v328 = vunpack.c.h.b16 %v309
    %v329 = vunpack.c.l.b16 %v310
    %v330 = vunpack.c.h.b16 %v310
    %v331 = vunpack.c.l.b16 %v311
    %v332 = vunpack.c.h.b16 %v311
    %v333 = vunpack.c.l.b16 %v312
    %v334 = vunpack.c.h.b16 %v312
    %v335 = vunpack.c.l.b16 %v313
    %v336 = vunpack.c.h.b16 %v313
    %v337 = vunpack.c.l.b16 %v314
    %v338 = vunpack.c.h.b16 %v314
    %v339 = vpack.c.b16 %v323, %v323
    %v340 = vpack.c.b16 %v324, %v324
    %v341 = vpack.c.b16 %v325, %v325
    %v342 = vpack.c.b16 %v326, %v326
    %v343 = vpack.c.b16 %v327, %v327
    %v344 = vpack.c.b16 %v328, %v328
    %v345 = vpack.c.b16 %v329, %v329
    %v346 = vpack.c.b16 %v330, %v330
    %v347 = vpack.c.b16 %v331, %v331
    %v348 = vpack.c.b16 %v332, %v332
    %v349 = vpack.c.b16 %v333, %v333
    %v350 = vpack.c.b16 %v334, %v334
    %v351 = vpack.c.b16 %v335, %v335
    %v352 = vpack.c.b16 %v336, %v336
    %v353 = vpack.c.b16 %v337, %v337
    %v354 = vpack.c.b16 %v338, %v338
    %371 = vst [vmem:[%s4] sm:$0xf] %v339
    %372 = vst [vmem:[%s4 + $0x4] sm:$0xf] %v340
    %373 = vst [vmem:[%s4 + $0x8] sm:$0xf] %v341
    %374 = vst [vmem:[%s4 + $0xc] sm:$0xf] %v342
    %375 = vst [vmem:[%s4 + $0x10] sm:$0xf] %v343
    %376 = vst [vmem:[%s4 + $0x14] sm:$0xf] %v344
    %377 = vst [vmem:[%s4 + $0x18] sm:$0xf] %v345
    %378 = vst [vmem:[%s4 + $0x1c] sm:$0xf] %v346
    %379 = vst [vmem:[%s4 + $0x20] sm:$0xf] %v347
    %380 = vst [vmem:[%s4 + $0x24] sm:$0xf] %v348
    %381 = vst [vmem:[%s4 + $0x28] sm:$0xf] %v349
    %382 = vst [vmem:[%s4 + $0x2c] sm:$0xf] %v350
    %383 = vst [vmem:[%s4 + $0x30] sm:$0xf] %v351
    %384 = vst [vmem:[%s4 + $0x34] sm:$0xf] %v352
    %385 = vst [vmem:[%s4 + $0x38] sm:$0xf] %v353
    %386 = vst [vmem:[%s4 + $0x3c] sm:$0xf] %v354
    %v387 = vld [vmem:[#allocation6] sm:$0xf]
    %v388 = vld [vmem:[#allocation6 + $0x4] sm:$0xf]
    %v389 = vld [vmem:[#allocation6 + $0x8] sm:$0xf]
    %v390 = vld [vmem:[#allocation6 + $0xc] sm:$0xf]
    %v391 = vld [vmem:[#allocation6 + $0x10] sm:$0xf]
    %v392 = vld [vmem:[#allocation6 + $0x14] sm:$0xf]
    %v393 = vld [vmem:[#allocation6 + $0x18] sm:$0xf]
    %v394 = vld [vmem:[#allocation6 + $0x1c] sm:$0xf]
    %v395 = vld [vmem:[#allocation6 + $0x20] sm:$0xf]
    %v396 = vld [vmem:[#allocation6 + $0x24] sm:$0xf]
    %v397 = vld [vmem:[#allocation6 + $0x28] sm:$0xf]
    %v398 = vld [vmem:[#allocation6 + $0x2c] sm:$0xf]
    %v399 = vld [vmem:[#allocation6 + $0x30] sm:$0xf]
    %v400 = vld [vmem:[#allocation6 + $0x34] sm:$0xf]
    %v401 = vld [vmem:[#allocation6 + $0x38] sm:$0xf]
    %v402 = vld [vmem:[#allocation6 + $0x3c] sm:$0xf]
    %v419 = vunpack.c.l.b16 %v387
    %v420 = vunpack.c.l.b16 %v388
    %v421 = vunpack.c.l.b16 %v389
    %v422 = vunpack.c.l.b16 %v390
    %v423 = vunpack.c.l.b16 %v391
    %v424 = vunpack.c.l.b16 %v392
    %v425 = vunpack.c.l.b16 %v393
    %v426 = vunpack.c.l.b16 %v394
    %v427 = vunpack.c.l.b16 %v395
    %v428 = vunpack.c.l.b16 %v396
    %v429 = vunpack.c.l.b16 %v397
    %v430 = vunpack.c.l.b16 %v398
    %v431 = vunpack.c.l.b16 %v399
    %v432 = vunpack.c.l.b16 %v400
    %v433 = vunpack.c.l.b16 %v401
    %v434 = vunpack.c.l.b16 %v402
    %v435 = vpack.c.b16 %v420, %v419
    %v436 = vpack.c.b16 %v422, %v421
    %v437 = vpack.c.b16 %v424, %v423
    %v438 = vpack.c.b16 %v426, %v425
    %v439 = vpack.c.b16 %v428, %v427
    %v440 = vpack.c.b16 %v430, %v429
    %v441 = vpack.c.b16 %v432, %v431
    %v442 = vpack.c.b16 %v434, %v433
    %451 = vmatprep.subr.bf16.mxu0 0
    %452 = vmatpush1.bf16.msra.mxu0 %v435
    %453 = vmatprep.subr.bf16.mxu0 0
    %454 = vmatpush1.bf16.msra.mxu0 %v436
    %455 = vmatprep.subr.bf16.mxu0 0
    %456 = vmatpush1.bf16.msra.mxu0 %v437
    %457 = vmatprep.subr.bf16.mxu0 0
    %458 = vmatpush1.bf16.msra.mxu0 %v438
    %459 = vmatprep.subr.bf16.mxu0 0
    %460 = vmatpush1.bf16.msra.mxu0 %v439
    %461 = vmatprep.subr.bf16.mxu0 0
    %462 = vmatpush1.bf16.msra.mxu0 %v440
    %463 = vmatprep.subr.bf16.mxu0 0
    %464 = vmatpush1.bf16.msra.mxu0 %v441
    %465 = vmatprep.subr.bf16.mxu0 0
    %466 = vmatpush1.bf16.msra.mxu0 %v442
    %467 = vmatprep.subr.bf16.mxu0 0
    %468 = vmatpush1.bf16.msra.mxu0 0
    %469 = vmatprep.subr.bf16.mxu0 0
    %470 = vmatpush1.bf16.msra.mxu0 0
    %471 = vmatprep.subr.bf16.mxu0 0
    %472 = vmatpush1.bf16.msra.mxu0 0
    %473 = vmatprep.subr.bf16.mxu0 0
    %474 = vmatpush1.bf16.msra.mxu0 0
    %475 = vmatprep.subr.bf16.mxu0 0
    %476 = vmatpush1.bf16.msra.mxu0 0
    %477 = vmatprep.subr.bf16.mxu0 0
    %478 = vmatpush1.bf16.msra.mxu0 0
    %479 = vmatprep.subr.bf16.mxu0 0
    %480 = vmatpush1.bf16.msra.mxu0 0
    %481 = vmatprep.subr.bf16.mxu0 0
    %482 = vmatpush1.bf16.msra.mxu0 0
    %483 = vmatprep.mubr.bf16.mxu0 0
    %484 = vmatmul.mubr.bf16.gmra.mrb[0].mxu0 %v307
    %v485 = vpop.f32.mrb[0].mxu0
    %v486 = vadd.f32 0.0, %v485
    %v487 = vpop.f32.mrb[0].mxu0
    %v488 = vpop.f32.mrb[0].mxu0
    %v489 = vadd.f32 0.0, %v488
    %v490 = vpop.f32.mrb[0].mxu0
    %491 = vmatprep.mubr.bf16.mxu0 0
    %492 = vmatmul.mubr.bf16.gmra.mrb[0].mxu0 %v308
    %v493 = vpop.f32.mrb[0].mxu0
    %v494 = vadd.f32 0.0, %v493
    %v495 = vpop.f32.mrb[0].mxu0
    %v496 = vpop.f32.mrb[0].mxu0
    %v497 = vadd.f32 0.0, %v496
    %v498 = vpop.f32.mrb[0].mxu0
    %499 = vmatprep.mubr.bf16.mxu0 0
    %500 = vmatmul.mubr.bf16.gmra.mrb[0].mxu0 %v309
    %v501 = vpop.f32.mrb[0].mxu0
    %v502 = vadd.f32 0.0, %v501
    %v503 = vpop.f32.mrb[0].mxu0
    %v504 = vpop.f32.mrb[0].mxu0
    %v505 = vadd.f32 0.0, %v504
    %v506 = vpop.f32.mrb[0].mxu0
    %507 = vmatprep.mubr.bf16.mxu0 0
    %508 = vmatmul.mubr.bf16.gmra.mrb[0].mxu0 %v310
    %v509 = vpop.f32.mrb[0].mxu0
    %v510 = vadd.f32 0.0, %v509
    %v511 = vpop.f32.mrb[0].mxu0
    %v512 = vpop.f32.mrb[0].mxu0
    %v513 = vadd.f32 0.0, %v512
    %v514 = vpop.f32.mrb[0].mxu0
    %515 = vmatprep.mubr.bf16.mxu0 0
    %516 = vmatmul.mubr.bf16.gmra.mrb[0].mxu0 %v311
    %v517 = vpop.f32.mrb[0].mxu0
    %v518 = vadd.f32 0.0, %v517
    %v519 = vpop.f32.mrb[0].mxu0
    %v520 = vpop.f32.mrb[0].mxu0
    %v521 = vadd.f32 0.0, %v520
    %v522 = vpop.f32.mrb[0].mxu0
    %523 = vmatprep.mubr.bf16.mxu0 0
    %524 = vmatmul.mubr.bf16.gmra.mrb[0].mxu0 %v312
    %v525 = vpop.f32.mrb[0].mxu0
    %v526 = vadd.f32 0.0, %v525
    %v527 = vpop.f32.mrb[0].mxu0
    %v528 = vpop.f32.mrb[0].mxu0
    %v529 = vadd.f32 0.0, %v528
    %v530 = vpop.f32.mrb[0].mxu0
    %531 = vmatprep.mubr.bf16.mxu0 0
    %532 = vmatmul.mubr.bf16.gmra.mrb[0].mxu0 %v313
    %v533 = vpop.f32.mrb[0].mxu0
    %v534 = vadd.f32 0.0, %v533
    %v535 = vpop.f32.mrb[0].mxu0
    %v536 = vpop.f32.mrb[0].mxu0
    %v537 = vadd.f32 0.0, %v536
    %v538 = vpop.f32.mrb[0].mxu0
    %539 = vmatprep.mubr.bf16.mxu0 0
    %540 = vmatmul.mubr.bf16.gmra.mrb[0].mxu0 %v314
    %v541 = vpop.f32.mrb[0].mxu0
    %v542 = vadd.f32 0.0, %v541
    %v543 = vpop.f32.mrb[0].mxu0
    %v544 = vpop.f32.mrb[0].mxu0
    %v545 = vadd.f32 0.0, %v544
    %v546 = vpop.f32.mrb[0].mxu0
    %547 = vdwg.mxu0
    %v548 = vpack.c.bf16 %v489, %v486
    %v549 = vpack.c.bf16 %v497, %v494
    %v550 = vpack.c.bf16 %v505, %v502
    %v551 = vpack.c.bf16 %v513, %v510
    %v552 = vpack.c.bf16 %v521, %v518
    %v553 = vpack.c.bf16 %v529, %v526
    %v554 = vpack.c.bf16 %v537, %v534
    %v555 = vpack.c.bf16 %v545, %v542
    %v564 = vunpack.c.l.b16 %v548
    %v565 = vunpack.c.h.b16 %v548
    %v566 = vunpack.c.l.b16 %v549
    %v567 = vunpack.c.h.b16 %v549
    %v568 = vunpack.c.l.b16 %v550
    %v569 = vunpack.c.h.b16 %v550
    %v570 = vunpack.c.l.b16 %v551
    %v571 = vunpack.c.h.b16 %v551
    %v572 = vunpack.c.l.b16 %v552
    %v573 = vunpack.c.h.b16 %v552
    %v574 = vunpack.c.l.b16 %v553
    %v575 = vunpack.c.h.b16 %v553
    %v576 = vunpack.c.l.b16 %v554
    %v577 = vunpack.c.h.b16 %v554
    %v578 = vunpack.c.l.b16 %v555
    %v579 = vunpack.c.h.b16 %v555
    %v580 = vpack.c.b16 %v564, %v564
    %v581 = vpack.c.b16 %v565, %v565
    %v582 = vpack.c.b16 %v566, %v566
    %v583 = vpack.c.b16 %v567, %v567
    %v584 = vpack.c.b16 %v568, %v568
    %v585 = vpack.c.b16 %v569, %v569
    %v586 = vpack.c.b16 %v570, %v570
    %v587 = vpack.c.b16 %v571, %v571
    %v588 = vpack.c.b16 %v572, %v572
    %v589 = vpack.c.b16 %v573, %v573
    %v590 = vpack.c.b16 %v574, %v574
    %v591 = vpack.c.b16 %v575, %v575
    %v592 = vpack.c.b16 %v576, %v576
    %v593 = vpack.c.b16 %v577, %v577
    %v594 = vpack.c.b16 %v578, %v578
    %v595 = vpack.c.b16 %v579, %v579
    %612 = vst [vmem:[%s5] sm:$0xf] %v580
    %613 = vst [vmem:[%s5 + $0x4] sm:$0xf] %v581
    %614 = vst [vmem:[%s5 + $0x8] sm:$0xf] %v582
    %615 = vst [vmem:[%s5 + $0xc] sm:$0xf] %v583
    %616 = vst [vmem:[%s5 + $0x10] sm:$0xf] %v584
    %617 = vst [vmem:[%s5 + $0x14] sm:$0xf] %v585
    %618 = vst [vmem:[%s5 + $0x18] sm:$0xf] %v586
    %619 = vst [vmem:[%s5 + $0x1c] sm:$0xf] %v587
    %620 = vst [vmem:[%s5 + $0x20] sm:$0xf] %v588
    %621 = vst [vmem:[%s5 + $0x24] sm:$0xf] %v589
    %622 = vst [vmem:[%s5 + $0x28] sm:$0xf] %v590
    %623 = vst [vmem:[%s5 + $0x2c] sm:$0xf] %v591
    %624 = vst [vmem:[%s5 + $0x30] sm:$0xf] %v592
    %625 = vst [vmem:[%s5 + $0x34] sm:$0xf] %v593
    %626 = vst [vmem:[%s5 + $0x38] sm:$0xf] %v594
    %627 = vst [vmem:[%s5 + $0x3c] sm:$0xf] %v595
    // Predicated region
    $region30: #{remotenet_forward.6} parent=1 // pred_check
      _
    $region31: #{remotenet_forward.6} parent=1 // pred_check_branch
      %629 = sbr.rel (0) target = $region33
    $region32: #{remotenet_forward.6} parent=1 // pred_region
      _
    $region33: #{remotenet_forward.6} parent=1 // pred_fallthru
      _
    // Predicated region
    $region34: #{remotenet_forward.6} parent=1 // pred_check
      _
    $region35: #{remotenet_forward.6} parent=1 // pred_check_branch
      %631 = sbr.rel (0) target = $region37
    $region36: #{remotenet_forward.6} parent=1 // pred_region
      _
    $region37: #{remotenet_forward.6} parent=1 // pred_fallthru
      _
    // Predicated region
    $region38: #{remotenet_forward.6} parent=1 // pred_check
      _
    $region39: #{remotenet_forward.6} parent=1 // pred_check_branch
      %633 = sbr.rel (0) target = $region41
    $region40: #{remotenet_forward.6} parent=1 // pred_region
      _
    $region41: #{remotenet_forward.6} parent=1 // pred_fallthru
      _
    // Predicated region
    $region42: #{remotenet_forward.6} parent=1 // pred_check
      _
    $region43: #{remotenet_forward.6} parent=1 // pred_check_branch
      %635 = sbr.rel (0) target = $region45
    $region44: #{remotenet_forward.6} parent=1 // pred_region
      _
    $region45: #{remotenet_forward.6} parent=1 // pred_fallthru
      _
    %636 = vsyncpa [#allocation3], 1
    %637 = vsyncpa [#allocation5], 1

// kernel: remotenet_forward.7
$region0: #{remotenet_forward.7}
  #allocation0 [shape = 'u32[]', space=smem, size = 0x4, offset = 0x4, fixed_abs, tag = 'smem constant byte address 0x4 - core index']
  #allocation1 [shape = 'u32[144,128]{1,0:T(1,128)}', space=vmem, size = 0x12000, scoped, tag = 'internal scratch']
  %s0 = inlined_call_operand.vmem [shape: bf16[32,256], index: 0, kind: input, shape index: {}]
  %s1 = inlined_call_operand.hbm [shape: bf16[256,256], index: 1, kind: input, shape index: {}]
  %s2 = inlined_call_operand.hbm [shape: f32[1,256], index: 2, kind: input, shape index: {}]
  %s3 = inlined_call_operand.hbm [shape: bf16[256,128], index: 3, kind: input, shape index: {}]
  %s4 = inlined_call_operand.vmem [shape: bf16[32,256], index: 4, kind: output, shape index: {0}]
  %s5 = inlined_call_operand.vmem [shape: bf16[32,128], index: 5, kind: output, shape index: {1}]
  %6 = xla_tuple %s4, %s5
  %s7 = sld [smem:[#allocation0]]
  $region46: #{remotenet_forward.7} parent=0
    _
  %s9 = ssub.s32 1, %s7
  %s10 = scalar_select 0, %s9, %s7
  $region1: #{remotenet_forward.7} parent=0
    #allocation2 [shape = 'u8[131072]{0}', space=vmem, size = 0x20000, scoped, tag = 'input window, operand 1, single buffered']
    #allocation3 [shape = 's32[1]{0}', space=sflag, size = 0x4, scoped, tag = 'scoped memory for remotenet_forward.7']
    #allocation4 [shape = 'u8[1024]{0}', space=vmem, size = 0x400, scoped, tag = 'input window, operand 2, single buffered']
    #allocation5 [shape = 's32[1]{0}', space=sflag, size = 0x4, scoped, tag = 'scoped memory for remotenet_forward.7']
    #allocation6 [shape = 'u8[65536]{0}', space=vmem, size = 0x10000, scoped, tag = 'input window, operand 3, single buffered']
    %11 = vsyncpa [#allocation3], 0
    %12 = vsyncpa [#allocation5], 0
    // Predicated region
    $region2: #{remotenet_forward.7} parent=1 // pred_check
      _
    $region3: #{remotenet_forward.7} parent=1 // pred_check_branch
      %14 = sbr.rel (0) target = $region5
    $region4: #{remotenet_forward.7} parent=1 // pred_region
      _
    $region5: #{remotenet_forward.7} parent=1 // pred_fallthru
      _
    // Predicated region
    $region6: #{remotenet_forward.7} parent=1 // pred_check
      _
    $region7: #{remotenet_forward.7} parent=1 // pred_check_branch
      %16 = sbr.rel (0) target = $region9
    $region8: #{remotenet_forward.7} parent=1 // pred_region
      %s18 = ssub.s32 4096, 4096
      %19 = vsyncadd [#allocation3], %s18
      %s20 = sshll.u32 [#allocation2], 4
      %s21 = int_to_ptr.vmem [resolvable:$true] %s20
      %26 = dma.hbm_to_vmem [thread:$0]  %s1, 4096, %s21, [#allocation3], 128, 128, 8
    $region9: #{remotenet_forward.7} parent=1 // pred_fallthru
      _
    // Predicated region
    $region10: #{remotenet_forward.7} parent=1 // pred_check
      _
    $region11: #{remotenet_forward.7} parent=1 // pred_check_branch
      %28 = sbr.rel (0) target = $region13
    $region12: #{remotenet_forward.7} parent=1 // pred_region
      %s30 = ssub.s32 32, 32
      %31 = vsyncadd [#allocation5], %s30
      %s33 = sshll.u32 [#allocation4], 4
      %s34 = int_to_ptr.vmem [resolvable:$true] %s33
      %36 = dma.hbm_to_vmem [thread:$0]  %s2, 32, %s34, [#allocation5]
    $region13: #{remotenet_forward.7} parent=1 // pred_fallthru
      _
    // Predicated region
    $region14: #{remotenet_forward.7} parent=1 // pred_check
      _
    $region15: #{remotenet_forward.7} parent=1 // pred_check_branch
      %38 = sbr.rel (0) target = $region17
    $region16: #{remotenet_forward.7} parent=1 // pred_region
      %s40 = ssub.s32 2048, 2048
      %41 = vsyncadd [#allocation5], %s40
      %s42 = sshll.u32 [#allocation6], 4
      %s43 = int_to_ptr.vmem [resolvable:$true] %s42
      %48 = dma.hbm_to_vmem [thread:$0]  %s3, 2048, %s43, [#allocation5], 64, 64, 4
    $region17: #{remotenet_forward.7} parent=1 // pred_fallthru
      _
    // Predicated region
    $region18: #{remotenet_forward.7} parent=1 // pred_check
      _
    $region19: #{remotenet_forward.7} parent=1 // pred_check_branch
      %50 = sbr.rel (0) target = $region21
    $region20: #{remotenet_forward.7} parent=1 // pred_region
      %51 = dma.done [#allocation3], 4096
    $region21: #{remotenet_forward.7} parent=1 // pred_fallthru
      _
    // Predicated region
    $region22: #{remotenet_forward.7} parent=1 // pred_check
      _
    $region23: #{remotenet_forward.7} parent=1 // pred_check_branch
      %53 = sbr.rel (0) target = $region25
    $region24: #{remotenet_forward.7} parent=1 // pred_region
      %54 = dma.done [#allocation5], 32
    $region25: #{remotenet_forward.7} parent=1 // pred_fallthru
      _
    // Predicated region
    $region26: #{remotenet_forward.7} parent=1 // pred_check
      _
    $region27: #{remotenet_forward.7} parent=1 // pred_check_branch
      %56 = sbr.rel (0) target = $region29
    $region28: #{remotenet_forward.7} parent=1 // pred_region
      %57 = dma.done [#allocation5], 2048
    $region29: #{remotenet_forward.7} parent=1 // pred_fallthru
      _
    %v59 = vld [vmem:[%s0] sm:$0xff]
    %v60 = vld [vmem:[%s0 + $0x8] sm:$0xff]
    %v61 = vld [vmem:[%s0 + $0x10] sm:$0xff]
    %v62 = vld [vmem:[%s0 + $0x18] sm:$0xff]
    %v63 = vld [vmem:[#allocation2] sm:$0xff]
    %v64 = vld [vmem:[#allocation2 + $0x8] sm:$0xff]
    %v65 = vld [vmem:[#allocation2 + $0x10] sm:$0xff]
    %v66 = vld [vmem:[#allocation2 + $0x18] sm:$0xff]
    %v67 = vld [vmem:[#allocation2 + $0x20] sm:$0xff]
    %v68 = vld [vmem:[#allocation2 + $0x28] sm:$0xff]
    %v69 = vld [vmem:[#allocation2 + $0x30] sm:$0xff]
    %v70 = vld [vmem:[#allocation2 + $0x38] sm:$0xff]
    %v71 = vld [vmem:[#allocation2 + $0x40] sm:$0xff]
    %v72 = vld [vmem:[#allocation2 + $0x48] sm:$0xff]
    %v73 = vld [vmem:[#allocation2 + $0x50] sm:$0xff]
    %v74 = vld [vmem:[#allocation2 + $0x58] sm:$0xff]
    %v75 = vld [vmem:[#allocation2 + $0x60] sm:$0xff]
    %v76 = vld [vmem:[#allocation2 + $0x68] sm:$0xff]
    %v77 = vld [vmem:[#allocation2 + $0x70] sm:$0xff]
    %v78 = vld [vmem:[#allocation2 + $0x78] sm:$0xff]
    %v79 = vld [vmem:[#allocation2 + $0x80] sm:$0xff]
    %v80 = vld [vmem:[#allocation2 + $0x88] sm:$0xff]
    %v81 = vld [vmem:[#allocation2 + $0x90] sm:$0xff]
    %v82 = vld [vmem:[#allocation2 + $0x98] sm:$0xff]
    %v83 = vld [vmem:[#allocation2 + $0xa0] sm:$0xff]
    %v84 = vld [vmem:[#allocation2 + $0xa8] sm:$0xff]
    %v85 = vld [vmem:[#allocation2 + $0xb0] sm:$0xff]
    %v86 = vld [vmem:[#allocation2 + $0xb8] sm:$0xff]
    %v87 = vld [vmem:[#allocation2 + $0xc0] sm:$0xff]
    %v88 = vld [vmem:[#allocation2 + $0xc8] sm:$0xff]
    %v89 = vld [vmem:[#allocation2 + $0xd0] sm:$0xff]
    %v90 = vld [vmem:[#allocation2 + $0xd8] sm:$0xff]
    %v91 = vld [vmem:[#allocation2 + $0xe0] sm:$0xff]
    %v92 = vld [vmem:[#allocation2 + $0xe8] sm:$0xff]
    %v93 = vld [vmem:[#allocation2 + $0xf0] sm:$0xff]
    %v94 = vld [vmem:[#allocation2 + $0xf8] sm:$0xff]
    %v95 = vld [vmem:[#allocation4] sm:$0x3]
    %v97 = vlaneseq
    %v98 = vshrl.u32 %v97, 7
    %v99 = vsub.s32 0, %v98
    %v100 = vrot.slane %v95, %v99
    %v101 = vlaneseq
    %v102 = vshrl.u32 %v101, 7
    %v103 = vsub.s32 1, %v102
    %v104 = vrot.slane %v95, %v103
    %v111 = vunpack.c.l.b16 %v59
    %v112 = vunpack.c.h.b16 %v59
    %v113 = vunpack.c.l.b16 %v60
    %v114 = vunpack.c.h.b16 %v60
    %v115 = vunpack.c.l.b16 %v61
    %v116 = vunpack.c.h.b16 %v61
    %v117 = vunpack.c.l.b16 %v62
    %v118 = vunpack.c.h.b16 %v62
    %v119 = vpack.c.b16 %v113, %v111
    %v120 = vpack.c.b16 %v114, %v112
    %v121 = vpack.c.b16 %v117, %v115
    %v122 = vpack.c.b16 %v118, %v116
    %v159 = vunpack.c.l.b16 %v63
    %v160 = vunpack.c.h.b16 %v63
    %v161 = vunpack.c.l.b16 %v64
    %v162 = vunpack.c.h.b16 %v64
    %v163 = vunpack.c.l.b16 %v65
    %v164 = vunpack.c.h.b16 %v65
    %v165 = vunpack.c.l.b16 %v66
    %v166 = vunpack.c.h.b16 %v66
    %v167 = vunpack.c.l.b16 %v67
    %v168 = vunpack.c.h.b16 %v67
    %v169 = vunpack.c.l.b16 %v68
    %v170 = vunpack.c.h.b16 %v68
    %v171 = vunpack.c.l.b16 %v69
    %v172 = vunpack.c.h.b16 %v69
    %v173 = vunpack.c.l.b16 %v70
    %v174 = vunpack.c.h.b16 %v70
    %v175 = vunpack.c.l.b16 %v71
    %v176 = vunpack.c.h.b16 %v71
    %v177 = vunpack.c.l.b16 %v72
    %v178 = vunpack.c.h.b16 %v72
    %v179 = vunpack.c.l.b16 %v73
    %v180 = vunpack.c.h.b16 %v73
    %v181 = vunpack.c.l.b16 %v74
    %v182 = vunpack.c.h.b16 %v74
    %v183 = vunpack.c.l.b16 %v75
    %v184 = vunpack.c.h.b16 %v75
    %v185 = vunpack.c.l.b16 %v76
    %v186 = vunpack.c.h.b16 %v76
    %v187 = vunpack.c.l.b16 %v77
    %v188 = vunpack.c.h.b16 %v77
    %v189 = vunpack.c.l.b16 %v78
    %v190 = vunpack.c.h.b16 %v78
    %v191 = vunpack.c.l.b16 %v79
    %v192 = vunpack.c.h.b16 %v79
    %v193 = vunpack.c.l.b16 %v80
    %v194 = vunpack.c.h.b16 %v80
    %v195 = vunpack.c.l.b16 %v81
    %v196 = vunpack.c.h.b16 %v81
    %v197 = vunpack.c.l.b16 %v82
    %v198 = vunpack.c.h.b16 %v82
    %v199 = vunpack.c.l.b16 %v83
    %v200 = vunpack.c.h.b16 %v83
    %v201 = vunpack.c.l.b16 %v84
    %v202 = vunpack.c.h.b16 %v84
    %v203 = vunpack.c.l.b16 %v85
    %v204 = vunpack.c.h.b16 %v85
    %v205 = vunpack.c.l.b16 %v86
    %v206 = vunpack.c.h.b16 %v86
    %v207 = vunpack.c.l.b16 %v87
    %v208 = vunpack.c.h.b16 %v87
    %v209 = vunpack.c.l.b16 %v88
    %v210 = vunpack.c.h.b16 %v88
    %v211 = vunpack.c.l.b16 %v89
    %v212 = vunpack.c.h.b16 %v89
    %v213 = vunpack.c.l.b16 %v90
    %v214 = vunpack.c.h.b16 %v90
    %v215 = vunpack.c.l.b16 %v91
    %v216 = vunpack.c.h.b16 %v91
    %v217 = vunpack.c.l.b16 %v92
    %v218 = vunpack.c.h.b16 %v92
    %v219 = vunpack.c.l.b16 %v93
    %v220 = vunpack.c.h.b16 %v93
    %v221 = vunpack.c.l.b16 %v94
    %v222 = vunpack.c.h.b16 %v94
    %v223 = vpack.c.b16 %v161, %v159
    %v224 = vpack.c.b16 %v162, %v160
    %v225 = vpack.c.b16 %v165, %v163
    %v226 = vpack.c.b16 %v166, %v164
    %v227 = vpack.c.b16 %v169, %v167
    %v228 = vpack.c.b16 %v170, %v168
    %v229 = vpack.c.b16 %v173, %v171
    %v230 = vpack.c.b16 %v174, %v172
    %v231 = vpack.c.b16 %v177, %v175
    %v232 = vpack.c.b16 %v178, %v176
    %v233 = vpack.c.b16 %v181, %v179
    %v234 = vpack.c.b16 %v182, %v180
    %v235 = vpack.c.b16 %v185, %v183
    %v236 = vpack.c.b16 %v186, %v184
    %v237 = vpack.c.b16 %v189, %v187
    %v238 = vpack.c.b16 %v190, %v188
    %v239 = vpack.c.b16 %v193, %v191
    %v240 = vpack.c.b16 %v194, %v192
    %v241 = vpack.c.b16 %v197, %v195
    %v242 = vpack.c.b16 %v198, %v196
    %v243 = vpack.c.b16 %v201, %v199
    %v244 = vpack.c.b16 %v202, %v200
    %v245 = vpack.c.b16 %v205, %v203
    %v246 = vpack.c.b16 %v206, %v204
    %v247 = vpack.c.b16 %v209, %v207
    %v248 = vpack.c.b16 %v210, %v208
    %v249 = vpack.c.b16 %v213, %v211
    %v250 = vpack.c.b16 %v214, %v212
    %v251 = vpack.c.b16 %v217, %v215
    %v252 = vpack.c.b16 %v218, %v216
    %v253 = vpack.c.b16 %v221, %v219
    %v254 = vpack.c.b16 %v222, %v220
    %287 = vmatprep.subr.bf16.mxu0 %v224
    %288 = vmatpush1.bf16.msra.mxu0 %v223
    %289 = vmatprep.subr.bf16.mxu0 %v226
    %290 = vmatpush1.bf16.msra.mxu0 %v225
    %291 = vmatprep.subr.bf16.mxu0 %v228
    %292 = vmatpush1.bf16.msra.mxu0 %v227
    %293 = vmatprep.subr.bf16.mxu0 %v230
    %294 = vmatpush1.bf16.msra.mxu0 %v229
    %295 = vmatprep.subr.bf16.mxu0 %v232
    %296 = vmatpush1.bf16.msra.mxu0 %v231
    %297 = vmatprep.subr.bf16.mxu0 %v234
    %298 = vmatpush1.bf16.msra.mxu0 %v233
    %299 = vmatprep.subr.bf16.mxu0 %v236
    %300 = vmatpush1.bf16.msra.mxu0 %v235
    %301 = vmatprep.subr.bf16.mxu0 %v238
    %302 = vmatpush1.bf16.msra.mxu0 %v237
    %303 = vmatprep.subr.bf16.mxu0 %v240
    %304 = vmatpush1.bf16.msra.mxu0 %v239
    %305 = vmatprep.subr.bf16.mxu0 %v242
    %306 = vmatpush1.bf16.msra.mxu0 %v241
    %307 = vmatprep.subr.bf16.mxu0 %v244
    %308 = vmatpush1.bf16.msra.mxu0 %v243
    %309 = vmatprep.subr.bf16.mxu0 %v246
    %310 = vmatpush1.bf16.msra.mxu0 %v245
    %311 = vmatprep.subr.bf16.mxu0 %v248
    %312 = vmatpush1.bf16.msra.mxu0 %v247
    %313 = vmatprep.subr.bf16.mxu0 %v250
    %314 = vmatpush1.bf16.msra.mxu0 %v249
    %315 = vmatprep.subr.bf16.mxu0 %v252
    %316 = vmatpush1.bf16.msra.mxu0 %v251
    %317 = vmatprep.subr.bf16.mxu0 %v254
    %318 = vmatpush1.bf16.msra.mxu0 %v253
    %319 = vmatprep.mubr.bf16.mxu0 %v120
    %320 = vmatmul.mubr.bf16.gmra.mrb[0].mxu0 %v119
    %v321 = vpop.f32.mrb[0].mxu0
    %v322 = vadd.f32 %v100, %v321
    %v323 = vpop.f32.mrb[0].mxu0
    %v324 = vadd.f32 %v104, %v323
    %v325 = vpop.f32.mrb[0].mxu0
    %v326 = vadd.f32 %v100, %v325
    %v327 = vpop.f32.mrb[0].mxu0
    %v328 = vadd.f32 %v104, %v327
    %329 = vmatprep.mubr.bf16.mxu0 %v122
    %330 = vmatmul.mubr.bf16.gmra.mrb[0].mxu0 %v121
    %v331 = vpop.f32.mrb[0].mxu0
    %v332 = vadd.f32 %v100, %v331
    %v333 = vpop.f32.mrb[0].mxu0
    %v334 = vadd.f32 %v104, %v333
    %v335 = vpop.f32.mrb[0].mxu0
    %v336 = vadd.f32 %v100, %v335
    %v337 = vpop.f32.mrb[0].mxu0
    %v338 = vadd.f32 %v104, %v337
    %339 = vdwg.mxu0
    %v340 = vmax.f32 %v322, 0.0
    %v341 = vmax.f32 %v324, 0.0
    %v342 = vmax.f32 %v326, 0.0
    %v343 = vmax.f32 %v328, 0.0
    %v344 = vmax.f32 %v332, 0.0
    %v345 = vmax.f32 %v334, 0.0
    %v346 = vmax.f32 %v336, 0.0
    %v347 = vmax.f32 %v338, 0.0
    %v348 = vpack.c.bf16 %v342, %v340
    %v349 = vpack.c.bf16 %v343, %v341
    %v350 = vpack.c.bf16 %v346, %v344
    %v351 = vpack.c.bf16 %v347, %v345
    %v356 = vunpack.c.l.b16 %v348
    %v357 = vunpack.c.l.b16 %v349
    %v358 = vunpack.c.h.b16 %v348
    %v359 = vunpack.c.h.b16 %v349
    %v360 = vunpack.c.l.b16 %v350
    %v361 = vunpack.c.l.b16 %v351
    %v362 = vunpack.c.h.b16 %v350
    %v363 = vunpack.c.h.b16 %v351
    %v364 = vpack.c.b16 %v357, %v356
    %v365 = vpack.c.b16 %v359, %v358
    %v366 = vpack.c.b16 %v361, %v360
    %v367 = vpack.c.b16 %v363, %v362
    %372 = vst [vmem:[%s4] sm:$0xff] %v364
    %373 = vst [vmem:[%s4 + $0x8] sm:$0xff] %v365
    %374 = vst [vmem:[%s4 + $0x10] sm:$0xff] %v366
    %375 = vst [vmem:[%s4 + $0x18] sm:$0xff] %v367
    %v376 = vld [vmem:[#allocation6] sm:$0xf]
    %v377 = vld [vmem:[#allocation6 + $0x4] sm:$0xf]
    %v378 = vld [vmem:[#allocation6 + $0x8] sm:$0xf]
    %v379 = vld [vmem:[#allocation6 + $0xc] sm:$0xf]
    %v380 = vld [vmem:[#allocation6 + $0x10] sm:$0xf]
    %v381 = vld [vmem:[#allocation6 + $0x14] sm:$0xf]
    %v382 = vld [vmem:[#allocation6 + $0x18] sm:$0xf]
    %v383 = vld [vmem:[#allocation6 + $0x1c] sm:$0xf]
    %v384 = vld [vmem:[#allocation6 + $0x20] sm:$0xf]
    %v385 = vld [vmem:[#allocation6 + $0x24] sm:$0xf]
    %v386 = vld [vmem:[#allocation6 + $0x28] sm:$0xf]
    %v387 = vld [vmem:[#allocation6 + $0x2c] sm:$0xf]
    %v388 = vld [vmem:[#allocation6 + $0x30] sm:$0xf]
    %v389 = vld [vmem:[#allocation6 + $0x34] sm:$0xf]
    %v390 = vld [vmem:[#allocation6 + $0x38] sm:$0xf]
    %v391 = vld [vmem:[#allocation6 + $0x3c] sm:$0xf]
    %v392 = vld [vmem:[#allocation6 + $0x40] sm:$0xf]
    %v393 = vld [vmem:[#allocation6 + $0x44] sm:$0xf]
    %v394 = vld [vmem:[#allocation6 + $0x48] sm:$0xf]
    %v395 = vld [vmem:[#allocation6 + $0x4c] sm:$0xf]
    %v396 = vld [vmem:[#allocation6 + $0x50] sm:$0xf]
    %v397 = vld [vmem:[#allocation6 + $0x54] sm:$0xf]
    %v398 = vld [vmem:[#allocation6 + $0x58] sm:$0xf]
    %v399 = vld [vmem:[#allocation6 + $0x5c] sm:$0xf]
    %v400 = vld [vmem:[#allocation6 + $0x60] sm:$0xf]
    %v401 = vld [vmem:[#allocation6 + $0x64] sm:$0xf]
    %v402 = vld [vmem:[#allocation6 + $0x68] sm:$0xf]
    %v403 = vld [vmem:[#allocation6 + $0x6c] sm:$0xf]
    %v404 = vld [vmem:[#allocation6 + $0x70] sm:$0xf]
    %v405 = vld [vmem:[#allocation6 + $0x74] sm:$0xf]
    %v406 = vld [vmem:[#allocation6 + $0x78] sm:$0xf]
    %v407 = vld [vmem:[#allocation6 + $0x7c] sm:$0xf]
    %v440 = vunpack.c.l.b16 %v376
    %v441 = vunpack.c.l.b16 %v377
    %v442 = vunpack.c.l.b16 %v378
    %v443 = vunpack.c.l.b16 %v379
    %v444 = vunpack.c.l.b16 %v380
    %v445 = vunpack.c.l.b16 %v381
    %v446 = vunpack.c.l.b16 %v382
    %v447 = vunpack.c.l.b16 %v383
    %v448 = vunpack.c.l.b16 %v384
    %v449 = vunpack.c.l.b16 %v385
    %v450 = vunpack.c.l.b16 %v386
    %v451 = vunpack.c.l.b16 %v387
    %v452 = vunpack.c.l.b16 %v388
    %v453 = vunpack.c.l.b16 %v389
    %v454 = vunpack.c.l.b16 %v390
    %v455 = vunpack.c.l.b16 %v391
    %v456 = vunpack.c.l.b16 %v392
    %v457 = vunpack.c.l.b16 %v393
    %v458 = vunpack.c.l.b16 %v394
    %v459 = vunpack.c.l.b16 %v395
    %v460 = vunpack.c.l.b16 %v396
    %v461 = vunpack.c.l.b16 %v397
    %v462 = vunpack.c.l.b16 %v398
    %v463 = vunpack.c.l.b16 %v399
    %v464 = vunpack.c.l.b16 %v400
    %v465 = vunpack.c.l.b16 %v401
    %v466 = vunpack.c.l.b16 %v402
    %v467 = vunpack.c.l.b16 %v403
    %v468 = vunpack.c.l.b16 %v404
    %v469 = vunpack.c.l.b16 %v405
    %v470 = vunpack.c.l.b16 %v406
    %v471 = vunpack.c.l.b16 %v407
    %v472 = vpack.c.b16 %v441, %v440
    %v473 = vpack.c.b16 %v443, %v442
    %v474 = vpack.c.b16 %v445, %v444
    %v475 = vpack.c.b16 %v447, %v446
    %v476 = vpack.c.b16 %v449, %v448
    %v477 = vpack.c.b16 %v451, %v450
    %v478 = vpack.c.b16 %v453, %v452
    %v479 = vpack.c.b16 %v455, %v454
    %v480 = vpack.c.b16 %v457, %v456
    %v481 = vpack.c.b16 %v459, %v458
    %v482 = vpack.c.b16 %v461, %v460
    %v483 = vpack.c.b16 %v463, %v462
    %v484 = vpack.c.b16 %v465, %v464
    %v485 = vpack.c.b16 %v467, %v466
    %v486 = vpack.c.b16 %v469, %v468
    %v487 = vpack.c.b16 %v471, %v470
    %504 = vmatprep.subr.bf16.mxu0 0
    %505 = vmatpush1.bf16.msra.mxu0 %v472
    %506 = vmatprep.subr.bf16.mxu0 0
    %507 = vmatpush1.bf16.msra.mxu0 %v473
    %508 = vmatprep.subr.bf16.mxu0 0
    %509 = vmatpush1.bf16.msra.mxu0 %v474
    %510 = vmatprep.subr.bf16.mxu0 0
    %511 = vmatpush1.bf16.msra.mxu0 %v475
    %512 = vmatprep.subr.bf16.mxu0 0
    %513 = vmatpush1.bf16.msra.mxu0 %v476
    %514 = vmatprep.subr.bf16.mxu0 0
    %515 = vmatpush1.bf16.msra.mxu0 %v477
    %516 = vmatprep.subr.bf16.mxu0 0
    %517 = vmatpush1.bf16.msra.mxu0 %v478
    %518 = vmatprep.subr.bf16.mxu0 0
    %519 = vmatpush1.bf16.msra.mxu0 %v479
    %520 = vmatprep.subr.bf16.mxu0 0
    %521 = vmatpush1.bf16.msra.mxu0 %v480
    %522 = vmatprep.subr.bf16.mxu0 0
    %523 = vmatpush1.bf16.msra.mxu0 %v481
    %524 = vmatprep.subr.bf16.mxu0 0
    %525 = vmatpush1.bf16.msra.mxu0 %v482
    %526 = vmatprep.subr.bf16.mxu0 0
    %527 = vmatpush1.bf16.msra.mxu0 %v483
    %528 = vmatprep.subr.bf16.mxu0 0
    %529 = vmatpush1.bf16.msra.mxu0 %v484
    %530 = vmatprep.subr.bf16.mxu0 0
    %531 = vmatpush1.bf16.msra.mxu0 %v485
    %532 = vmatprep.subr.bf16.mxu0 0
    %533 = vmatpush1.bf16.msra.mxu0 %v486
    %534 = vmatprep.subr.bf16.mxu0 0
    %535 = vmatpush1.bf16.msra.mxu0 %v487
    %536 = vmatprep.mubr.bf16.mxu0 %v349
    %537 = vmatmul.mubr.bf16.gmra.mrb[0].mxu0 %v348
    %v538 = vpop.f32.mrb[0].mxu0
    %v539 = vadd.f32 0.0, %v538
    %v540 = vpop.f32.mrb[0].mxu0
    %v541 = vpop.f32.mrb[0].mxu0
    %v542 = vadd.f32 0.0, %v541
    %v543 = vpop.f32.mrb[0].mxu0
    %544 = vmatprep.mubr.bf16.mxu0 %v351
    %545 = vmatmul.mubr.bf16.gmra.mrb[0].mxu0 %v350
    %v546 = vpop.f32.mrb[0].mxu0
    %v547 = vadd.f32 0.0, %v546
    %v548 = vpop.f32.mrb[0].mxu0
    %v549 = vpop.f32.mrb[0].mxu0
    %v550 = vadd.f32 0.0, %v549
    %v551 = vpop.f32.mrb[0].mxu0
    %552 = vdwg.mxu0
    %v553 = vpack.c.bf16 %v542, %v539
    %v554 = vpack.c.bf16 %v550, %v547
    %v557 = vunpack.c.l.b16 %v553
    %v558 = vunpack.c.h.b16 %v553
    %v559 = vunpack.c.l.b16 %v554
    %v560 = vunpack.c.h.b16 %v554
    %v561 = vpack.c.b16 %v557, %v557
    %v562 = vpack.c.b16 %v558, %v558
    %v563 = vpack.c.b16 %v559, %v559
    %v564 = vpack.c.b16 %v560, %v560
    %569 = vst [vmem:[%s5] sm:$0xf] %v561
    %570 = vst [vmem:[%s5 + $0x4] sm:$0xf] %v562
    %571 = vst [vmem:[%s5 + $0x8] sm:$0xf] %v563
    %572 = vst [vmem:[%s5 + $0xc] sm:$0xf] %v564
    // Predicated region
    $region30: #{remotenet_forward.7} parent=1 // pred_check
      _
    $region31: #{remotenet_forward.7} parent=1 // pred_check_branch
      %574 = sbr.rel (0) target = $region33
    $region32: #{remotenet_forward.7} parent=1 // pred_region
      _
    $region33: #{remotenet_forward.7} parent=1 // pred_fallthru
      _
    // Predicated region
    $region34: #{remotenet_forward.7} parent=1 // pred_check
      _
    $region35: #{remotenet_forward.7} parent=1 // pred_check_branch
      %576 = sbr.rel (0) target = $region37
    $region36: #{remotenet_forward.7} parent=1 // pred_region
      _
    $region37: #{remotenet_forward.7} parent=1 // pred_fallthru
      _
    // Predicated region
    $region38: #{remotenet_forward.7} parent=1 // pred_check
      _
    $region39: #{remotenet_forward.7} parent=1 // pred_check_branch
      %578 = sbr.rel (0) target = $region41
    $region40: #{remotenet_forward.7} parent=1 // pred_region
      _
    $region41: #{remotenet_forward.7} parent=1 // pred_fallthru
      _
    // Predicated region
    $region42: #{remotenet_forward.7} parent=1 // pred_check
      _
    $region43: #{remotenet_forward.7} parent=1 // pred_check_branch
      %580 = sbr.rel (0) target = $region45
    $region44: #{remotenet_forward.7} parent=1 // pred_region
      _
    $region45: #{remotenet_forward.7} parent=1 // pred_fallthru
      _
    %581 = vsyncpa [#allocation3], 1
    %582 = vsyncpa [#allocation5], 1

// kernel: remotenet_forward.8
$region0: #{remotenet_forward.8}
  #allocation0 [shape = 'u32[]', space=smem, size = 0x4, offset = 0x4, fixed_abs, tag = 'smem constant byte address 0x4 - core index']
  #allocation1 [shape = 'u32[144,128]{1,0:T(1,128)}', space=vmem, size = 0x12000, scoped, tag = 'internal scratch']
  %s0 = inlined_call_operand.vmem [shape: bf16[16,640], index: 0, kind: input, shape index: {}]
  %s1 = inlined_call_operand.hbm [shape: bf16[640,256], index: 1, kind: input, shape index: {}]
  %s2 = inlined_call_operand.hbm [shape: f32[1,256], index: 2, kind: input, shape index: {}]
  %s3 = inlined_call_operand.hbm [shape: bf16[256,128], index: 3, kind: input, shape index: {}]
  %s4 = inlined_call_operand.vmem [shape: bf16[16,128], index: 4, kind: output, shape index: {}]
  %s5 = sld [smem:[#allocation0]]
  $region38: #{remotenet_forward.8} parent=0
    _
  %s7 = ssub.s32 1, %s5
  %s8 = scalar_select 0, %s7, %s5
  $region1: #{remotenet_forward.8} parent=0
    #allocation2 [shape = 'u8[327680]{0}', space=vmem, size = 0x50000, scoped, tag = 'input window, operand 1, single buffered']
    #allocation3 [shape = 's32[1]{0}', space=sflag, size = 0x4, scoped, tag = 'scoped memory for remotenet_forward.8']
    #allocation4 [shape = 'u8[1024]{0}', space=vmem, size = 0x400, scoped, tag = 'input window, operand 2, single buffered']
    #allocation5 [shape = 's32[1]{0}', space=sflag, size = 0x4, scoped, tag = 'scoped memory for remotenet_forward.8']
    #allocation6 [shape = 'u8[65536]{0}', space=vmem, size = 0x10000, scoped, tag = 'input window, operand 3, single buffered']
    %9 = vsyncpa [#allocation3], 0
    %10 = vsyncpa [#allocation5], 0
    // Predicated region
    $region2: #{remotenet_forward.8} parent=1 // pred_check
      _
    $region3: #{remotenet_forward.8} parent=1 // pred_check_branch
      %12 = sbr.rel (0) target = $region5
    $region4: #{remotenet_forward.8} parent=1 // pred_region
      _
    $region5: #{remotenet_forward.8} parent=1 // pred_fallthru
      _
    // Predicated region
    $region6: #{remotenet_forward.8} parent=1 // pred_check
      _
    $region7: #{remotenet_forward.8} parent=1 // pred_check_branch
      %14 = sbr.rel (0) target = $region9
    $region8: #{remotenet_forward.8} parent=1 // pred_region
      %s16 = ssub.s32 10240, 10240
      %17 = vsyncadd [#allocation3], %s16
      %s18 = sshll.u32 [#allocation2], 4
      %s19 = int_to_ptr.vmem [resolvable:$true] %s18
      %24 = dma.hbm_to_vmem [thread:$0]  %s1, 10240, %s19, [#allocation3], 128, 128, 8
    $region9: #{remotenet_forward.8} parent=1 // pred_fallthru
      _
    // Predicated region
    $region10: #{remotenet_forward.8} parent=1 // pred_check
      _
    $region11: #{remotenet_forward.8} parent=1 // pred_check_branch
      %26 = sbr.rel (0) target = $region13
    $region12: #{remotenet_forward.8} parent=1 // pred_region
      %s28 = ssub.s32 32, 32
      %29 = vsyncadd [#allocation5], %s28
      %s31 = sshll.u32 [#allocation4], 4
      %s32 = int_to_ptr.vmem [resolvable:$true] %s31
      %34 = dma.hbm_to_vmem [thread:$0]  %s2, 32, %s32, [#allocation5]
    $region13: #{remotenet_forward.8} parent=1 // pred_fallthru
      _
    // Predicated region
    $region14: #{remotenet_forward.8} parent=1 // pred_check
      _
    $region15: #{remotenet_forward.8} parent=1 // pred_check_branch
      %36 = sbr.rel (0) target = $region17
    $region16: #{remotenet_forward.8} parent=1 // pred_region
      %s38 = ssub.s32 2048, 2048
      %39 = vsyncadd [#allocation5], %s38
      %s40 = sshll.u32 [#allocation6], 4
      %s41 = int_to_ptr.vmem [resolvable:$true] %s40
      %46 = dma.hbm_to_vmem [thread:$0]  %s3, 2048, %s41, [#allocation5], 64, 64, 4
    $region17: #{remotenet_forward.8} parent=1 // pred_fallthru
      _
    // Predicated region
    $region18: #{remotenet_forward.8} parent=1 // pred_check
      _
    $region19: #{remotenet_forward.8} parent=1 // pred_check_branch
      %48 = sbr.rel (0) target = $region21
    $region20: #{remotenet_forward.8} parent=1 // pred_region
      %49 = dma.done [#allocation3], 10240
    $region21: #{remotenet_forward.8} parent=1 // pred_fallthru
      _
    // Predicated region
    $region22: #{remotenet_forward.8} parent=1 // pred_check
      _
    $region23: #{remotenet_forward.8} parent=1 // pred_check_branch
      %51 = sbr.rel (0) target = $region25
    $region24: #{remotenet_forward.8} parent=1 // pred_region
      %52 = dma.done [#allocation5], 32
    $region25: #{remotenet_forward.8} parent=1 // pred_fallthru
      _
    // Predicated region
    $region26: #{remotenet_forward.8} parent=1 // pred_check
      _
    $region27: #{remotenet_forward.8} parent=1 // pred_check_branch
      %54 = sbr.rel (0) target = $region29
    $region28: #{remotenet_forward.8} parent=1 // pred_region
      %55 = dma.done [#allocation5], 2048
    $region29: #{remotenet_forward.8} parent=1 // pred_fallthru
      _
    %v57 = vld [vmem:[%s0] sm:$0xff]
    %v58 = vld [vmem:[%s0 + $0x8] sm:$0xff]
    %v59 = vld [vmem:[%s0 + $0x10] sm:$0xf]
    %v60 = vld [vmem:[%s0 + $0x14] sm:$0xff]
    %v61 = vld [vmem:[%s0 + $0x1c] sm:$0xff]
    %v62 = vld [vmem:[%s0 + $0x24] sm:$0xf]
    %v63 = vld [vmem:[#allocation2] sm:$0xff]
    %v64 = vld [vmem:[#allocation2 + $0x8] sm:$0xff]
    %v65 = vld [vmem:[#allocation2 + $0x10] sm:$0xff]
    %v66 = vld [vmem:[#allocation2 + $0x18] sm:$0xff]
    %v67 = vld [vmem:[#allocation2 + $0x20] sm:$0xff]
    %v68 = vld [vmem:[#allocation2 + $0x28] sm:$0xff]
    %v69 = vld [vmem:[#allocation2 + $0x30] sm:$0xff]
    %v70 = vld [vmem:[#allocation2 + $0x38] sm:$0xff]
    %v71 = vld [vmem:[#allocation2 + $0x40] sm:$0xff]
    %v72 = vld [vmem:[#allocation2 + $0x48] sm:$0xff]
    %v73 = vld [vmem:[#allocation2 + $0x50] sm:$0xff]
    %v74 = vld [vmem:[#allocation2 + $0x58] sm:$0xff]
    %v75 = vld [vmem:[#allocation2 + $0x60] sm:$0xff]
    %v76 = vld [vmem:[#allocation2 + $0x68] sm:$0xff]
    %v77 = vld [vmem:[#allocation2 + $0x70] sm:$0xff]
    %v78 = vld [vmem:[#allocation2 + $0x78] sm:$0xff]
    %v79 = vld [vmem:[#allocation2 + $0x80] sm:$0xff]
    %v80 = vld [vmem:[#allocation2 + $0x88] sm:$0xff]
    %v81 = vld [vmem:[#allocation2 + $0x90] sm:$0xff]
    %v82 = vld [vmem:[#allocation2 + $0x98] sm:$0xff]
    %v83 = vld [vmem:[#allocation2 + $0xa0] sm:$0xff]
    %v84 = vld [vmem:[#allocation2 + $0xa8] sm:$0xff]
    %v85 = vld [vmem:[#allocation2 + $0xb0] sm:$0xff]
    %v86 = vld [vmem:[#allocation2 + $0xb8] sm:$0xff]
    %v87 = vld [vmem:[#allocation2 + $0xc0] sm:$0xff]
    %v88 = vld [vmem:[#allocation2 + $0xc8] sm:$0xff]
    %v89 = vld [vmem:[#allocation2 + $0xd0] sm:$0xff]
    %v90 = vld [vmem:[#allocation2 + $0xd8] sm:$0xff]
    %v91 = vld [vmem:[#allocation2 + $0xe0] sm:$0xff]
    %v92 = vld [vmem:[#allocation2 + $0xe8] sm:$0xff]
    %v93 = vld [vmem:[#allocation2 + $0xf0] sm:$0xff]
    %v94 = vld [vmem:[#allocation2 + $0xf8] sm:$0xff]
    %v95 = vld [vmem:[#allocation2 + $0x100] sm:$0xff]
    %v96 = vld [vmem:[#allocation2 + $0x108] sm:$0xff]
    %v97 = vld [vmem:[#allocation2 + $0x110] sm:$0xff]
    %v98 = vld [vmem:[#allocation2 + $0x118] sm:$0xff]
    %v99 = vld [vmem:[#allocation2 + $0x120] sm:$0xff]
    %v100 = vld [vmem:[#allocation2 + $0x128] sm:$0xff]
    %v101 = vld [vmem:[#allocation2 + $0x130] sm:$0xff]
    %v102 = vld [vmem:[#allocation2 + $0x138] sm:$0xff]
    %v103 = vld [vmem:[#allocation2 + $0x140] sm:$0xff]
    %v104 = vld [vmem:[#allocation2 + $0x148] sm:$0xff]
    %v105 = vld [vmem:[#allocation2 + $0x150] sm:$0xff]
    %v106 = vld [vmem:[#allocation2 + $0x158] sm:$0xff]
    %v107 = vld [vmem:[#allocation2 + $0x160] sm:$0xff]
    %v108 = vld [vmem:[#allocation2 + $0x168] sm:$0xff]
    %v109 = vld [vmem:[#allocation2 + $0x170] sm:$0xff]
    %v110 = vld [vmem:[#allocation2 + $0x178] sm:$0xff]
    %v111 = vld [vmem:[#allocation2 + $0x180] sm:$0xff]
    %v112 = vld [vmem:[#allocation2 + $0x188] sm:$0xff]
    %v113 = vld [vmem:[#allocation2 + $0x190] sm:$0xff]
    %v114 = vld [vmem:[#allocation2 + $0x198] sm:$0xff]
    %v115 = vld [vmem:[#allocation2 + $0x1a0] sm:$0xff]
    %v116 = vld [vmem:[#allocation2 + $0x1a8] sm:$0xff]
    %v117 = vld [vmem:[#allocation2 + $0x1b0] sm:$0xff]
    %v118 = vld [vmem:[#allocation2 + $0x1b8] sm:$0xff]
    %v119 = vld [vmem:[#allocation2 + $0x1c0] sm:$0xff]
    %v120 = vld [vmem:[#allocation2 + $0x1c8] sm:$0xff]
    %v121 = vld [vmem:[#allocation2 + $0x1d0] sm:$0xff]
    %v122 = vld [vmem:[#allocation2 + $0x1d8] sm:$0xff]
    %v123 = vld [vmem:[#allocation2 + $0x1e0] sm:$0xff]
    %v124 = vld [vmem:[#allocation2 + $0x1e8] sm:$0xff]
    %v125 = vld [vmem:[#allocation2 + $0x1f0] sm:$0xff]
    %v126 = vld [vmem:[#allocation2 + $0x1f8] sm:$0xff]
    %v127 = vld [vmem:[#allocation2 + $0x200] sm:$0xff]
    %v128 = vld [vmem:[#allocation2 + $0x208] sm:$0xff]
    %v129 = vld [vmem:[#allocation2 + $0x210] sm:$0xff]
    %v130 = vld [vmem:[#allocation2 + $0x218] sm:$0xff]
    %v131 = vld [vmem:[#allocation2 + $0x220] sm:$0xff]
    %v132 = vld [vmem:[#allocation2 + $0x228] sm:$0xff]
    %v133 = vld [vmem:[#allocation2 + $0x230] sm:$0xff]
    %v134 = vld [vmem:[#allocation2 + $0x238] sm:$0xff]
    %v135 = vld [vmem:[#allocation2 + $0x240] sm:$0xff]
    %v136 = vld [vmem:[#allocation2 + $0x248] sm:$0xff]
    %v137 = vld [vmem:[#allocation2 + $0x250] sm:$0xff]
    %v138 = vld [vmem:[#allocation2 + $0x258] sm:$0xff]
    %v139 = vld [vmem:[#allocation2 + $0x260] sm:$0xff]
    %v140 = vld [vmem:[#allocation2 + $0x268] sm:$0xff]
    %v141 = vld [vmem:[#allocation2 + $0x270] sm:$0xff]
    %v142 = vld [vmem:[#allocation2 + $0x278] sm:$0xff]
    %v143 = vld [vmem:[#allocation4] sm:$0x3]
    %v145 = vlaneseq
    %v146 = vshrl.u32 %v145, 7
    %v147 = vsub.s32 0, %v146
    %v148 = vrot.slane %v143, %v147
    %v149 = vlaneseq
    %v150 = vshrl.u32 %v149, 7
    %v151 = vsub.s32 1, %v150
    %v152 = vrot.slane %v143, %v151
    %v161 = vunpack.c.l.b16 %v57
    %v162 = vunpack.c.h.b16 %v57
    %v163 = vunpack.c.l.b16 %v58
    %v164 = vunpack.c.h.b16 %v58
    %v165 = vunpack.c.l.b16 %v59
    %v166 = vunpack.c.l.b16 %v60
    %v167 = vunpack.c.h.b16 %v60
    %v168 = vunpack.c.l.b16 %v61
    %v169 = vunpack.c.h.b16 %v61
    %v170 = vunpack.c.l.b16 %v62
    %v171 = vpack.c.b16 %v166, %v161
    %v172 = vpack.c.b16 %v167, %v162
    %v173 = vpack.c.b16 %v168, %v163
    %v174 = vpack.c.b16 %v169, %v164
    %v175 = vpack.c.b16 %v170, %v165
    %v261 = vunpack.c.l.b16 %v63
    %v262 = vunpack.c.h.b16 %v63
    %v263 = vunpack.c.l.b16 %v64
    %v264 = vunpack.c.h.b16 %v64
    %v265 = vunpack.c.l.b16 %v65
    %v266 = vunpack.c.h.b16 %v65
    %v267 = vunpack.c.l.b16 %v66
    %v268 = vunpack.c.h.b16 %v66
    %v269 = vunpack.c.l.b16 %v67
    %v270 = vunpack.c.h.b16 %v67
    %v271 = vunpack.c.l.b16 %v68
    %v272 = vunpack.c.h.b16 %v68
    %v273 = vunpack.c.l.b16 %v69
    %v274 = vunpack.c.h.b16 %v69
    %v275 = vunpack.c.l.b16 %v70
    %v276 = vunpack.c.h.b16 %v70
    %v277 = vunpack.c.l.b16 %v71
    %v278 = vunpack.c.h.b16 %v71
    %v279 = vunpack.c.l.b16 %v72
    %v280 = vunpack.c.h.b16 %v72
    %v281 = vunpack.c.l.b16 %v73
    %v282 = vunpack.c.h.b16 %v73
    %v283 = vunpack.c.l.b16 %v74
    %v284 = vunpack.c.h.b16 %v74
    %v285 = vunpack.c.l.b16 %v75
    %v286 = vunpack.c.h.b16 %v75
    %v287 = vunpack.c.l.b16 %v76
    %v288 = vunpack.c.h.b16 %v76
    %v289 = vunpack.c.l.b16 %v77
    %v290 = vunpack.c.h.b16 %v77
    %v291 = vunpack.c.l.b16 %v78
    %v292 = vunpack.c.h.b16 %v78
    %v293 = vunpack.c.l.b16 %v79
    %v294 = vunpack.c.h.b16 %v79
    %v295 = vunpack.c.l.b16 %v80
    %v296 = vunpack.c.h.b16 %v80
    %v297 = vunpack.c.l.b16 %v81
    %v298 = vunpack.c.h.b16 %v81
    %v299 = vunpack.c.l.b16 %v82
    %v300 = vunpack.c.h.b16 %v82
    %v301 = vunpack.c.l.b16 %v83
    %v302 = vunpack.c.h.b16 %v83
    %v303 = vunpack.c.l.b16 %v84
    %v304 = vunpack.c.h.b16 %v84
    %v305 = vunpack.c.l.b16 %v85
    %v306 = vunpack.c.h.b16 %v85
    %v307 = vunpack.c.l.b16 %v86
    %v308 = vunpack.c.h.b16 %v86
    %v309 = vunpack.c.l.b16 %v87
    %v310 = vunpack.c.h.b16 %v87
    %v311 = vunpack.c.l.b16 %v88
    %v312 = vunpack.c.h.b16 %v88
    %v313 = vunpack.c.l.b16 %v89
    %v314 = vunpack.c.h.b16 %v89
    %v315 = vunpack.c.l.b16 %v90
    %v316 = vunpack.c.h.b16 %v90
    %v317 = vunpack.c.l.b16 %v91
    %v318 = vunpack.c.h.b16 %v91
    %v319 = vunpack.c.l.b16 %v92
    %v320 = vunpack.c.h.b16 %v92
    %v321 = vunpack.c.l.b16 %v93
    %v322 = vunpack.c.h.b16 %v93
    %v323 = vunpack.c.l.b16 %v94
    %v324 = vunpack.c.h.b16 %v94
    %v325 = vunpack.c.l.b16 %v95
    %v326 = vunpack.c.h.b16 %v95
    %v327 = vunpack.c.l.b16 %v96
    %v328 = vunpack.c.h.b16 %v96
    %v329 = vunpack.c.l.b16 %v97
    %v330 = vunpack.c.h.b16 %v97
    %v331 = vunpack.c.l.b16 %v98
    %v332 = vunpack.c.h.b16 %v98
    %v333 = vunpack.c.l.b16 %v99
    %v334 = vunpack.c.h.b16 %v99
    %v335 = vunpack.c.l.b16 %v100
    %v336 = vunpack.c.h.b16 %v100
    %v337 = vunpack.c.l.b16 %v101
    %v338 = vunpack.c.h.b16 %v101
    %v339 = vunpack.c.l.b16 %v102
    %v340 = vunpack.c.h.b16 %v102
    %v341 = vunpack.c.l.b16 %v103
    %v342 = vunpack.c.h.b16 %v103
    %v343 = vunpack.c.l.b16 %v104
    %v344 = vunpack.c.h.b16 %v104
    %v345 = vunpack.c.l.b16 %v105
    %v346 = vunpack.c.h.b16 %v105
    %v347 = vunpack.c.l.b16 %v106
    %v348 = vunpack.c.h.b16 %v106
    %v349 = vunpack.c.l.b16 %v107
    %v350 = vunpack.c.h.b16 %v107
    %v351 = vunpack.c.l.b16 %v108
    %v352 = vunpack.c.h.b16 %v108
    %v353 = vunpack.c.l.b16 %v109
    %v354 = vunpack.c.h.b16 %v109
    %v355 = vunpack.c.l.b16 %v110
    %v356 = vunpack.c.h.b16 %v110
    %v357 = vunpack.c.l.b16 %v111
    %v358 = vunpack.c.h.b16 %v111
    %v359 = vunpack.c.l.b16 %v112
    %v360 = vunpack.c.h.b16 %v112
    %v361 = vunpack.c.l.b16 %v113
    %v362 = vunpack.c.h.b16 %v113
    %v363 = vunpack.c.l.b16 %v114
    %v364 = vunpack.c.h.b16 %v114
    %v365 = vunpack.c.l.b16 %v115
    %v366 = vunpack.c.h.b16 %v115
    %v367 = vunpack.c.l.b16 %v116
    %v368 = vunpack.c.h.b16 %v116
    %v369 = vunpack.c.l.b16 %v117
    %v370 = vunpack.c.h.b16 %v117
    %v371 = vunpack.c.l.b16 %v118
    %v372 = vunpack.c.h.b16 %v118
    %v373 = vunpack.c.l.b16 %v119
    %v374 = vunpack.c.h.b16 %v119
    %v375 = vunpack.c.l.b16 %v120
    %v376 = vunpack.c.h.b16 %v120
    %v377 = vunpack.c.l.b16 %v121
    %v378 = vunpack.c.h.b16 %v121
    %v379 = vunpack.c.l.b16 %v122
    %v380 = vunpack.c.h.b16 %v122
    %v381 = vunpack.c.l.b16 %v123
    %v382 = vunpack.c.h.b16 %v123
    %v383 = vunpack.c.l.b16 %v124
    %v384 = vunpack.c.h.b16 %v124
    %v385 = vunpack.c.l.b16 %v125
    %v386 = vunpack.c.h.b16 %v125
    %v387 = vunpack.c.l.b16 %v126
    %v388 = vunpack.c.h.b16 %v126
    %v389 = vunpack.c.l.b16 %v127
    %v390 = vunpack.c.h.b16 %v127
    %v391 = vunpack.c.l.b16 %v128
    %v392 = vunpack.c.h.b16 %v128
    %v393 = vunpack.c.l.b16 %v129
    %v394 = vunpack.c.h.b16 %v129
    %v395 = vunpack.c.l.b16 %v130
    %v396 = vunpack.c.h.b16 %v130
    %v397 = vunpack.c.l.b16 %v131
    %v398 = vunpack.c.h.b16 %v131
    %v399 = vunpack.c.l.b16 %v132
    %v400 = vunpack.c.h.b16 %v132
    %v401 = vunpack.c.l.b16 %v133
    %v402 = vunpack.c.h.b16 %v133
    %v403 = vunpack.c.l.b16 %v134
    %v404 = vunpack.c.h.b16 %v134
    %v405 = vunpack.c.l.b16 %v135
    %v406 = vunpack.c.h.b16 %v135
    %v407 = vunpack.c.l.b16 %v136
    %v408 = vunpack.c.h.b16 %v136
    %v409 = vunpack.c.l.b16 %v137
    %v410 = vunpack.c.h.b16 %v137
    %v411 = vunpack.c.l.b16 %v138
    %v412 = vunpack.c.h.b16 %v138
    %v413 = vunpack.c.l.b16 %v139
    %v414 = vunpack.c.h.b16 %v139
    %v415 = vunpack.c.l.b16 %v140
    %v416 = vunpack.c.h.b16 %v140
    %v417 = vunpack.c.l.b16 %v141
    %v418 = vunpack.c.h.b16 %v141
    %v419 = vunpack.c.l.b16 %v142
    %v420 = vunpack.c.h.b16 %v142
    %v421 = vpack.c.b16 %v263, %v261
    %v422 = vpack.c.b16 %v264, %v262
    %v423 = vpack.c.b16 %v267, %v265
    %v424 = vpack.c.b16 %v268, %v266
    %v425 = vpack.c.b16 %v271, %v269
    %v426 = vpack.c.b16 %v272, %v270
    %v427 = vpack.c.b16 %v275, %v273
    %v428 = vpack.c.b16 %v276, %v274
    %v429 = vpack.c.b16 %v279, %v277
    %v430 = vpack.c.b16 %v280, %v278
    %v431 = vpack.c.b16 %v283, %v281
    %v432 = vpack.c.b16 %v284, %v282
    %v433 = vpack.c.b16 %v287, %v285
    %v434 = vpack.c.b16 %v288, %v286
    %v435 = vpack.c.b16 %v291, %v289
    %v436 = vpack.c.b16 %v292, %v290
    %v437 = vpack.c.b16 %v295, %v293
    %v438 = vpack.c.b16 %v296, %v294
    %v439 = vpack.c.b16 %v299, %v297
    %v440 = vpack.c.b16 %v300, %v298
    %v441 = vpack.c.b16 %v303, %v301
    %v442 = vpack.c.b16 %v304, %v302
    %v443 = vpack.c.b16 %v307, %v305
    %v444 = vpack.c.b16 %v308, %v306
    %v445 = vpack.c.b16 %v311, %v309
    %v446 = vpack.c.b16 %v312, %v310
    %v447 = vpack.c.b16 %v315, %v313
    %v448 = vpack.c.b16 %v316, %v314
    %v449 = vpack.c.b16 %v319, %v317
    %v450 = vpack.c.b16 %v320, %v318
    %v451 = vpack.c.b16 %v323, %v321
    %v452 = vpack.c.b16 %v324, %v322
    %v453 = vpack.c.b16 %v327, %v325
    %v454 = vpack.c.b16 %v328, %v326
    %v455 = vpack.c.b16 %v331, %v329
    %v456 = vpack.c.b16 %v332, %v330
    %v457 = vpack.c.b16 %v335, %v333
    %v458 = vpack.c.b16 %v336, %v334
    %v459 = vpack.c.b16 %v339, %v337
    %v460 = vpack.c.b16 %v340, %v338
    %v461 = vpack.c.b16 %v343, %v341
    %v462 = vpack.c.b16 %v344, %v342
    %v463 = vpack.c.b16 %v347, %v345
    %v464 = vpack.c.b16 %v348, %v346
    %v465 = vpack.c.b16 %v351, %v349
    %v466 = vpack.c.b16 %v352, %v350
    %v467 = vpack.c.b16 %v355, %v353
    %v468 = vpack.c.b16 %v356, %v354
    %v469 = vpack.c.b16 %v359, %v357
    %v470 = vpack.c.b16 %v360, %v358
    %v471 = vpack.c.b16 %v363, %v361
    %v472 = vpack.c.b16 %v364, %v362
    %v473 = vpack.c.b16 %v367, %v365
    %v474 = vpack.c.b16 %v368, %v366
    %v475 = vpack.c.b16 %v371, %v369
    %v476 = vpack.c.b16 %v372, %v370
    %v477 = vpack.c.b16 %v375, %v373
    %v478 = vpack.c.b16 %v376, %v374
    %v479 = vpack.c.b16 %v379, %v377
    %v480 = vpack.c.b16 %v380, %v378
    %v481 = vpack.c.b16 %v383, %v381
    %v482 = vpack.c.b16 %v384, %v382
    %v483 = vpack.c.b16 %v387, %v385
    %v484 = vpack.c.b16 %v388, %v386
    %v485 = vpack.c.b16 %v391, %v389
    %v486 = vpack.c.b16 %v392, %v390
    %v487 = vpack.c.b16 %v395, %v393
    %v488 = vpack.c.b16 %v396, %v394
    %v489 = vpack.c.b16 %v399, %v397
    %v490 = vpack.c.b16 %v400, %v398
    %v491 = vpack.c.b16 %v403, %v401
    %v492 = vpack.c.b16 %v404, %v402
    %v493 = vpack.c.b16 %v407, %v405
    %v494 = vpack.c.b16 %v408, %v406
    %v495 = vpack.c.b16 %v411, %v409
    %v496 = vpack.c.b16 %v412, %v410
    %v497 = vpack.c.b16 %v415, %v413
    %v498 = vpack.c.b16 %v416, %v414
    %v499 = vpack.c.b16 %v419, %v417
    %v500 = vpack.c.b16 %v420, %v418
    %581 = vmatprep.subr.bf16.mxu0 %v422
    %582 = vmatpush1.bf16.msra.mxu0 %v421
    %583 = vmatprep.subr.bf16.mxu0 %v424
    %584 = vmatpush1.bf16.msra.mxu0 %v423
    %585 = vmatprep.subr.bf16.mxu0 %v426
    %586 = vmatpush1.bf16.msra.mxu0 %v425
    %587 = vmatprep.subr.bf16.mxu0 %v428
    %588 = vmatpush1.bf16.msra.mxu0 %v427
    %589 = vmatprep.subr.bf16.mxu0 %v430
    %590 = vmatpush1.bf16.msra.mxu0 %v429
    %591 = vmatprep.subr.bf16.mxu0 %v432
    %592 = vmatpush1.bf16.msra.mxu0 %v431
    %593 = vmatprep.subr.bf16.mxu0 %v434
    %594 = vmatpush1.bf16.msra.mxu0 %v433
    %595 = vmatprep.subr.bf16.mxu0 %v436
    %596 = vmatpush1.bf16.msra.mxu0 %v435
    %597 = vmatprep.subr.bf16.mxu0 %v438
    %598 = vmatpush1.bf16.msra.mxu0 %v437
    %599 = vmatprep.subr.bf16.mxu0 %v440
    %600 = vmatpush1.bf16.msra.mxu0 %v439
    %601 = vmatprep.subr.bf16.mxu0 %v442
    %602 = vmatpush1.bf16.msra.mxu0 %v441
    %603 = vmatprep.subr.bf16.mxu0 %v444
    %604 = vmatpush1.bf16.msra.mxu0 %v443
    %605 = vmatprep.subr.bf16.mxu0 %v446
    %606 = vmatpush1.bf16.msra.mxu0 %v445
    %607 = vmatprep.subr.bf16.mxu0 %v448
    %608 = vmatpush1.bf16.msra.mxu0 %v447
    %609 = vmatprep.subr.bf16.mxu0 %v450
    %610 = vmatpush1.bf16.msra.mxu0 %v449
    %611 = vmatprep.subr.bf16.mxu0 %v452
    %612 = vmatpush1.bf16.msra.mxu0 %v451
    %613 = vmatprep.mubr.bf16.mxu0 %v172
    %614 = vmatmul.mubr.bf16.gmra.mrb[0].mxu0 %v171
    %v615 = vpop.f32.mrb[0].mxu0
    %v616 = vadd.f32 %v148, %v615
    %v617 = vpop.f32.mrb[0].mxu0
    %v618 = vadd.f32 %v152, %v617
    %v619 = vpop.f32.mrb[0].mxu0
    %v620 = vadd.f32 %v148, %v619
    %v621 = vpop.f32.mrb[0].mxu0
    %v622 = vadd.f32 %v152, %v621
    %623 = vdwg.mxu0
    %624 = vmatprep.subr.bf16.mxu0 %v454
    %625 = vmatpush1.bf16.msra.mxu0 %v453
    %626 = vmatprep.subr.bf16.mxu0 %v456
    %627 = vmatpush1.bf16.msra.mxu0 %v455
    %628 = vmatprep.subr.bf16.mxu0 %v458
    %629 = vmatpush1.bf16.msra.mxu0 %v457
    %630 = vmatprep.subr.bf16.mxu0 %v460
    %631 = vmatpush1.bf16.msra.mxu0 %v459
    %632 = vmatprep.subr.bf16.mxu0 %v462
    %633 = vmatpush1.bf16.msra.mxu0 %v461
    %634 = vmatprep.subr.bf16.mxu0 %v464
    %635 = vmatpush1.bf16.msra.mxu0 %v463
    %636 = vmatprep.subr.bf16.mxu0 %v466
    %637 = vmatpush1.bf16.msra.mxu0 %v465
    %638 = vmatprep.subr.bf16.mxu0 %v468
    %639 = vmatpush1.bf16.msra.mxu0 %v467
    %640 = vmatprep.subr.bf16.mxu0 %v470
    %641 = vmatpush1.bf16.msra.mxu0 %v469
    %642 = vmatprep.subr.bf16.mxu0 %v472
    %643 = vmatpush1.bf16.msra.mxu0 %v471
    %644 = vmatprep.subr.bf16.mxu0 %v474
    %645 = vmatpush1.bf16.msra.mxu0 %v473
    %646 = vmatprep.subr.bf16.mxu0 %v476
    %647 = vmatpush1.bf16.msra.mxu0 %v475
    %648 = vmatprep.subr.bf16.mxu0 %v478
    %649 = vmatpush1.bf16.msra.mxu0 %v477
    %650 = vmatprep.subr.bf16.mxu0 %v480
    %651 = vmatpush1.bf16.msra.mxu0 %v479
    %652 = vmatprep.subr.bf16.mxu0 %v482
    %653 = vmatpush1.bf16.msra.mxu0 %v481
    %654 = vmatprep.subr.bf16.mxu0 %v484
    %655 = vmatpush1.bf16.msra.mxu0 %v483
    %656 = vmatprep.mubr.bf16.mxu0 %v174
    %657 = vmatmul.mubr.bf16.gmra.mrb[0].mxu0 %v173
    %v658 = vpop.f32.mrb[0].mxu0
    %v659 = vadd.f32 %v616, %v658
    %v660 = vpop.f32.mrb[0].mxu0
    %v661 = vadd.f32 %v618, %v660
    %v662 = vpop.f32.mrb[0].mxu0
    %v663 = vadd.f32 %v620, %v662
    %v664 = vpop.f32.mrb[0].mxu0
    %v665 = vadd.f32 %v622, %v664
    %666 = vdwg.mxu0
    %667 = vmatprep.subr.bf16.mxu0 %v486
    %668 = vmatpush1.bf16.msra.mxu0 %v485
    %669 = vmatprep.subr.bf16.mxu0 %v488
    %670 = vmatpush1.bf16.msra.mxu0 %v487
    %671 = vmatprep.subr.bf16.mxu0 %v490
    %672 = vmatpush1.bf16.msra.mxu0 %v489
    %673 = vmatprep.subr.bf16.mxu0 %v492
    %674 = vmatpush1.bf16.msra.mxu0 %v491
    %675 = vmatprep.subr.bf16.mxu0 %v494
    %676 = vmatpush1.bf16.msra.mxu0 %v493
    %677 = vmatprep.subr.bf16.mxu0 %v496
    %678 = vmatpush1.bf16.msra.mxu0 %v495
    %679 = vmatprep.subr.bf16.mxu0 %v498
    %680 = vmatpush1.bf16.msra.mxu0 %v497
    %681 = vmatprep.subr.bf16.mxu0 %v500
    %682 = vmatpush1.bf16.msra.mxu0 %v499
    %683 = vmatprep.subr.bf16.mxu0 0
    %684 = vmatpush1.bf16.msra.mxu0 0
    %685 = vmatprep.subr.bf16.mxu0 0
    %686 = vmatpush1.bf16.msra.mxu0 0
    %687 = vmatprep.subr.bf16.mxu0 0
    %688 = vmatpush1.bf16.msra.mxu0 0
    %689 = vmatprep.subr.bf16.mxu0 0
    %690 = vmatpush1.bf16.msra.mxu0 0
    %691 = vmatprep.subr.bf16.mxu0 0
    %692 = vmatpush1.bf16.msra.mxu0 0
    %693 = vmatprep.subr.bf16.mxu0 0
    %694 = vmatpush1.bf16.msra.mxu0 0
    %695 = vmatprep.subr.bf16.mxu0 0
    %696 = vmatpush1.bf16.msra.mxu0 0
    %697 = vmatprep.subr.bf16.mxu0 0
    %698 = vmatpush1.bf16.msra.mxu0 0
    %699 = vmatprep.mubr.bf16.mxu0 0
    %700 = vmatmul.mubr.bf16.gmra.mrb[0].mxu0 %v175
    %v701 = vpop.f32.mrb[0].mxu0
    %v702 = vadd.f32 %v659, %v701
    %v703 = vpop.f32.mrb[0].mxu0
    %v704 = vadd.f32 %v661, %v703
    %v705 = vpop.f32.mrb[0].mxu0
    %v706 = vadd.f32 %v663, %v705
    %v707 = vpop.f32.mrb[0].mxu0
    %v708 = vadd.f32 %v665, %v707
    %709 = vdwg.mxu0
    %v710 = vmax.f32 %v702, 0.0
    %v711 = vmax.f32 %v704, 0.0
    %v712 = vmax.f32 %v706, 0.0
    %v713 = vmax.f32 %v708, 0.0
    %v714 = vpack.c.bf16 %v712, %v710
    %v715 = vpack.c.bf16 %v713, %v711
    %v716 = vld [vmem:[#allocation6] sm:$0xf]
    %v717 = vld [vmem:[#allocation6 + $0x4] sm:$0xf]
    %v718 = vld [vmem:[#allocation6 + $0x8] sm:$0xf]
    %v719 = vld [vmem:[#allocation6 + $0xc] sm:$0xf]
    %v720 = vld [vmem:[#allocation6 + $0x10] sm:$0xf]
    %v721 = vld [vmem:[#allocation6 + $0x14] sm:$0xf]
    %v722 = vld [vmem:[#allocation6 + $0x18] sm:$0xf]
    %v723 = vld [vmem:[#allocation6 + $0x1c] sm:$0xf]
    %v724 = vld [vmem:[#allocation6 + $0x20] sm:$0xf]
    %v725 = vld [vmem:[#allocation6 + $0x24] sm:$0xf]
    %v726 = vld [vmem:[#allocation6 + $0x28] sm:$0xf]
    %v727 = vld [vmem:[#allocation6 + $0x2c] sm:$0xf]
    %v728 = vld [vmem:[#allocation6 + $0x30] sm:$0xf]
    %v729 = vld [vmem:[#allocation6 + $0x34] sm:$0xf]
    %v730 = vld [vmem:[#allocation6 + $0x38] sm:$0xf]
    %v731 = vld [vmem:[#allocation6 + $0x3c] sm:$0xf]
    %v732 = vld [vmem:[#allocation6 + $0x40] sm:$0xf]
    %v733 = vld [vmem:[#allocation6 + $0x44] sm:$0xf]
    %v734 = vld [vmem:[#allocation6 + $0x48] sm:$0xf]
    %v735 = vld [vmem:[#allocation6 + $0x4c] sm:$0xf]
    %v736 = vld [vmem:[#allocation6 + $0x50] sm:$0xf]
    %v737 = vld [vmem:[#allocation6 + $0x54] sm:$0xf]
    %v738 = vld [vmem:[#allocation6 + $0x58] sm:$0xf]
    %v739 = vld [vmem:[#allocation6 + $0x5c] sm:$0xf]
    %v740 = vld [vmem:[#allocation6 + $0x60] sm:$0xf]
    %v741 = vld [vmem:[#allocation6 + $0x64] sm:$0xf]
    %v742 = vld [vmem:[#allocation6 + $0x68] sm:$0xf]
    %v743 = vld [vmem:[#allocation6 + $0x6c] sm:$0xf]
    %v744 = vld [vmem:[#allocation6 + $0x70] sm:$0xf]
    %v745 = vld [vmem:[#allocation6 + $0x74] sm:$0xf]
    %v746 = vld [vmem:[#allocation6 + $0x78] sm:$0xf]
    %v747 = vld [vmem:[#allocation6 + $0x7c] sm:$0xf]
    %v780 = vunpack.c.l.b16 %v716
    %v781 = vunpack.c.l.b16 %v717
    %v782 = vunpack.c.l.b16 %v718
    %v783 = vunpack.c.l.b16 %v719
    %v784 = vunpack.c.l.b16 %v720
    %v785 = vunpack.c.l.b16 %v721
    %v786 = vunpack.c.l.b16 %v722
    %v787 = vunpack.c.l.b16 %v723
    %v788 = vunpack.c.l.b16 %v724
    %v789 = vunpack.c.l.b16 %v725
    %v790 = vunpack.c.l.b16 %v726
    %v791 = vunpack.c.l.b16 %v727
    %v792 = vunpack.c.l.b16 %v728
    %v793 = vunpack.c.l.b16 %v729
    %v794 = vunpack.c.l.b16 %v730
    %v795 = vunpack.c.l.b16 %v731
    %v796 = vunpack.c.l.b16 %v732
    %v797 = vunpack.c.l.b16 %v733
    %v798 = vunpack.c.l.b16 %v734
    %v799 = vunpack.c.l.b16 %v735
    %v800 = vunpack.c.l.b16 %v736
    %v801 = vunpack.c.l.b16 %v737
    %v802 = vunpack.c.l.b16 %v738
    %v803 = vunpack.c.l.b16 %v739
    %v804 = vunpack.c.l.b16 %v740
    %v805 = vunpack.c.l.b16 %v741
    %v806 = vunpack.c.l.b16 %v742
    %v807 = vunpack.c.l.b16 %v743
    %v808 = vunpack.c.l.b16 %v744
    %v809 = vunpack.c.l.b16 %v745
    %v810 = vunpack.c.l.b16 %v746
    %v811 = vunpack.c.l.b16 %v747
    %v812 = vpack.c.b16 %v781, %v780
    %v813 = vpack.c.b16 %v783, %v782
    %v814 = vpack.c.b16 %v785, %v784
    %v815 = vpack.c.b16 %v787, %v786
    %v816 = vpack.c.b16 %v789, %v788
    %v817 = vpack.c.b16 %v791, %v790
    %v818 = vpack.c.b16 %v793, %v792
    %v819 = vpack.c.b16 %v795, %v794
    %v820 = vpack.c.b16 %v797, %v796
    %v821 = vpack.c.b16 %v799, %v798
    %v822 = vpack.c.b16 %v801, %v800
    %v823 = vpack.c.b16 %v803, %v802
    %v824 = vpack.c.b16 %v805, %v804
    %v825 = vpack.c.b16 %v807, %v806
    %v826 = vpack.c.b16 %v809, %v808
    %v827 = vpack.c.b16 %v811, %v810
    %844 = vmatprep.subr.bf16.mxu0 0
    %845 = vmatpush1.bf16.msra.mxu0 %v812
    %846 = vmatprep.subr.bf16.mxu0 0
    %847 = vmatpush1.bf16.msra.mxu0 %v813
    %848 = vmatprep.subr.bf16.mxu0 0
    %849 = vmatpush1.bf16.msra.mxu0 %v814
    %850 = vmatprep.subr.bf16.mxu0 0
    %851 = vmatpush1.bf16.msra.mxu0 %v815
    %852 = vmatprep.subr.bf16.mxu0 0
    %853 = vmatpush1.bf16.msra.mxu0 %v816
    %854 = vmatprep.subr.bf16.mxu0 0
    %855 = vmatpush1.bf16.msra.mxu0 %v817
    %856 = vmatprep.subr.bf16.mxu0 0
    %857 = vmatpush1.bf16.msra.mxu0 %v818
    %858 = vmatprep.subr.bf16.mxu0 0
    %859 = vmatpush1.bf16.msra.mxu0 %v819
    %860 = vmatprep.subr.bf16.mxu0 0
    %861 = vmatpush1.bf16.msra.mxu0 %v820
    %862 = vmatprep.subr.bf16.mxu0 0
    %863 = vmatpush1.bf16.msra.mxu0 %v821
    %864 = vmatprep.subr.bf16.mxu0 0
    %865 = vmatpush1.bf16.msra.mxu0 %v822
    %866 = vmatprep.subr.bf16.mxu0 0
    %867 = vmatpush1.bf16.msra.mxu0 %v823
    %868 = vmatprep.subr.bf16.mxu0 0
    %869 = vmatpush1.bf16.msra.mxu0 %v824
    %870 = vmatprep.subr.bf16.mxu0 0
    %871 = vmatpush1.bf16.msra.mxu0 %v825
    %872 = vmatprep.subr.bf16.mxu0 0
    %873 = vmatpush1.bf16.msra.mxu0 %v826
    %874 = vmatprep.subr.bf16.mxu0 0
    %875 = vmatpush1.bf16.msra.mxu0 %v827
    %876 = vmatprep.mubr.bf16.mxu0 %v715
    %877 = vmatmul.mubr.bf16.gmra.mrb[0].mxu0 %v714
    %v878 = vpop.f32.mrb[0].mxu0
    %v879 = vadd.f32 0.0, %v878
    %v880 = vpop.f32.mrb[0].mxu0
    %v881 = vpop.f32.mrb[0].mxu0
    %v882 = vadd.f32 0.0, %v881
    %v883 = vpop.f32.mrb[0].mxu0
    %884 = vdwg.mxu0
    %v885 = vpack.c.bf16 %v882, %v879
    %v887 = vunpack.c.l.b16 %v885
    %v888 = vunpack.c.h.b16 %v885
    %v889 = vpack.c.b16 %v887, %v887
    %v890 = vpack.c.b16 %v888, %v888
    %893 = vst [vmem:[%s4] sm:$0xf] %v889
    %894 = vst [vmem:[%s4 + $0x4] sm:$0xf] %v890
    // Predicated region
    $region30: #{remotenet_forward.8} parent=1 // pred_check
      _
    $region31: #{remotenet_forward.8} parent=1 // pred_check_branch
      %896 = sbr.rel (0) target = $region33
    $region32: #{remotenet_forward.8} parent=1 // pred_region
      _
    $region33: #{remotenet_forward.8} parent=1 // pred_fallthru
      _
    // Predicated region
    $region34: #{remotenet_forward.8} parent=1 // pred_check
      _
    $region35: #{remotenet_forward.8} parent=1 // pred_check_branch
      %898 = sbr.rel (0) target = $region37
    $region36: #{remotenet_forward.8} parent=1 // pred_region
      _
    $region37: #{remotenet_forward.8} parent=1 // pred_fallthru
      _
    %899 = vsyncpa [#allocation3], 1
    %900 = vsyncpa [#allocation5], 1

// kernel: remotenet_forward.9
$region0: #{remotenet_forward.9}
  #allocation0 [shape = 'u32[]', space=smem, size = 0x4, offset = 0x4, fixed_abs, tag = 'smem constant byte address 0x4 - core index']
  #allocation1 [shape = 'u32[144,128]{1,0:T(1,128)}', space=vmem, size = 0x12000, scoped, tag = 'internal scratch']
  %s0 = inlined_call_operand.vmem [shape: bf16[512,128], index: 0, kind: input, shape index: {}]
  %s1 = inlined_call_operand.vmem [shape: f32[1,128], index: 1, kind: input, shape index: {}]
  %s2 = inlined_call_operand.vmem [shape: bf16[128,128], index: 2, kind: input, shape index: {}]
  %s3 = inlined_call_operand.vmem [shape: f32[1,128], index: 3, kind: input, shape index: {}]
  %s4 = inlined_call_operand.vmem [shape: bf16[512,128], index: 4, kind: output, shape index: {}]
  %s5 = sld [smem:[#allocation0]]
  $region49: #{remotenet_forward.9} parent=0
    _
  %s7 = ssub.s32 1, %s5
  %s8 = scalar_select 0, %s7, %s5
  loop: start=0, step=1, limit=4
  $region2: #{remotenet_forward.9} parent=0 // loop_pre_header
    _
  $region3: #{remotenet_forward.9} parent=0 // loop_header
    %s10 = sphi 0, %s14
    %p11 = scmp.ge.s32.totalorder %s10, 4
    %s20 = sphi 0, %s22
    %s23 = sphi 0, %s20
    %s24 = sphi 0, %s23
    %s40 = sphi 0, %s24
    %s44 = sphi 0, %s44
    %s46 = sphi 0, %s44
    %s47 = sphi 0, %s46
    %s61 = sphi 0, %s47
    %s65 = sphi 0, %s65
    %s67 = sphi 0, %s65
    %s68 = sphi 0, %s67
    %s82 = sphi 0, %s68
    %s86 = sphi 0, %s86
    %s88 = sphi 0, %s86
    %s89 = sphi 0, %s88
    %s103 = sphi 0, %s89
    %s109 = sphi 0, %s111
    %s112 = sphi 0, %s109
    %s113 = sphi 0, %s112
    %s129 = sphi 0, %s113
  $region4: #{remotenet_forward.9} parent=0 // loop_header_branch
    %13 = sbr.rel (%p11) target = $region8
  $region5: #{remotenet_forward.9} parent=0 // loop_body
    %s15 = ssub.s32 %s10, 1
    %s16 = ssub.s32 %s10, 2
    %s17 = sadd.s32 %s10, 1
    %s18 = ssub.s32 %s10, %s17
    %p19 = scmp.eq.s32.totalorder %s18, 0
    %s21 = sadd.s32 %s20, 1
    %s22 = scalar_select %p19, %s20, %s21
    %p25 = pneg %p19
    %p26 = scmp.eq.s32.totalorder %s10, 1
    %p27 = por %p25, %p26
    %p28 = scmp.ne.s32.totalorder %s20, %s23
    %p29 = scmp.eq.s32.totalorder %s10, 0
    %p30 = por %p28, %p29
    %p31 = scmp.ne.s32.totalorder %s20, %s23
    %p32 = scmp.eq.s32.totalorder %s15, 1
    %p33 = por %p31, %p32
    %p34 = scmp.ne.s32.totalorder %s23, %s24
    %p35 = scmp.eq.s32.totalorder %s15, 0
    %p36 = por %p34, %p35
    %p37 = scmp.ne.s32.totalorder %s23, %s24
    %p38 = scmp.eq.s32.totalorder %s16, 1
    %p39 = por %p37, %p38
    %p41 = scmp.ne.s32.totalorder %s24, %s40
    %p42 = scmp.eq.s32.totalorder %s16, 0
    %p43 = por %p41, %p42
    %s45 = sadd.s32 %s44, 1
    %p48 = scmp.eq.s32.totalorder %s10, 1
    %p49 = scmp.ne.s32.totalorder %s44, %s46
    %p50 = scmp.eq.s32.totalorder %s10, 0
    %p51 = por %p49, %p50
    %p52 = scmp.ne.s32.totalorder %s44, %s46
    %p53 = scmp.eq.s32.totalorder %s15, 1
    %p54 = por %p52, %p53
    %p55 = scmp.ne.s32.totalorder %s46, %s47
    %p56 = scmp.eq.s32.totalorder %s15, 0
    %p57 = por %p55, %p56
    %p58 = scmp.ne.s32.totalorder %s46, %s47
    %p59 = scmp.eq.s32.totalorder %s16, 1
    %p60 = por %p58, %p59
    %p62 = scmp.ne.s32.totalorder %s47, %s61
    %p63 = scmp.eq.s32.totalorder %s16, 0
    %p64 = por %p62, %p63
    %s66 = sadd.s32 %s65, 1
    %p69 = scmp.eq.s32.totalorder %s10, 1
    %p70 = scmp.ne.s32.totalorder %s65, %s67
    %p71 = scmp.eq.s32.totalorder %s10, 0
    %p72 = por %p70, %p71
    %p73 = scmp.ne.s32.totalorder %s65, %s67
    %p74 = scmp.eq.s32.totalorder %s15, 1
    %p75 = por %p73, %p74
    %p76 = scmp.ne.s32.totalorder %s67, %s68
    %p77 = scmp.eq.s32.totalorder %s15, 0
    %p78 = por %p76, %p77
    %p79 = scmp.ne.s32.totalorder %s67, %s68
    %p80 = scmp.eq.s32.totalorder %s16, 1
    %p81 = por %p79, %p80
    %p83 = scmp.ne.s32.totalorder %s68, %s82
    %p84 = scmp.eq.s32.totalorder %s16, 0
    %p85 = por %p83, %p84
    %s87 = sadd.s32 %s86, 1
    %p90 = scmp.eq.s32.totalorder %s10, 1
    %p91 = scmp.ne.s32.totalorder %s86, %s88
    %p92 = scmp.eq.s32.totalorder %s10, 0
    %p93 = por %p91, %p92
    %p94 = scmp.ne.s32.totalorder %s86, %s88
    %p95 = scmp.eq.s32.totalorder %s15, 1
    %p96 = por %p94, %p95
    %p97 = scmp.ne.s32.totalorder %s88, %s89
    %p98 = scmp.eq.s32.totalorder %s15, 0
    %p99 = por %p97, %p98
    %p100 = scmp.ne.s32.totalorder %s88, %s89
    %p101 = scmp.eq.s32.totalorder %s16, 1
    %p102 = por %p100, %p101
    %p104 = scmp.ne.s32.totalorder %s89, %s103
    %p105 = scmp.eq.s32.totalorder %s16, 0
    %p106 = por %p104, %p105
    %s107 = ssub.s32 %s10, %s17
    %p108 = scmp.eq.s32.totalorder %s107, 0
    %s110 = sadd.s32 %s109, 1
    %s111 = scalar_select %p108, %s109, %s110
    %p114 = pneg %p108
    %p115 = scmp.eq.s32.totalorder %s10, 1
    %p116 = por %p114, %p115
    %p117 = scmp.ne.s32.totalorder %s109, %s112
    %p118 = scmp.eq.s32.totalorder %s10, 0
    %p119 = por %p117, %p118
    %p120 = scmp.ne.s32.totalorder %s109, %s112
    %p121 = scmp.eq.s32.totalorder %s15, 1
    %p122 = por %p120, %p121
    %p123 = scmp.ne.s32.totalorder %s112, %s113
    %p124 = scmp.eq.s32.totalorder %s15, 0
    %p125 = por %p123, %p124
    %p126 = scmp.ne.s32.totalorder %s112, %s113
    %p127 = scmp.eq.s32.totalorder %s16, 1
    %p128 = por %p126, %p127
    %p130 = scmp.ne.s32.totalorder %s113, %s129
    %p131 = scmp.eq.s32.totalorder %s16, 0
    %p132 = por %p130, %p131
    %p133 = scmp.le.s32.totalorder 1, %s10
    %p134 = scmp.lt.s32.totalorder %s10, 3
    %p135 = pnand %p133, %p134
    %p136 = pneg %p135
    // Predicated region
    $region9: #{remotenet_forward.9} parent=5 // pred_check
      _
    $region10: #{remotenet_forward.9} parent=5 // pred_check_branch
      %138 = sbr.rel (%p135) target = $region12
    $region11: #{remotenet_forward.9} parent=5 // pred_region
      %s139 = ssub.s32 %s10, 1
      // Predicated region
      $region13: #{remotenet_forward.9} parent=11 // pred_check
        %p140 = pneg %p57
      $region14: #{remotenet_forward.9} parent=11 // pred_check_branch
        %142 = sbr.rel (%p140) target = $region16
      $region15: #{remotenet_forward.9} parent=11 // pred_region
        _
      $region16: #{remotenet_forward.9} parent=11 // pred_fallthru
        _
      // Predicated region
      $region17: #{remotenet_forward.9} parent=11 // pred_check
        %p143 = pneg %p78
      $region18: #{remotenet_forward.9} parent=11 // pred_check_branch
        %145 = sbr.rel (%p143) target = $region20
      $region19: #{remotenet_forward.9} parent=11 // pred_region
        _
      $region20: #{remotenet_forward.9} parent=11 // pred_fallthru
        _
      // Predicated region
      $region21: #{remotenet_forward.9} parent=11 // pred_check
        %p146 = pneg %p99
      $region22: #{remotenet_forward.9} parent=11 // pred_check_branch
        %148 = sbr.rel (%p146) target = $region24
      $region23: #{remotenet_forward.9} parent=11 // pred_region
        _
      $region24: #{remotenet_forward.9} parent=11 // pred_fallthru
        _
    $region12: #{remotenet_forward.9} parent=5 // pred_fallthru
      _
    %p149 = scmp.lt.s32.totalorder %s10, 2
    // Predicated region
    $region25: #{remotenet_forward.9} parent=5 // pred_check
      %p150 = pneg %p149
    $region26: #{remotenet_forward.9} parent=5 // pred_check_branch
      %152 = sbr.rel (%p150) target = $region28
    $region27: #{remotenet_forward.9} parent=5 // pred_region
      // Predicated region
      $region29: #{remotenet_forward.9} parent=27 // pred_check
        %p153 = pneg %p30
      $region30: #{remotenet_forward.9} parent=27 // pred_check_branch
        %155 = sbr.rel (%p153) target = $region32
      $region31: #{remotenet_forward.9} parent=27 // pred_region
        %s156 = smul.u32 32, %s10
        %p157 = scmp.lt.s32.totalorder %s156, 63
        %s158 = scalar_select %p157, %s156, 63
        %s159 = smul.addr %s158, 4
        %s160 = scalar_lea.vmem %s0, %s159
        %s161 = smul.u32 32, %s10
      $region32: #{remotenet_forward.9} parent=27 // pred_fallthru
        _
    $region28: #{remotenet_forward.9} parent=5 // pred_fallthru
      _
    %p162 = scmp.le.s32.totalorder 1, %s10
    %p163 = scmp.lt.s32.totalorder %s10, 3
    %p164 = pnand %p162, %p163
    %p165 = pneg %p164
    // Predicated region
    $region33: #{remotenet_forward.9} parent=5 // pred_check
      _
    $region34: #{remotenet_forward.9} parent=5 // pred_check_branch
      %167 = sbr.rel (%p164) target = $region36
    $region35: #{remotenet_forward.9} parent=5 // pred_region
      %s168 = ssub.s32 %s10, 1
      %s169 = smul.u32 32, %s15
      %p170 = scmp.lt.s32.totalorder %s169, 63
      %s171 = scalar_select %p170, %s169, 63
      %s172 = smul.addr %s171, 4
      %s173 = scalar_lea.vmem %s0, %s172
      %p174 = pneg %p36
      %p175 = pneg %p33
      %p176 = pneg %p57
      %p177 = pneg %p54
      %p178 = pneg %p78
      %p179 = pneg %p75
      %p180 = pneg %p99
      %p181 = pneg %p96
      %p182 = pneg %p125
      %p183 = pneg %p122
      %s184 = smul.u32 32, %s15
      %p185 = scmp.lt.s32.totalorder %s184, 63
      %s186 = scalar_select %p185, %s184, 63
      %s187 = smul.addr %s186, 4
      %s188 = scalar_lea.vmem %s4, %s187
      %s189 = smul.u32 32, %s15
      %p190 = scmp.lt.s32.totalorder %s189, 63
      %s191 = scalar_select %p190, %s189, 63
      %s192 = smul.addr %s191, 4
      %s193 = scalar_lea.vmem %s0, %s192
      %s194 = smul.u32 32, %s15
      %s195 = smul.u32 32, %s15
      %p196 = scmp.lt.s32.totalorder %s195, 63
      %s197 = scalar_select %p196, %s195, 63
      %s198 = smul.addr %s197, 4
      %s199 = scalar_lea.vmem %s4, %s198
      %s200 = smul.u32 32, %s15
      %v202 = vld [vmem:[%s193] sm:$0xf]
      %v203 = vld [vmem:[%s193 + $0x4] sm:$0xf]
      %v204 = vld [vmem:[%s193 + $0x8] sm:$0xf]
      %v205 = vld [vmem:[%s193 + $0xc] sm:$0xf]
      %v206 = vld [vmem:[%s193 + $0x10] sm:$0xf]
      %v207 = vld [vmem:[%s193 + $0x14] sm:$0xf]
      %v208 = vld [vmem:[%s193 + $0x18] sm:$0xf]
      %v209 = vld [vmem:[%s193 + $0x1c] sm:$0xf]
      %v210 = vld [vmem:[%s193 + $0x20] sm:$0xf]
      %v211 = vld [vmem:[%s193 + $0x24] sm:$0xf]
      %v212 = vld [vmem:[%s193 + $0x28] sm:$0xf]
      %v213 = vld [vmem:[%s193 + $0x2c] sm:$0xf]
      %v214 = vld [vmem:[%s193 + $0x30] sm:$0xf]
      %v215 = vld [vmem:[%s193 + $0x34] sm:$0xf]
      %v216 = vld [vmem:[%s193 + $0x38] sm:$0xf]
      %v217 = vld [vmem:[%s193 + $0x3c] sm:$0xf]
      %v218 = vld [vmem:[%s193 + $0x40] sm:$0xf]
      %v219 = vld [vmem:[%s193 + $0x44] sm:$0xf]
      %v220 = vld [vmem:[%s193 + $0x48] sm:$0xf]
      %v221 = vld [vmem:[%s193 + $0x4c] sm:$0xf]
      %v222 = vld [vmem:[%s193 + $0x50] sm:$0xf]
      %v223 = vld [vmem:[%s193 + $0x54] sm:$0xf]
      %v224 = vld [vmem:[%s193 + $0x58] sm:$0xf]
      %v225 = vld [vmem:[%s193 + $0x5c] sm:$0xf]
      %v226 = vld [vmem:[%s193 + $0x60] sm:$0xf]
      %v227 = vld [vmem:[%s193 + $0x64] sm:$0xf]
      %v228 = vld [vmem:[%s193 + $0x68] sm:$0xf]
      %v229 = vld [vmem:[%s193 + $0x6c] sm:$0xf]
      %v230 = vld [vmem:[%s193 + $0x70] sm:$0xf]
      %v231 = vld [vmem:[%s193 + $0x74] sm:$0xf]
      %v232 = vld [vmem:[%s193 + $0x78] sm:$0xf]
      %v233 = vld [vmem:[%s193 + $0x7c] sm:$0xf]
      %v234 = vunpack.c.l.bf16 %v202
      %v235 = vunpack.c.l.bf16 %v203
      %v236 = vunpack.c.l.bf16 %v204
      %v237 = vunpack.c.l.bf16 %v205
      %v238 = vunpack.c.l.bf16 %v206
      %v239 = vunpack.c.l.bf16 %v207
      %v240 = vunpack.c.l.bf16 %v208
      %v241 = vunpack.c.l.bf16 %v209
      %v242 = vunpack.c.l.bf16 %v210
      %v243 = vunpack.c.l.bf16 %v211
      %v244 = vunpack.c.l.bf16 %v212
      %v245 = vunpack.c.l.bf16 %v213
      %v246 = vunpack.c.l.bf16 %v214
      %v247 = vunpack.c.l.bf16 %v215
      %v248 = vunpack.c.l.bf16 %v216
      %v249 = vunpack.c.l.bf16 %v217
      %v250 = vunpack.c.l.bf16 %v218
      %v251 = vunpack.c.l.bf16 %v219
      %v252 = vunpack.c.l.bf16 %v220
      %v253 = vunpack.c.l.bf16 %v221
      %v254 = vunpack.c.l.bf16 %v222
      %v255 = vunpack.c.l.bf16 %v223
      %v256 = vunpack.c.l.bf16 %v224
      %v257 = vunpack.c.l.bf16 %v225
      %v258 = vunpack.c.l.bf16 %v226
      %v259 = vunpack.c.l.bf16 %v227
      %v260 = vunpack.c.l.bf16 %v228
      %v261 = vunpack.c.l.bf16 %v229
      %v262 = vunpack.c.l.bf16 %v230
      %v263 = vunpack.c.l.bf16 %v231
      %v264 = vunpack.c.l.bf16 %v232
      %v265 = vunpack.c.l.bf16 %v233
      %v266 = vld [vmem:[%s1] sm:$0x1]
      %v268 = vlaneseq
      %v269 = vshrl.u32 %v268, 7
      %v270 = vsub.s32 0, %v269
      %v271 = vrot.slane %v266, %v270
      %v273 = vadd.f32 %v234, %v271
      %v274 = vadd.f32 %v235, %v271
      %v275 = vadd.f32 %v236, %v271
      %v276 = vadd.f32 %v237, %v271
      %v277 = vadd.f32 %v238, %v271
      %v278 = vadd.f32 %v239, %v271
      %v279 = vadd.f32 %v240, %v271
      %v280 = vadd.f32 %v241, %v271
      %v281 = vadd.f32 %v242, %v271
      %v282 = vadd.f32 %v243, %v271
      %v283 = vadd.f32 %v244, %v271
      %v284 = vadd.f32 %v245, %v271
      %v285 = vadd.f32 %v246, %v271
      %v286 = vadd.f32 %v247, %v271
      %v287 = vadd.f32 %v248, %v271
      %v288 = vadd.f32 %v249, %v271
      %v289 = vadd.f32 %v250, %v271
      %v290 = vadd.f32 %v251, %v271
      %v291 = vadd.f32 %v252, %v271
      %v292 = vadd.f32 %v253, %v271
      %v293 = vadd.f32 %v254, %v271
      %v294 = vadd.f32 %v255, %v271
      %v295 = vadd.f32 %v256, %v271
      %v296 = vadd.f32 %v257, %v271
      %v297 = vadd.f32 %v258, %v271
      %v298 = vadd.f32 %v259, %v271
      %v299 = vadd.f32 %v260, %v271
      %v300 = vadd.f32 %v261, %v271
      %v301 = vadd.f32 %v262, %v271
      %v302 = vadd.f32 %v263, %v271
      %v303 = vadd.f32 %v264, %v271
      %v304 = vadd.f32 %v265, %v271
      %v305 = vmax.f32 %v273, 0.0
      %v306 = vmax.f32 %v274, 0.0
      %v307 = vmax.f32 %v275, 0.0
      %v308 = vmax.f32 %v276, 0.0
      %v309 = vmax.f32 %v277, 0.0
      %v310 = vmax.f32 %v278, 0.0
      %v311 = vmax.f32 %v279, 0.0
      %v312 = vmax.f32 %v280, 0.0
      %v313 = vmax.f32 %v281, 0.0
      %v314 = vmax.f32 %v282, 0.0
      %v315 = vmax.f32 %v283, 0.0
      %v316 = vmax.f32 %v284, 0.0
      %v317 = vmax.f32 %v285, 0.0
      %v318 = vmax.f32 %v286, 0.0
      %v319 = vmax.f32 %v287, 0.0
      %v320 = vmax.f32 %v288, 0.0
      %v321 = vmax.f32 %v289, 0.0
      %v322 = vmax.f32 %v290, 0.0
      %v323 = vmax.f32 %v291, 0.0
      %v324 = vmax.f32 %v292, 0.0
      %v325 = vmax.f32 %v293, 0.0
      %v326 = vmax.f32 %v294, 0.0
      %v327 = vmax.f32 %v295, 0.0
      %v328 = vmax.f32 %v296, 0.0
      %v329 = vmax.f32 %v297, 0.0
      %v330 = vmax.f32 %v298, 0.0
      %v331 = vmax.f32 %v299, 0.0
      %v332 = vmax.f32 %v300, 0.0
      %v333 = vmax.f32 %v301, 0.0
      %v334 = vmax.f32 %v302, 0.0
      %v335 = vmax.f32 %v303, 0.0
      %v336 = vmax.f32 %v304, 0.0
      %v337 = vpack.c.bf16 %v306, %v305
      %v338 = vpack.c.bf16 %v308, %v307
      %v339 = vpack.c.bf16 %v310, %v309
      %v340 = vpack.c.bf16 %v312, %v311
      %v341 = vpack.c.bf16 %v314, %v313
      %v342 = vpack.c.bf16 %v316, %v315
      %v343 = vpack.c.bf16 %v318, %v317
      %v344 = vpack.c.bf16 %v320, %v319
      %v345 = vpack.c.bf16 %v322, %v321
      %v346 = vpack.c.bf16 %v324, %v323
      %v347 = vpack.c.bf16 %v326, %v325
      %v348 = vpack.c.bf16 %v328, %v327
      %v349 = vpack.c.bf16 %v330, %v329
      %v350 = vpack.c.bf16 %v332, %v331
      %v351 = vpack.c.bf16 %v334, %v333
      %v352 = vpack.c.bf16 %v336, %v335
      %v353 = vld [vmem:[%s2] sm:$0xf]
      %v354 = vld [vmem:[%s2 + $0x4] sm:$0xf]
      %v355 = vld [vmem:[%s2 + $0x8] sm:$0xf]
      %v356 = vld [vmem:[%s2 + $0xc] sm:$0xf]
      %v357 = vld [vmem:[%s2 + $0x10] sm:$0xf]
      %v358 = vld [vmem:[%s2 + $0x14] sm:$0xf]
      %v359 = vld [vmem:[%s2 + $0x18] sm:$0xf]
      %v360 = vld [vmem:[%s2 + $0x1c] sm:$0xf]
      %v361 = vld [vmem:[%s2 + $0x20] sm:$0xf]
      %v362 = vld [vmem:[%s2 + $0x24] sm:$0xf]
      %v363 = vld [vmem:[%s2 + $0x28] sm:$0xf]
      %v364 = vld [vmem:[%s2 + $0x2c] sm:$0xf]
      %v365 = vld [vmem:[%s2 + $0x30] sm:$0xf]
      %v366 = vld [vmem:[%s2 + $0x34] sm:$0xf]
      %v367 = vld [vmem:[%s2 + $0x38] sm:$0xf]
      %v368 = vld [vmem:[%s2 + $0x3c] sm:$0xf]
      %v369 = vld [vmem:[%s3] sm:$0x1]
      %v371 = vlaneseq
      %v372 = vshrl.u32 %v371, 7
      %v373 = vsub.s32 0, %v372
      %v374 = vrot.slane %v369, %v373
      %v392 = vunpack.c.l.b16 %v353
      %v393 = vunpack.c.l.b16 %v354
      %v394 = vunpack.c.l.b16 %v355
      %v395 = vunpack.c.l.b16 %v356
      %v396 = vunpack.c.l.b16 %v357
      %v397 = vunpack.c.l.b16 %v358
      %v398 = vunpack.c.l.b16 %v359
      %v399 = vunpack.c.l.b16 %v360
      %v400 = vunpack.c.l.b16 %v361
      %v401 = vunpack.c.l.b16 %v362
      %v402 = vunpack.c.l.b16 %v363
      %v403 = vunpack.c.l.b16 %v364
      %v404 = vunpack.c.l.b16 %v365
      %v405 = vunpack.c.l.b16 %v366
      %v406 = vunpack.c.l.b16 %v367
      %v407 = vunpack.c.l.b16 %v368
      %v408 = vpack.c.b16 %v393, %v392
      %v409 = vpack.c.b16 %v395, %v394
      %v410 = vpack.c.b16 %v397, %v396
      %v411 = vpack.c.b16 %v399, %v398
      %v412 = vpack.c.b16 %v401, %v400
      %v413 = vpack.c.b16 %v403, %v402
      %v414 = vpack.c.b16 %v405, %v404
      %v415 = vpack.c.b16 %v407, %v406
      %424 = vmatprep.subr.bf16.mxu0 0
      %425 = vmatpush1.bf16.msra.mxu0 %v408
      %426 = vmatprep.subr.bf16.mxu0 0
      %427 = vmatpush1.bf16.msra.mxu0 %v409
      %428 = vmatprep.subr.bf16.mxu0 0
      %429 = vmatpush1.bf16.msra.mxu0 %v410
      %430 = vmatprep.subr.bf16.mxu0 0
      %431 = vmatpush1.bf16.msra.mxu0 %v411
      %432 = vmatprep.subr.bf16.mxu0 0
      %433 = vmatpush1.bf16.msra.mxu0 %v412
      %434 = vmatprep.subr.bf16.mxu0 0
      %435 = vmatpush1.bf16.msra.mxu0 %v413
      %436 = vmatprep.subr.bf16.mxu0 0
      %437 = vmatpush1.bf16.msra.mxu0 %v414
      %438 = vmatprep.subr.bf16.mxu0 0
      %439 = vmatpush1.bf16.msra.mxu0 %v415
      %440 = vmatprep.subr.bf16.mxu0 0
      %441 = vmatpush1.bf16.msra.mxu0 0
      %442 = vmatprep.subr.bf16.mxu0 0
      %443 = vmatpush1.bf16.msra.mxu0 0
      %444 = vmatprep.subr.bf16.mxu0 0
      %445 = vmatpush1.bf16.msra.mxu0 0
      %446 = vmatprep.subr.bf16.mxu0 0
      %447 = vmatpush1.bf16.msra.mxu0 0
      %448 = vmatprep.subr.bf16.mxu0 0
      %449 = vmatpush1.bf16.msra.mxu0 0
      %450 = vmatprep.subr.bf16.mxu0 0
      %451 = vmatpush1.bf16.msra.mxu0 0
      %452 = vmatprep.subr.bf16.mxu0 0
      %453 = vmatpush1.bf16.msra.mxu0 0
      %454 = vmatprep.subr.bf16.mxu0 0
      %455 = vmatpush1.bf16.msra.mxu0 0
      %456 = vmatprep.mubr.bf16.mxu0 0
      %457 = vmatmul.mubr.bf16.gmra.mrb[0].mxu0 %v337
      %v458 = vpop.f32.mrb[0].mxu0
      %v459 = vadd.f32 %v374, %v458
      %v460 = vpop.f32.mrb[0].mxu0
      %v461 = vpop.f32.mrb[0].mxu0
      %v462 = vadd.f32 %v374, %v461
      %v463 = vpop.f32.mrb[0].mxu0
      %464 = vmatprep.mubr.bf16.mxu0 0
      %465 = vmatmul.mubr.bf16.gmra.mrb[0].mxu0 %v338
      %v466 = vpop.f32.mrb[0].mxu0
      %v467 = vadd.f32 %v374, %v466
      %v468 = vpop.f32.mrb[0].mxu0
      %v469 = vpop.f32.mrb[0].mxu0
      %v470 = vadd.f32 %v374, %v469
      %v471 = vpop.f32.mrb[0].mxu0
      %472 = vmatprep.mubr.bf16.mxu0 0
      %473 = vmatmul.mubr.bf16.gmra.mrb[0].mxu0 %v339
      %v474 = vpop.f32.mrb[0].mxu0
      %v475 = vadd.f32 %v374, %v474
      %v476 = vpop.f32.mrb[0].mxu0
      %v477 = vpop.f32.mrb[0].mxu0
      %v478 = vadd.f32 %v374, %v477
      %v479 = vpop.f32.mrb[0].mxu0
      %480 = vmatprep.mubr.bf16.mxu0 0
      %481 = vmatmul.mubr.bf16.gmra.mrb[0].mxu0 %v340
      %v482 = vpop.f32.mrb[0].mxu0
      %v483 = vadd.f32 %v374, %v482
      %v484 = vpop.f32.mrb[0].mxu0
      %v485 = vpop.f32.mrb[0].mxu0
      %v486 = vadd.f32 %v374, %v485
      %v487 = vpop.f32.mrb[0].mxu0
      %488 = vmatprep.mubr.bf16.mxu0 0
      %489 = vmatmul.mubr.bf16.gmra.mrb[0].mxu0 %v341
      %v490 = vpop.f32.mrb[0].mxu0
      %v491 = vadd.f32 %v374, %v490
      %v492 = vpop.f32.mrb[0].mxu0
      %v493 = vpop.f32.mrb[0].mxu0
      %v494 = vadd.f32 %v374, %v493
      %v495 = vpop.f32.mrb[0].mxu0
      %496 = vmatprep.mubr.bf16.mxu0 0
      %497 = vmatmul.mubr.bf16.gmra.mrb[0].mxu0 %v342
      %v498 = vpop.f32.mrb[0].mxu0
      %v499 = vadd.f32 %v374, %v498
      %v500 = vpop.f32.mrb[0].mxu0
      %v501 = vpop.f32.mrb[0].mxu0
      %v502 = vadd.f32 %v374, %v501
      %v503 = vpop.f32.mrb[0].mxu0
      %504 = vmatprep.mubr.bf16.mxu0 0
      %505 = vmatmul.mubr.bf16.gmra.mrb[0].mxu0 %v343
      %v506 = vpop.f32.mrb[0].mxu0
      %v507 = vadd.f32 %v374, %v506
      %v508 = vpop.f32.mrb[0].mxu0
      %v509 = vpop.f32.mrb[0].mxu0
      %v510 = vadd.f32 %v374, %v509
      %v511 = vpop.f32.mrb[0].mxu0
      %512 = vmatprep.mubr.bf16.mxu0 0
      %513 = vmatmul.mubr.bf16.gmra.mrb[0].mxu0 %v344
      %v514 = vpop.f32.mrb[0].mxu0
      %v515 = vadd.f32 %v374, %v514
      %v516 = vpop.f32.mrb[0].mxu0
      %v517 = vpop.f32.mrb[0].mxu0
      %v518 = vadd.f32 %v374, %v517
      %v519 = vpop.f32.mrb[0].mxu0
      %520 = vmatprep.mubr.bf16.mxu0 0
      %521 = vmatmul.mubr.bf16.gmra.mrb[0].mxu0 %v345
      %v522 = vpop.f32.mrb[0].mxu0
      %v523 = vadd.f32 %v374, %v522
      %v524 = vpop.f32.mrb[0].mxu0
      %v525 = vpop.f32.mrb[0].mxu0
      %v526 = vadd.f32 %v374, %v525
      %v527 = vpop.f32.mrb[0].mxu0
      %528 = vmatprep.mubr.bf16.mxu0 0
      %529 = vmatmul.mubr.bf16.gmra.mrb[0].mxu0 %v346
      %v530 = vpop.f32.mrb[0].mxu0
      %v531 = vadd.f32 %v374, %v530
      %v532 = vpop.f32.mrb[0].mxu0
      %v533 = vpop.f32.mrb[0].mxu0
      %v534 = vadd.f32 %v374, %v533
      %v535 = vpop.f32.mrb[0].mxu0
      %536 = vmatprep.mubr.bf16.mxu0 0
      %537 = vmatmul.mubr.bf16.gmra.mrb[0].mxu0 %v347
      %v538 = vpop.f32.mrb[0].mxu0
      %v539 = vadd.f32 %v374, %v538
      %v540 = vpop.f32.mrb[0].mxu0
      %v541 = vpop.f32.mrb[0].mxu0
      %v542 = vadd.f32 %v374, %v541
      %v543 = vpop.f32.mrb[0].mxu0
      %544 = vmatprep.mubr.bf16.mxu0 0
      %545 = vmatmul.mubr.bf16.gmra.mrb[0].mxu0 %v348
      %v546 = vpop.f32.mrb[0].mxu0
      %v547 = vadd.f32 %v374, %v546
      %v548 = vpop.f32.mrb[0].mxu0
      %v549 = vpop.f32.mrb[0].mxu0
      %v550 = vadd.f32 %v374, %v549
      %v551 = vpop.f32.mrb[0].mxu0
      %552 = vmatprep.mubr.bf16.mxu0 0
      %553 = vmatmul.mubr.bf16.gmra.mrb[0].mxu0 %v349
      %v554 = vpop.f32.mrb[0].mxu0
      %v555 = vadd.f32 %v374, %v554
      %v556 = vpop.f32.mrb[0].mxu0
      %v557 = vpop.f32.mrb[0].mxu0
      %v558 = vadd.f32 %v374, %v557
      %v559 = vpop.f32.mrb[0].mxu0
      %560 = vmatprep.mubr.bf16.mxu0 0
      %561 = vmatmul.mubr.bf16.gmra.mrb[0].mxu0 %v350
      %v562 = vpop.f32.mrb[0].mxu0
      %v563 = vadd.f32 %v374, %v562
      %v564 = vpop.f32.mrb[0].mxu0
      %v565 = vpop.f32.mrb[0].mxu0
      %v566 = vadd.f32 %v374, %v565
      %v567 = vpop.f32.mrb[0].mxu0
      %568 = vmatprep.mubr.bf16.mxu0 0
      %569 = vmatmul.mubr.bf16.gmra.mrb[0].mxu0 %v351
      %v570 = vpop.f32.mrb[0].mxu0
      %v571 = vadd.f32 %v374, %v570
      %v572 = vpop.f32.mrb[0].mxu0
      %v573 = vpop.f32.mrb[0].mxu0
      %v574 = vadd.f32 %v374, %v573
      %v575 = vpop.f32.mrb[0].mxu0
      %576 = vmatprep.mubr.bf16.mxu0 0
      %577 = vmatmul.mubr.bf16.gmra.mrb[0].mxu0 %v352
      %v578 = vpop.f32.mrb[0].mxu0
      %v579 = vadd.f32 %v374, %v578
      %v580 = vpop.f32.mrb[0].mxu0
      %v581 = vpop.f32.mrb[0].mxu0
      %v582 = vadd.f32 %v374, %v581
      %v583 = vpop.f32.mrb[0].mxu0
      %584 = vdwg.mxu0
      %v585 = vpack.c.bf16 %v462, %v459
      %v586 = vpack.c.bf16 %v470, %v467
      %v587 = vpack.c.bf16 %v478, %v475
      %v588 = vpack.c.bf16 %v486, %v483
      %v589 = vpack.c.bf16 %v494, %v491
      %v590 = vpack.c.bf16 %v502, %v499
      %v591 = vpack.c.bf16 %v510, %v507
      %v592 = vpack.c.bf16 %v518, %v515
      %v593 = vpack.c.bf16 %v526, %v523
      %v594 = vpack.c.bf16 %v534, %v531
      %v595 = vpack.c.bf16 %v542, %v539
      %v596 = vpack.c.bf16 %v550, %v547
      %v597 = vpack.c.bf16 %v558, %v555
      %v598 = vpack.c.bf16 %v566, %v563
      %v599 = vpack.c.bf16 %v574, %v571
      %v600 = vpack.c.bf16 %v582, %v579
      %v617 = vunpack.c.l.b16 %v585
      %v618 = vunpack.c.h.b16 %v585
      %v619 = vunpack.c.l.b16 %v586
      %v620 = vunpack.c.h.b16 %v586
      %v621 = vunpack.c.l.b16 %v587
      %v622 = vunpack.c.h.b16 %v587
      %v623 = vunpack.c.l.b16 %v588
      %v624 = vunpack.c.h.b16 %v588
      %v625 = vunpack.c.l.b16 %v589
      %v626 = vunpack.c.h.b16 %v589
      %v627 = vunpack.c.l.b16 %v590
      %v628 = vunpack.c.h.b16 %v590
      %v629 = vunpack.c.l.b16 %v591
      %v630 = vunpack.c.h.b16 %v591
      %v631 = vunpack.c.l.b16 %v592
      %v632 = vunpack.c.h.b16 %v592
      %v633 = vunpack.c.l.b16 %v593
      %v634 = vunpack.c.h.b16 %v593
      %v635 = vunpack.c.l.b16 %v594
      %v636 = vunpack.c.h.b16 %v594
      %v637 = vunpack.c.l.b16 %v595
      %v638 = vunpack.c.h.b16 %v595
      %v639 = vunpack.c.l.b16 %v596
      %v640 = vunpack.c.h.b16 %v596
      %v641 = vunpack.c.l.b16 %v597
      %v642 = vunpack.c.h.b16 %v597
      %v643 = vunpack.c.l.b16 %v598
      %v644 = vunpack.c.h.b16 %v598
      %v645 = vunpack.c.l.b16 %v599
      %v646 = vunpack.c.h.b16 %v599
      %v647 = vunpack.c.l.b16 %v600
      %v648 = vunpack.c.h.b16 %v600
      %v649 = vpack.c.b16 %v617, %v617
      %v650 = vpack.c.b16 %v618, %v618
      %v651 = vpack.c.b16 %v619, %v619
      %v652 = vpack.c.b16 %v620, %v620
      %v653 = vpack.c.b16 %v621, %v621
      %v654 = vpack.c.b16 %v622, %v622
      %v655 = vpack.c.b16 %v623, %v623
      %v656 = vpack.c.b16 %v624, %v624
      %v657 = vpack.c.b16 %v625, %v625
      %v658 = vpack.c.b16 %v626, %v626
      %v659 = vpack.c.b16 %v627, %v627
      %v660 = vpack.c.b16 %v628, %v628
      %v661 = vpack.c.b16 %v629, %v629
      %v662 = vpack.c.b16 %v630, %v630
      %v663 = vpack.c.b16 %v631, %v631
      %v664 = vpack.c.b16 %v632, %v632
      %v665 = vpack.c.b16 %v633, %v633
      %v666 = vpack.c.b16 %v634, %v634
      %v667 = vpack.c.b16 %v635, %v635
      %v668 = vpack.c.b16 %v636, %v636
      %v669 = vpack.c.b16 %v637, %v637
      %v670 = vpack.c.b16 %v638, %v638
      %v671 = vpack.c.b16 %v639, %v639
      %v672 = vpack.c.b16 %v640, %v640
      %v673 = vpack.c.b16 %v641, %v641
      %v674 = vpack.c.b16 %v642, %v642
      %v675 = vpack.c.b16 %v643, %v643
      %v676 = vpack.c.b16 %v644, %v644
      %v677 = vpack.c.b16 %v645, %v645
      %v678 = vpack.c.b16 %v646, %v646
      %v679 = vpack.c.b16 %v647, %v647
      %v680 = vpack.c.b16 %v648, %v648
      %713 = vst [vmem:[%s199] sm:$0xf] %v649
      %714 = vst [vmem:[%s199 + $0x4] sm:$0xf] %v650
      %715 = vst [vmem:[%s199 + $0x8] sm:$0xf] %v651
      %716 = vst [vmem:[%s199 + $0xc] sm:$0xf] %v652
      %717 = vst [vmem:[%s199 + $0x10] sm:$0xf] %v653
      %718 = vst [vmem:[%s199 + $0x14] sm:$0xf] %v654
      %719 = vst [vmem:[%s199 + $0x18] sm:$0xf] %v655
      %720 = vst [vmem:[%s199 + $0x1c] sm:$0xf] %v656
      %721 = vst [vmem:[%s199 + $0x20] sm:$0xf] %v657
      %722 = vst [vmem:[%s199 + $0x24] sm:$0xf] %v658
      %723 = vst [vmem:[%s199 + $0x28] sm:$0xf] %v659
      %724 = vst [vmem:[%s199 + $0x2c] sm:$0xf] %v660
      %725 = vst [vmem:[%s199 + $0x30] sm:$0xf] %v661
      %726 = vst [vmem:[%s199 + $0x34] sm:$0xf] %v662
      %727 = vst [vmem:[%s199 + $0x38] sm:$0xf] %v663
      %728 = vst [vmem:[%s199 + $0x3c] sm:$0xf] %v664
      %729 = vst [vmem:[%s199 + $0x40] sm:$0xf] %v665
      %730 = vst [vmem:[%s199 + $0x44] sm:$0xf] %v666
      %731 = vst [vmem:[%s199 + $0x48] sm:$0xf] %v667
      %732 = vst [vmem:[%s199 + $0x4c] sm:$0xf] %v668
      %733 = vst [vmem:[%s199 + $0x50] sm:$0xf] %v669
      %734 = vst [vmem:[%s199 + $0x54] sm:$0xf] %v670
      %735 = vst [vmem:[%s199 + $0x58] sm:$0xf] %v671
      %736 = vst [vmem:[%s199 + $0x5c] sm:$0xf] %v672
      %737 = vst [vmem:[%s199 + $0x60] sm:$0xf] %v673
      %738 = vst [vmem:[%s199 + $0x64] sm:$0xf] %v674
      %739 = vst [vmem:[%s199 + $0x68] sm:$0xf] %v675
      %740 = vst [vmem:[%s199 + $0x6c] sm:$0xf] %v676
      %741 = vst [vmem:[%s199 + $0x70] sm:$0xf] %v677
      %742 = vst [vmem:[%s199 + $0x74] sm:$0xf] %v678
      %743 = vst [vmem:[%s199 + $0x78] sm:$0xf] %v679
      %744 = vst [vmem:[%s199 + $0x7c] sm:$0xf] %v680
      %s745 = smul.u32 32, %s15
      %p746 = scmp.lt.s32.totalorder %s745, 63
      %s747 = scalar_select %p746, %s745, 63
      %s748 = smul.addr %s747, 4
      %s749 = scalar_lea.vmem %s4, %s748
      // Predicated region
      $region37: #{remotenet_forward.9} parent=35 // pred_check
        %p750 = pneg %p122
      $region38: #{remotenet_forward.9} parent=35 // pred_check_branch
        %752 = sbr.rel (%p750) target = $region40
      $region39: #{remotenet_forward.9} parent=35 // pred_region
        %s753 = smul.u32 32, %s15
      $region40: #{remotenet_forward.9} parent=35 // pred_fallthru
        _
    $region36: #{remotenet_forward.9} parent=5 // pred_fallthru
      _
    %p754 = scmp.le.s32.totalorder 2, %s10
    // Predicated region
    $region41: #{remotenet_forward.9} parent=5 // pred_check
      %p755 = pneg %p754
    $region42: #{remotenet_forward.9} parent=5 // pred_check_branch
      %757 = sbr.rel (%p755) target = $region44
    $region43: #{remotenet_forward.9} parent=5 // pred_region
      %s758 = ssub.s32 %s10, 2
      // Predicated region
      $region45: #{remotenet_forward.9} parent=43 // pred_check
        %p759 = pneg %p128
      $region46: #{remotenet_forward.9} parent=43 // pred_check_branch
        %761 = sbr.rel (%p759) target = $region48
      $region47: #{remotenet_forward.9} parent=43 // pred_region
        %s762 = smul.u32 32, %s16
        %p763 = scmp.lt.s32.totalorder %s762, 63
        %s764 = scalar_select %p763, %s762, 63
        %s765 = smul.addr %s764, 4
        %s766 = scalar_lea.vmem %s4, %s765
      $region48: #{remotenet_forward.9} parent=43 // pred_fallthru
        _
    $region44: #{remotenet_forward.9} parent=5 // pred_fallthru
      _
  $region6: #{remotenet_forward.9} parent=0 // loop_footer
    %s14 = sadd.s32 1, %s10
  $region7: #{remotenet_forward.9} parent=0 // loop_footer_branch
    %9 = sbr.rel target = $region3
  $region8: #{remotenet_forward.9} parent=0 // loop_exit
    _

</llo_original>
